<compile_context>
chip_gen: v6e
topology: v6e:2x2x1
jax: 0.10.0
libtpu: 0.0.40
codegen_flags: <defaults>
</compile_context>

<pallas_src>
import functools

import jax
import jax.numpy as jnp
from jax.experimental import pallas as pl
from jax.experimental.pallas import tpu as pltpu


def _round_up(n, m):
    return ((n + m - 1) // m) * m


# --------------------------------------------------------------------------
# Kernel
# --------------------------------------------------------------------------
def encoder_kernel(x_ref, w1_ref, b1_ref, w2_ref, b2_ref, out_ref, *, z_pad):
    """One batch tile: fused two-branch MLP.

    x_ref  : [TILE_B, Dp]      bf16
    w1_ref : [Dp, 2*Hp]        bf16   (w1m || w1s)
    b1_ref : [1, 2*Hp]         f32    (b1m || b1s)
    w2_ref : [2*Hp, 2*Zp]      bf16   block-diag(w2m, w2s)
    b2_ref : [1, 2*Zp]         f32    (b2m || b2s)
    out_ref: [TILE_B, 2*Zp]    f32    (mean || std)
    """
    x = x_ref[...]

    # First layer (both branches at once): bf16 x bf16 -> f32 accumulate.
    h = jnp.dot(x, w1_ref[...], preferred_element_type=jnp.float32)
    h = jnp.maximum(h + b1_ref[...], 0.0)                       # f32 epilogue

    # Second layer (block-diagonal => mean in lanes [:Zp], std in [Zp:]).
    y = jnp.dot(h.astype(jnp.bfloat16), w2_ref[...],
                preferred_element_type=jnp.float32)
    y = y + b2_ref[...]

    # Trailing ReLU only on the std half (lanes >= z_pad); keeps the store
    # lane-dense at 128 lanes instead of two masked 64-lane stores.
    lane = jax.lax.broadcasted_iota(jnp.int32, y.shape, 1)
    y = jnp.where(lane >= z_pad, jnp.maximum(y, 0.0), y)

    out_ref[...] = y.astype(out_ref.dtype)


# --------------------------------------------------------------------------
# One-time weight packing (hoisted off the per-call path)
# --------------------------------------------------------------------------
def pack_encoder_params(params):
    """Pack/pad the 8 raw parameters into fused MXU-friendly buffers. Call once."""
    w1m, b1m, w2m, b2m = params["w1m"], params["b1m"], params["w2m"], params["b2m"]
    w1s, b1s, w2s, b2s = params["w1s"], params["b1s"], params["w2s"], params["b2s"]

    D, H = w1m.shape
    Z = w2m.shape[1]
    Dp = _round_up(D, 128)
    Hp = _round_up(H, 128)
    Zp = _round_up(Z, 64)          # 2*Zp multiple of 128 -> lane-dense output

    bf16 = jnp.bfloat16

    W1 = jnp.zeros((Dp, 2 * Hp), bf16)
    W1 = W1.at[:D, :H].set(w1m.astype(bf16))
    W1 = W1.at[:D, Hp:Hp + H].set(w1s.astype(bf16))

    B1 = jnp.zeros((1, 2 * Hp), jnp.float32)
    B1 = B1.at[:, :H].set(b1m)
    B1 = B1.at[:, Hp:Hp + H].set(b1s)

    W2 = jnp.zeros((2 * Hp, 2 * Zp), bf16)
    W2 = W2.at[:H, :Z].set(w2m.astype(bf16))
    W2 = W2.at[Hp:Hp + H, Zp:Zp + Z].set(w2s.astype(bf16))

    B2 = jnp.zeros((1, 2 * Zp), jnp.float32)
    B2 = B2.at[:, :Z].set(b2m)
    B2 = B2.at[:, Zp:Zp + Z].set(b2s)

    weights = dict(W1=W1, B1=B1, W2=W2, B2=B2)
    dims = dict(D=D, H=H, Z=Z, Dp=Dp, Hp=Hp, Zp=Zp)   # plain Python ints
    return weights, dims


def _choose_batch_tiling(B, tile_b):
    """Batch padded to a multiple of 16 (bf16 sublane packing); tile shrunk so
    padded work never inflates by ~2x for awkward batch sizes."""
    Bp16 = _round_up(max(B, 1), 16)
    n_tiles = pl.cdiv(Bp16, tile_b)
    tile = _round_up(pl.cdiv(Bp16, n_tiles), 16)
    Bp = n_tiles * tile
    return tile, Bp, n_tiles


# --------------------------------------------------------------------------
# Wrapper
# --------------------------------------------------------------------------
def encoder_forward(x, weights, dims, *, tile_b=256):
    """x: [B, input_dim] f32. Returns (mean, std), each [B, z_dim] f32.

    tile_b=256 fills v6e's 256-row MXU; use tile_b=512 on v7x for large batches.
    """
    W1, B1, W2, B2 = weights["W1"], weights["B1"], weights["W2"], weights["B2"]
    D, Z = dims["D"], dims["Z"]
    Dp, Hp, Zp = dims["Dp"], dims["Hp"], dims["Zp"]

    B = x.shape[0]
    tile, Bp, n_tiles = _choose_batch_tiling(B, tile_b)

    # Only per-call prep left on the hot path: pad + cast the input stream.
    x_p = jnp.pad(x, ((0, Bp - B), (0, Dp - D))).astype(jnp.bfloat16)

    flops = 2 * Bp * (Dp * (2 * Hp) + (2 * Hp) * (2 * Zp))
    bytes_accessed = (
        x_p.size * 2 + W1.size * 2 + W2.size * 2
        + B1.size * 4 + B2.size * 4 + Bp * (2 * Zp) * 4
    )

    # Constant-index weight blocks: resident in VMEM across all batch tiles,
    # single-buffered (they never change), saving ~2 MiB of VMEM.
    single = pl.Buffered(1)

    out = pl.pallas_call(
        functools.partial(encoder_kernel, z_pad=Zp),
        out_shape=jax.ShapeDtypeStruct((Bp, 2 * Zp), jnp.float32),
        grid=(n_tiles,),
        in_specs=[
            pl.BlockSpec((tile, Dp), lambda i: (i, 0)),
            pl.BlockSpec((Dp, 2 * Hp), lambda i: (0, 0), pipeline_mode=single),
            pl.BlockSpec((1, 2 * Hp), lambda i: (0, 0), pipeline_mode=single),
            pl.BlockSpec((2 * Hp, 2 * Zp), lambda i: (0, 0), pipeline_mode=single),
            pl.BlockSpec((1, 2 * Zp), lambda i: (0, 0), pipeline_mode=single),
        ],
        out_specs=pl.BlockSpec((tile, 2 * Zp), lambda i: (i, 0)),
        compiler_params=pltpu.CompilerParams(
            dimension_semantics=("parallel",),          # megacore over batch tiles
            vmem_limit_bytes=8 * 1024 * 1024,           # actual footprint ~3-4 MiB
        ),
        cost_estimate=pl.CostEstimate(
            flops=flops, transcendentals=0, bytes_accessed=bytes_accessed
        ),
    )(x_p, W1, B1, W2, B2)

    mean = out[:B, :Z]
    std = out[:B, Zp:Zp + Z]
    return mean, std


# --------------------------------------------------------------------------
# Init + references
# --------------------------------------------------------------------------
def init_params(key, input_dim, hidden_dim, z_dim):
    """Deterministic synthetic init (PyTorch-like uniform fan-in scaling)."""
    ks = jax.random.split(key, 8)

    def lin(kw, kb, fan_in, fan_out):
        bound = 1.0 / jnp.sqrt(fan_in)
        w = jax.random.uniform(kw, (fan_in, fan_out), jnp.float32, -bound, bound)
        b = jax.random.uniform(kb, (1, fan_out), jnp.float32, -bound, bound)
        return w, b

    w1m, b1m = lin(ks[0], ks[1], input_dim, hidden_dim)
    w2m, b2m = lin(ks[2], ks[3], hidden_dim, z_dim)
    w1s, b1s = lin(ks[4], ks[5], input_dim, hidden_dim)
    w2s, b2s = lin(ks[6], ks[7], hidden_dim, z_dim)
    return dict(w1m=w1m, b1m=b1m, w2m=w2m, b2m=b2m,
                w1s=w1s, b1s=b1s, w2s=w2s, b2s=b2s)


def encoder_reference_f32(x, p):
    """Plain-JAX f32 reference matching PyTorch semantics exactly."""
    h_m = jnp.maximum(x @ p["w1m"] + p["b1m"], 0.0)
    mean = h_m @ p["w2m"] + p["b2m"]
    h_s = jnp.maximum(x @ p["w1s"] + p["b1s"], 0.0)
    std = jnp.maximum(h_s @ p["w2s"] + p["b2s"], 0.0)
    return mean, std


def encoder_reference_bf16(x, p):
    """Reference with the same bf16-operand / f32-accumulate scheme as the kernel."""
    bf = jnp.bfloat16
    xb = x.astype(bf)
    h_m = jnp.maximum(
        jnp.dot(xb, p["w1m"].astype(bf), preferred_element_type=jnp.float32)
        + p["b1m"], 0.0)
    mean = (jnp.dot(h_m.astype(bf), p["w2m"].astype(bf),
                    preferred_element_type=jnp.float32) + p["b2m"])
    h_s = jnp.maximum(
        jnp.dot(xb, p["w1s"].astype(bf), preferred_element_type=jnp.float32)
        + p["b1s"], 0.0)
    std = jnp.maximum(
        jnp.dot(h_s.astype(bf), p["w2s"].astype(bf),
                preferred_element_type=jnp.float32) + p["b2s"], 0.0)
    return mean, std


if __name__ == "__main__":
    # Module defaults: input_dim=784, hidden_dim=500, z_dim=20. Small batch.
    batch, input_dim, hidden_dim, z_dim = 8, 784, 500, 20

    key = jax.random.PRNGKey(0)
    k_x, k_p = jax.random.split(key)
    x = jax.random.normal(k_x, (batch, input_dim), jnp.float32)
    params = init_params(k_p, input_dim, hidden_dim, z_dim)

    # Pack once (init-time); only x pad/cast + the kernel run per call.
    weights, dims = pack_encoder_params(params)
    weights = jax.tree_util.tree_map(jax.block_until_ready, weights)

    fwd = jax.jit(functools.partial(encoder_forward, dims=dims, tile_b=256))
    mean, std = fwd(x, weights)
    mean = jax.block_until_ready(mean)
    std = jax.block_until_ready(std)

    assert mean.shape == (batch, z_dim) and std.shape == (batch, z_dim)

    # Tight check against a reference using the identical bf16/f32 scheme.
    mean_b, std_b = encoder_reference_bf16(x, params)
    assert jnp.allclose(mean, mean_b, atol=2e-3, rtol=2e-3)
    assert jnp.allclose(std, std_b, atol=2e-3, rtol=2e-3)

    # Looser semantic check against the full-f32 PyTorch-equivalent reference.
    mean_f, std_f = encoder_reference_f32(x, params)
    assert jnp.allclose(mean, mean_f, atol=5e-2, rtol=5e-2)
    assert jnp.allclose(std, std_f, atol=5e-2, rtol=5e-2)

    # Constraint from trailing ReLU on the std branch.
    assert bool(jnp.all(std >= 0.0))

    print("KERNEL_OK")
</pallas_src>

<mosaic_0001>
module attributes {stable_mosaic.version = 11 : i64} {
  func.func @encoder_kernel(%arg0: i32, %arg1: memref<16x896xbf16, #tpu.memory_space<vmem>>, %arg2: memref<896x1024xbf16, #tpu.memory_space<vmem>>, %arg3: memref<1x1024xf32, #tpu.memory_space<vmem>>, %arg4: memref<1024x128xbf16, #tpu.memory_space<vmem>>, %arg5: memref<1x128xf32, #tpu.memory_space<vmem>>, %arg6: memref<16x128xf32, #tpu.memory_space<vmem>>) attributes {dimension_semantics = [#tpu.dimension_semantics<parallel>], iteration_bounds = array<i64: 1>, scalar_prefetch = 0 : i64, scratch_operands = 0 : i64, tpu.core_type = #tpu.core_type<tc>, window_params = [{transform_indices = @transform_0, window_bounds = array<i64: 16, 896>}, {pipeline_mode = #tpu.pipeline_mode<synchronous>, transform_indices = @transform_1, window_bounds = array<i64: 896, 1024>}, {pipeline_mode = #tpu.pipeline_mode<synchronous>, transform_indices = @transform_2, window_bounds = array<i64: 1, 1024>}, {pipeline_mode = #tpu.pipeline_mode<synchronous>, transform_indices = @transform_3, window_bounds = array<i64: 1024, 128>}, {pipeline_mode = #tpu.pipeline_mode<synchronous>, transform_indices = @transform_4, window_bounds = array<i64: 1, 128>}, {transform_indices = @transform_5, window_bounds = array<i64: 16, 128>}]} {
    %c0 = arith.constant 0 : index
    %c0_0 = arith.constant 0 : index
    %0 = vector.load %arg1[%c0, %c0_0] : memref<16x896xbf16, #tpu.memory_space<vmem>>, vector<16x896xbf16>
    %c0_1 = arith.constant 0 : index
    %c0_2 = arith.constant 0 : index
    %1 = vector.load %arg2[%c0_1, %c0_2] : memref<896x1024xbf16, #tpu.memory_space<vmem>>, vector<896x1024xbf16>
    %cst = arith.constant dense<0.000000e+00> : vector<16x1024xf32>
    %2 = tpu.matmul %0, %1, %cst {dimension_numbers = #tpu.dot_dimension_numbers<[1], [0], [0], [1], [0, 0, 1, 1], [], []>} : vector<16x896xbf16>, vector<896x1024xbf16>, vector<16x1024xf32> -> vector<16x1024xf32>
    %c0_3 = arith.constant 0 : index
    %c0_4 = arith.constant 0 : index
    %3 = vector.load %arg3[%c0_3, %c0_4] : memref<1x1024xf32, #tpu.memory_space<vmem>>, vector<1x1024xf32>
    %4 = vector.broadcast %3 : vector<1x1024xf32> to vector<16x1024xf32>
    %5 = arith.addf %2, %4 : vector<16x1024xf32>
    %cst_5 = arith.constant 0.000000e+00 : f32
    %6 = vector.broadcast %cst_5 : f32 to vector<16x1024xf32>
    %7 = arith.maximumf %5, %6 : vector<16x1024xf32>
    %8 = arith.truncf %7 : vector<16x1024xf32> to vector<16x1024xbf16>
    %c0_6 = arith.constant 0 : index
    %c0_7 = arith.constant 0 : index
    %9 = vector.load %arg4[%c0_6, %c0_7] : memref<1024x128xbf16, #tpu.memory_space<vmem>>, vector<1024x128xbf16>
    %cst_8 = arith.constant dense<0.000000e+00> : vector<16x128xf32>
    %10 = tpu.matmul %8, %9, %cst_8 {dimension_numbers = #tpu.dot_dimension_numbers<[1], [0], [0], [1], [0, 0, 1, 1], [], []>} : vector<16x1024xbf16>, vector<1024x128xbf16>, vector<16x128xf32> -> vector<16x128xf32>
    %c0_9 = arith.constant 0 : index
    %c0_10 = arith.constant 0 : index
    %11 = vector.load %arg5[%c0_9, %c0_10] : memref<1x128xf32, #tpu.memory_space<vmem>>, vector<1x128xf32>
    %12 = vector.broadcast %11 : vector<1x128xf32> to vector<16x128xf32>
    %13 = arith.addf %10, %12 : vector<16x128xf32>
    %14 = tpu.iota {dimensions = array<i32: 1>} : vector<16x128xi32>
    %c64_i32 = arith.constant 64 : i32
    %15 = vector.broadcast %c64_i32 : i32 to vector<16x128xi32>
    %16 = arith.cmpi sge, %14, %15 : vector<16x128xi32>
    %cst_11 = arith.constant 0.000000e+00 : f32
    %17 = vector.broadcast %cst_11 : f32 to vector<16x128xf32>
    %18 = arith.maximumf %13, %17 : vector<16x128xf32>
    %19 = arith.select %16, %18, %13 : vector<16x128xi1>, vector<16x128xf32>
    %c0_12 = arith.constant 0 : index
    %c0_13 = arith.constant 0 : index
    %20 = vector.load %arg6[%c0_12, %c0_13] : memref<16x128xf32, #tpu.memory_space<vmem>>, vector<16x128xf32>
    tpu.vector_store %arg6[%c0_12, %c0_13], %19 {strides = array<i32>} : memref<16x128xf32, #tpu.memory_space<vmem>>, vector<16x128xf32>,
    return
  }
  func.func @transform_0(%arg0: i32) -> (i32, i32) {
    %c0_i32 = arith.constant 0 : i32
    %c0_i32_0 = arith.constant 0 : i32
    return %arg0, %c0_i32 : i32, i32
  }
  func.func @transform_1(%arg0: i32) -> (i32, i32) {
    %c0_i32 = arith.constant 0 : i32
    %c0_i32_0 = arith.constant 0 : i32
    %c0_i32_1 = arith.constant 0 : i32
    return %c0_i32, %c0_i32_0 : i32, i32
  }
  func.func @transform_2(%arg0: i32) -> (i32, i32) {
    %c0_i32 = arith.constant 0 : i32
    %c0_i32_0 = arith.constant 0 : i32
    %c0_i32_1 = arith.constant 0 : i32
    return %c0_i32, %c0_i32_0 : i32, i32
  }
  func.func @transform_3(%arg0: i32) -> (i32, i32) {
    %c0_i32 = arith.constant 0 : i32
    %c0_i32_0 = arith.constant 0 : i32
    %c0_i32_1 = arith.constant 0 : i32
    return %c0_i32, %c0_i32_0 : i32, i32
  }
  func.func @transform_4(%arg0: i32) -> (i32, i32) {
    %c0_i32 = arith.constant 0 : i32
    %c0_i32_0 = arith.constant 0 : i32
    %c0_i32_1 = arith.constant 0 : i32
    return %c0_i32, %c0_i32_0 : i32, i32
  }
  func.func @transform_5(%arg0: i32) -> (i32, i32) {
    %c0_i32 = arith.constant 0 : i32
    %c0_i32_0 = arith.constant 0 : i32
    return %arg0, %c0_i32 : i32, i32
  }
}

</mosaic_0001>

<llo_original>
// kernel: encoder_forward.1
$region0: #{encoder_forward.1}
  #allocation0 [shape = 'u32[]', space=smem, size = 0x4, offset = 0x4, fixed_abs, tag = 'smem constant byte address 0x4 - core index']
  #allocation1 [shape = 'u32[144,128]{1,0:T(1,128)}', space=vmem, size = 0x12000, scoped, tag = 'internal scratch']
  %s0 = inlined_call_operand.vmem [shape: bf16[16,896], index: 0, kind: input, shape index: {}]
  %s1 = inlined_call_operand.hbm [shape: bf16[896,1024], index: 1, kind: input, shape index: {}]
  %s2 = inlined_call_operand.hbm [shape: f32[1,1024], index: 2, kind: input, shape index: {}]
  %s3 = inlined_call_operand.hbm [shape: bf16[1024,128], index: 3, kind: input, shape index: {}]
  %s4 = inlined_call_operand.hbm [shape: f32[1,128], index: 4, kind: input, shape index: {}]
  %s5 = inlined_call_operand.vmem [shape: f32[16,128], index: 5, kind: output, shape index: {}]
  %s6 = sld [smem:[#allocation0]]
  $region46: #{encoder_forward.1} parent=0
    _
  %s8 = ssub.s32 1, %s6
  %s9 = scalar_select 0, %s8, %s6
  $region1: #{encoder_forward.1} parent=0
    #allocation2 [shape = 'u8[1835008]{0}', space=vmem, size = 0x1c0000, scoped, tag = 'input window, operand 1, single buffered']
    #allocation3 [shape = 's32[1]{0}', space=sflag, size = 0x4, scoped, tag = 'scoped memory for encoder_forward.1']
    #allocation4 [shape = 'u8[4096]{0}', space=vmem, size = 0x1000, scoped, tag = 'input window, operand 2, single buffered']
    #allocation5 [shape = 's32[1]{0}', space=sflag, size = 0x4, scoped, tag = 'scoped memory for encoder_forward.1']
    #allocation6 [shape = 'u8[262144]{0}', space=vmem, size = 0x40000, scoped, tag = 'input window, operand 3, single buffered']
    #allocation7 [shape = 'u8[512]{0}', space=vmem, size = 0x400, scoped, tag = 'input window, operand 4, single buffered']
    #allocation8 [shape = 's32[1]{0}', space=sflag, size = 0x4, scoped, tag = 'scoped memory for encoder_forward.1']
    %10 = vsyncpa [#allocation3], 0
    %11 = vsyncpa [#allocation5], 0
    %12 = vsyncpa [#allocation8], 0
    // Predicated region
    $region2: #{encoder_forward.1} parent=1 // pred_check
      _
    $region3: #{encoder_forward.1} parent=1 // pred_check_branch
      %14 = sbr.rel (0) target = $region5
    $region4: #{encoder_forward.1} parent=1 // pred_region
      _
    $region5: #{encoder_forward.1} parent=1 // pred_fallthru
      _
    // Predicated region
    $region6: #{encoder_forward.1} parent=1 // pred_check
      _
    $region7: #{encoder_forward.1} parent=1 // pred_check_branch
      %16 = sbr.rel (0) target = $region9
    $region8: #{encoder_forward.1} parent=1 // pred_region
      %s18 = ssub.s32 57344, 57344
      %19 = vsyncadd [#allocation3], %s18
      %s20 = sshll.u32 [#allocation2], 4
      %s21 = int_to_ptr.vmem [resolvable:$true] %s20
      %26 = dma.hbm_to_vmem [thread:$0]  %s1, 57344, %s21, [#allocation3], 512, 512, 32
    $region9: #{encoder_forward.1} parent=1 // pred_fallthru
      _
    // Predicated region
    $region10: #{encoder_forward.1} parent=1 // pred_check
      _
    $region11: #{encoder_forward.1} parent=1 // pred_check_branch
      %28 = sbr.rel (0) target = $region13
    $region12: #{encoder_forward.1} parent=1 // pred_region
      %s30 = ssub.s32 128, 128
      %31 = vsyncadd [#allocation5], %s30
      %s33 = sshll.u32 [#allocation4], 4
      %s34 = int_to_ptr.vmem [resolvable:$true] %s33
      %36 = dma.hbm_to_vmem [thread:$0]  %s2, 128, %s34, [#allocation5]
    $region13: #{encoder_forward.1} parent=1 // pred_fallthru
      _
    // Predicated region
    $region14: #{encoder_forward.1} parent=1 // pred_check
      _
    $region15: #{encoder_forward.1} parent=1 // pred_check_branch
      %38 = sbr.rel (0) target = $region17
    $region16: #{encoder_forward.1} parent=1 // pred_region
      %s40 = ssub.s32 8192, 8192
      %41 = vsyncadd [#allocation5], %s40
      %s42 = sshll.u32 [#allocation6], 4
      %s43 = int_to_ptr.vmem [resolvable:$true] %s42
      %48 = dma.hbm_to_vmem [thread:$0]  %s3, 8192, %s43, [#allocation5], 64, 64, 4
    $region17: #{encoder_forward.1} parent=1 // pred_fallthru
      _
    // Predicated region
    $region18: #{encoder_forward.1} parent=1 // pred_check
      _
    $region19: #{encoder_forward.1} parent=1 // pred_check_branch
      %50 = sbr.rel (0) target = $region21
    $region20: #{encoder_forward.1} parent=1 // pred_region
      %s52 = ssub.s32 16, 16
      %53 = vsyncadd [#allocation8], %s52
      %s55 = sshll.u32 [#allocation7], 4
      %s56 = int_to_ptr.vmem [resolvable:$true] %s55
      %58 = dma.hbm_to_vmem [thread:$0]  %s4, 16, %s56, [#allocation8]
    $region21: #{encoder_forward.1} parent=1 // pred_fallthru
      _
    // Predicated region
    $region22: #{encoder_forward.1} parent=1 // pred_check
      _
    $region23: #{encoder_forward.1} parent=1 // pred_check_branch
      %60 = sbr.rel (0) target = $region25
    $region24: #{encoder_forward.1} parent=1 // pred_region
      %61 = dma.done [#allocation3], 57344
    $region25: #{encoder_forward.1} parent=1 // pred_fallthru
      _
    // Predicated region
    $region26: #{encoder_forward.1} parent=1 // pred_check
      _
    $region27: #{encoder_forward.1} parent=1 // pred_check_branch
      %63 = sbr.rel (0) target = $region29
    $region28: #{encoder_forward.1} parent=1 // pred_region
      %64 = dma.done [#allocation5], 128
    $region29: #{encoder_forward.1} parent=1 // pred_fallthru
      _
    // Predicated region
    $region30: #{encoder_forward.1} parent=1 // pred_check
      _
    $region31: #{encoder_forward.1} parent=1 // pred_check_branch
      %66 = sbr.rel (0) target = $region33
    $region32: #{encoder_forward.1} parent=1 // pred_region
      %67 = dma.done [#allocation5], 8192
    $region33: #{encoder_forward.1} parent=1 // pred_fallthru
      _
    // Predicated region
    $region34: #{encoder_forward.1} parent=1 // pred_check
      _
    $region35: #{encoder_forward.1} parent=1 // pred_check_branch
      %69 = sbr.rel (0) target = $region37
    $region36: #{encoder_forward.1} parent=1 // pred_region
      %70 = dma.done [#allocation8], 16
    $region37: #{encoder_forward.1} parent=1 // pred_fallthru
      _
    %v72 = vld [vmem:[%s0] sm:$0xff]
    %v73 = vld [vmem:[%s0 + $0x8] sm:$0xff]
    %v74 = vld [vmem:[%s0 + $0x10] sm:$0xff]
    %v75 = vld [vmem:[%s0 + $0x18] sm:$0xf]
    %v76 = vld [vmem:[%s0 + $0x1c] sm:$0xff]
    %v77 = vld [vmem:[%s0 + $0x24] sm:$0xff]
    %v78 = vld [vmem:[%s0 + $0x2c] sm:$0xff]
    %v79 = vld [vmem:[%s0 + $0x34] sm:$0xf]
    %v80 = vld [vmem:[#allocation2] sm:$0xff]
    %v81 = vld [vmem:[#allocation2 + $0x8] sm:$0xff]
    %v82 = vld [vmem:[#allocation2 + $0x10] sm:$0xff]
    %v83 = vld [vmem:[#allocation2 + $0x18] sm:$0xff]
    %v84 = vld [vmem:[#allocation2 + $0x20] sm:$0xff]
    %v85 = vld [vmem:[#allocation2 + $0x28] sm:$0xff]
    %v86 = vld [vmem:[#allocation2 + $0x30] sm:$0xff]
    %v87 = vld [vmem:[#allocation2 + $0x38] sm:$0xff]
    %v88 = vld [vmem:[#allocation2 + $0x40] sm:$0xff]
    %v89 = vld [vmem:[#allocation2 + $0x48] sm:$0xff]
    %v90 = vld [vmem:[#allocation2 + $0x50] sm:$0xff]
    %v91 = vld [vmem:[#allocation2 + $0x58] sm:$0xff]
    %v92 = vld [vmem:[#allocation2 + $0x60] sm:$0xff]
    %v93 = vld [vmem:[#allocation2 + $0x68] sm:$0xff]
    %v94 = vld [vmem:[#allocation2 + $0x70] sm:$0xff]
    %v95 = vld [vmem:[#allocation2 + $0x78] sm:$0xff]
    %v96 = vld [vmem:[#allocation2 + $0x80] sm:$0xff]
    %v97 = vld [vmem:[#allocation2 + $0x88] sm:$0xff]
    %v98 = vld [vmem:[#allocation2 + $0x90] sm:$0xff]
    %v99 = vld [vmem:[#allocation2 + $0x98] sm:$0xff]
    %v100 = vld [vmem:[#allocation2 + $0xa0] sm:$0xff]
    %v101 = vld [vmem:[#allocation2 + $0xa8] sm:$0xff]
    %v102 = vld [vmem:[#allocation2 + $0xb0] sm:$0xff]
    %v103 = vld [vmem:[#allocation2 + $0xb8] sm:$0xff]
    %v104 = vld [vmem:[#allocation2 + $0xc0] sm:$0xff]
    %v105 = vld [vmem:[#allocation2 + $0xc8] sm:$0xff]
    %v106 = vld [vmem:[#allocation2 + $0xd0] sm:$0xff]
    %v107 = vld [vmem:[#allocation2 + $0xd8] sm:$0xff]
    %v108 = vld [vmem:[#allocation2 + $0xe0] sm:$0xff]
    %v109 = vld [vmem:[#allocation2 + $0xe8] sm:$0xff]
    %v110 = vld [vmem:[#allocation2 + $0xf0] sm:$0xff]
    %v111 = vld [vmem:[#allocation2 + $0xf8] sm:$0xff]
    %v112 = vld [vmem:[#allocation2 + $0x100] sm:$0xff]
    %v113 = vld [vmem:[#allocation2 + $0x108] sm:$0xff]
    %v114 = vld [vmem:[#allocation2 + $0x110] sm:$0xff]
    %v115 = vld [vmem:[#allocation2 + $0x118] sm:$0xff]
    %v116 = vld [vmem:[#allocation2 + $0x120] sm:$0xff]
    %v117 = vld [vmem:[#allocation2 + $0x128] sm:$0xff]
    %v118 = vld [vmem:[#allocation2 + $0x130] sm:$0xff]
    %v119 = vld [vmem:[#allocation2 + $0x138] sm:$0xff]
    %v120 = vld [vmem:[#allocation2 + $0x140] sm:$0xff]
    %v121 = vld [vmem:[#allocation2 + $0x148] sm:$0xff]
    %v122 = vld [vmem:[#allocation2 + $0x150] sm:$0xff]
    %v123 = vld [vmem:[#allocation2 + $0x158] sm:$0xff]
    %v124 = vld [vmem:[#allocation2 + $0x160] sm:$0xff]
    %v125 = vld [vmem:[#allocation2 + $0x168] sm:$0xff]
    %v126 = vld [vmem:[#allocation2 + $0x170] sm:$0xff]
    %v127 = vld [vmem:[#allocation2 + $0x178] sm:$0xff]
    %v128 = vld [vmem:[#allocation2 + $0x180] sm:$0xff]
    %v129 = vld [vmem:[#allocation2 + $0x188] sm:$0xff]
    %v130 = vld [vmem:[#allocation2 + $0x190] sm:$0xff]
    %v131 = vld [vmem:[#allocation2 + $0x198] sm:$0xff]
    %v132 = vld [vmem:[#allocation2 + $0x1a0] sm:$0xff]
    %v133 = vld [vmem:[#allocation2 + $0x1a8] sm:$0xff]
    %v134 = vld [vmem:[#allocation2 + $0x1b0] sm:$0xff]
    %v135 = vld [vmem:[#allocation2 + $0x1b8] sm:$0xff]
    %v136 = vld [vmem:[#allocation2 + $0x1c0] sm:$0xff]
    %v137 = vld [vmem:[#allocation2 + $0x1c8] sm:$0xff]
    %v138 = vld [vmem:[#allocation2 + $0x1d0] sm:$0xff]
    %v139 = vld [vmem:[#allocation2 + $0x1d8] sm:$0xff]
    %v140 = vld [vmem:[#allocation2 + $0x1e0] sm:$0xff]
    %v141 = vld [vmem:[#allocation2 + $0x1e8] sm:$0xff]
    %v142 = vld [vmem:[#allocation2 + $0x1f0] sm:$0xff]
    %v143 = vld [vmem:[#allocation2 + $0x1f8] sm:$0xff]
    %v144 = vld [vmem:[#allocation2 + $0x200] sm:$0xff]
    %v145 = vld [vmem:[#allocation2 + $0x208] sm:$0xff]
    %v146 = vld [vmem:[#allocation2 + $0x210] sm:$0xff]
    %v147 = vld [vmem:[#allocation2 + $0x218] sm:$0xff]
    %v148 = vld [vmem:[#allocation2 + $0x220] sm:$0xff]
    %v149 = vld [vmem:[#allocation2 + $0x228] sm:$0xff]
    %v150 = vld [vmem:[#allocation2 + $0x230] sm:$0xff]
    %v151 = vld [vmem:[#allocation2 + $0x238] sm:$0xff]
    %v152 = vld [vmem:[#allocation2 + $0x240] sm:$0xff]
    %v153 = vld [vmem:[#allocation2 + $0x248] sm:$0xff]
    %v154 = vld [vmem:[#allocation2 + $0x250] sm:$0xff]
    %v155 = vld [vmem:[#allocation2 + $0x258] sm:$0xff]
    %v156 = vld [vmem:[#allocation2 + $0x260] sm:$0xff]
    %v157 = vld [vmem:[#allocation2 + $0x268] sm:$0xff]
    %v158 = vld [vmem:[#allocation2 + $0x270] sm:$0xff]
    %v159 = vld [vmem:[#allocation2 + $0x278] sm:$0xff]
    %v160 = vld [vmem:[#allocation2 + $0x280] sm:$0xff]
    %v161 = vld [vmem:[#allocation2 + $0x288] sm:$0xff]
    %v162 = vld [vmem:[#allocation2 + $0x290] sm:$0xff]
    %v163 = vld [vmem:[#allocation2 + $0x298] sm:$0xff]
    %v164 = vld [vmem:[#allocation2 + $0x2a0] sm:$0xff]
    %v165 = vld [vmem:[#allocation2 + $0x2a8] sm:$0xff]
    %v166 = vld [vmem:[#allocation2 + $0x2b0] sm:$0xff]
    %v167 = vld [vmem:[#allocation2 + $0x2b8] sm:$0xff]
    %v168 = vld [vmem:[#allocation2 + $0x2c0] sm:$0xff]
    %v169 = vld [vmem:[#allocation2 + $0x2c8] sm:$0xff]
    %v170 = vld [vmem:[#allocation2 + $0x2d0] sm:$0xff]
    %v171 = vld [vmem:[#allocation2 + $0x2d8] sm:$0xff]
    %v172 = vld [vmem:[#allocation2 + $0x2e0] sm:$0xff]
    %v173 = vld [vmem:[#allocation2 + $0x2e8] sm:$0xff]
    %v174 = vld [vmem:[#allocation2 + $0x2f0] sm:$0xff]
    %v175 = vld [vmem:[#allocation2 + $0x2f8] sm:$0xff]
    %v176 = vld [vmem:[#allocation2 + $0x300] sm:$0xff]
    %v177 = vld [vmem:[#allocation2 + $0x308] sm:$0xff]
    %v178 = vld [vmem:[#allocation2 + $0x310] sm:$0xff]
    %v179 = vld [vmem:[#allocation2 + $0x318] sm:$0xff]
    %v180 = vld [vmem:[#allocation2 + $0x320] sm:$0xff]
    %v181 = vld [vmem:[#allocation2 + $0x328] sm:$0xff]
    %v182 = vld [vmem:[#allocation2 + $0x330] sm:$0xff]
    %v183 = vld [vmem:[#allocation2 + $0x338] sm:$0xff]
    %v184 = vld [vmem:[#allocation2 + $0x340] sm:$0xff]
    %v185 = vld [vmem:[#allocation2 + $0x348] sm:$0xff]
    %v186 = vld [vmem:[#allocation2 + $0x350] sm:$0xff]
    %v187 = vld [vmem:[#allocation2 + $0x358] sm:$0xff]
    %v188 = vld [vmem:[#allocation2 + $0x360] sm:$0xff]
    %v189 = vld [vmem:[#allocation2 + $0x368] sm:$0xff]
    %v190 = vld [vmem:[#allocation2 + $0x370] sm:$0xff]
    %v191 = vld [vmem:[#allocation2 + $0x378] sm:$0xff]
    %v192 = vld [vmem:[#allocation2 + $0x380] sm:$0xff]
    %v193 = vld [vmem:[#allocation2 + $0x388] sm:$0xff]
    %v194 = vld [vmem:[#allocation2 + $0x390] sm:$0xff]
    %v195 = vld [vmem:[#allocation2 + $0x398] sm:$0xff]
    %v196 = vld [vmem:[#allocation2 + $0x3a0] sm:$0xff]
    %v197 = vld [vmem:[#allocation2 + $0x3a8] sm:$0xff]
    %v198 = vld [vmem:[#allocation2 + $0x3b0] sm:$0xff]
    %v199 = vld [vmem:[#allocation2 + $0x3b8] sm:$0xff]
    %v200 = vld [vmem:[#allocation2 + $0x3c0] sm:$0xff]
    %v201 = vld [vmem:[#allocation2 + $0x3c8] sm:$0xff]
    %v202 = vld [vmem:[#allocation2 + $0x3d0] sm:$0xff]
    %v203 = vld [vmem:[#allocation2 + $0x3d8] sm:$0xff]
    %v204 = vld [vmem:[#allocation2 + $0x3e0] sm:$0xff]
    %v205 = vld [vmem:[#allocation2 + $0x3e8] sm:$0xff]
    %v206 = vld [vmem:[#allocation2 + $0x3f0] sm:$0xff]
    %v207 = vld [vmem:[#allocation2 + $0x3f8] sm:$0xff]
    %v208 = vld [vmem:[#allocation2 + $0x400] sm:$0xff]
    %v209 = vld [vmem:[#allocation2 + $0x408] sm:$0xff]
    %v210 = vld [vmem:[#allocation2 + $0x410] sm:$0xff]
    %v211 = vld [vmem:[#allocation2 + $0x418] sm:$0xff]
    %v212 = vld [vmem:[#allocation2 + $0x420] sm:$0xff]
    %v213 = vld [vmem:[#allocation2 + $0x428] sm:$0xff]
    %v214 = vld [vmem:[#allocation2 + $0x430] sm:$0xff]
    %v215 = vld [vmem:[#allocation2 + $0x438] sm:$0xff]
    %v216 = vld [vmem:[#allocation2 + $0x440] sm:$0xff]
    %v217 = vld [vmem:[#allocation2 + $0x448] sm:$0xff]
    %v218 = vld [vmem:[#allocation2 + $0x450] sm:$0xff]
    %v219 = vld [vmem:[#allocation2 + $0x458] sm:$0xff]
    %v220 = vld [vmem:[#allocation2 + $0x460] sm:$0xff]
    %v221 = vld [vmem:[#allocation2 + $0x468] sm:$0xff]
    %v222 = vld [vmem:[#allocation2 + $0x470] sm:$0xff]
    %v223 = vld [vmem:[#allocation2 + $0x478] sm:$0xff]
    %v224 = vld [vmem:[#allocation2 + $0x480] sm:$0xff]
    %v225 = vld [vmem:[#allocation2 + $0x488] sm:$0xff]
    %v226 = vld [vmem:[#allocation2 + $0x490] sm:$0xff]
    %v227 = vld [vmem:[#allocation2 + $0x498] sm:$0xff]
    %v228 = vld [vmem:[#allocation2 + $0x4a0] sm:$0xff]
    %v229 = vld [vmem:[#allocation2 + $0x4a8] sm:$0xff]
    %v230 = vld [vmem:[#allocation2 + $0x4b0] sm:$0xff]
    %v231 = vld [vmem:[#allocation2 + $0x4b8] sm:$0xff]
    %v232 = vld [vmem:[#allocation2 + $0x4c0] sm:$0xff]
    %v233 = vld [vmem:[#allocation2 + $0x4c8] sm:$0xff]
    %v234 = vld [vmem:[#allocation2 + $0x4d0] sm:$0xff]
    %v235 = vld [vmem:[#allocation2 + $0x4d8] sm:$0xff]
    %v236 = vld [vmem:[#allocation2 + $0x4e0] sm:$0xff]
    %v237 = vld [vmem:[#allocation2 + $0x4e8] sm:$0xff]
    %v238 = vld [vmem:[#allocation2 + $0x4f0] sm:$0xff]
    %v239 = vld [vmem:[#allocation2 + $0x4f8] sm:$0xff]
    %v240 = vld [vmem:[#allocation2 + $0x500] sm:$0xff]
    %v241 = vld [vmem:[#allocation2 + $0x508] sm:$0xff]
    %v242 = vld [vmem:[#allocation2 + $0x510] sm:$0xff]
    %v243 = vld [vmem:[#allocation2 + $0x518] sm:$0xff]
    %v244 = vld [vmem:[#allocation2 + $0x520] sm:$0xff]
    %v245 = vld [vmem:[#allocation2 + $0x528] sm:$0xff]
    %v246 = vld [vmem:[#allocation2 + $0x530] sm:$0xff]
    %v247 = vld [vmem:[#allocation2 + $0x538] sm:$0xff]
    %v248 = vld [vmem:[#allocation2 + $0x540] sm:$0xff]
    %v249 = vld [vmem:[#allocation2 + $0x548] sm:$0xff]
    %v250 = vld [vmem:[#allocation2 + $0x550] sm:$0xff]
    %v251 = vld [vmem:[#allocation2 + $0x558] sm:$0xff]
    %v252 = vld [vmem:[#allocation2 + $0x560] sm:$0xff]
    %v253 = vld [vmem:[#allocation2 + $0x568] sm:$0xff]
    %v254 = vld [vmem:[#allocation2 + $0x570] sm:$0xff]
    %v255 = vld [vmem:[#allocation2 + $0x578] sm:$0xff]
    %v256 = vld [vmem:[#allocation2 + $0x580] sm:$0xff]
    %v257 = vld [vmem:[#allocation2 + $0x588] sm:$0xff]
    %v258 = vld [vmem:[#allocation2 + $0x590] sm:$0xff]
    %v259 = vld [vmem:[#allocation2 + $0x598] sm:$0xff]
    %v260 = vld [vmem:[#allocation2 + $0x5a0] sm:$0xff]
    %v261 = vld [vmem:[#allocation2 + $0x5a8] sm:$0xff]
    %v262 = vld [vmem:[#allocation2 + $0x5b0] sm:$0xff]
    %v263 = vld [vmem:[#allocation2 + $0x5b8] sm:$0xff]
    %v264 = vld [vmem:[#allocation2 + $0x5c0] sm:$0xff]
    %v265 = vld [vmem:[#allocation2 + $0x5c8] sm:$0xff]
    %v266 = vld [vmem:[#allocation2 + $0x5d0] sm:$0xff]
    %v267 = vld [vmem:[#allocation2 + $0x5d8] sm:$0xff]
    %v268 = vld [vmem:[#allocation2 + $0x5e0] sm:$0xff]
    %v269 = vld [vmem:[#allocation2 + $0x5e8] sm:$0xff]
    %v270 = vld [vmem:[#allocation2 + $0x5f0] sm:$0xff]
    %v271 = vld [vmem:[#allocation2 + $0x5f8] sm:$0xff]
    %v272 = vld [vmem:[#allocation2 + $0x600] sm:$0xff]
    %v273 = vld [vmem:[#allocation2 + $0x608] sm:$0xff]
    %v274 = vld [vmem:[#allocation2 + $0x610] sm:$0xff]
    %v275 = vld [vmem:[#allocation2 + $0x618] sm:$0xff]
    %v276 = vld [vmem:[#allocation2 + $0x620] sm:$0xff]
    %v277 = vld [vmem:[#allocation2 + $0x628] sm:$0xff]
    %v278 = vld [vmem:[#allocation2 + $0x630] sm:$0xff]
    %v279 = vld [vmem:[#allocation2 + $0x638] sm:$0xff]
    %v280 = vld [vmem:[#allocation2 + $0x640] sm:$0xff]
    %v281 = vld [vmem:[#allocation2 + $0x648] sm:$0xff]
    %v282 = vld [vmem:[#allocation2 + $0x650] sm:$0xff]
    %v283 = vld [vmem:[#allocation2 + $0x658] sm:$0xff]
    %v284 = vld [vmem:[#allocation2 + $0x660] sm:$0xff]
    %v285 = vld [vmem:[#allocation2 + $0x668] sm:$0xff]
    %v286 = vld [vmem:[#allocation2 + $0x670] sm:$0xff]
    %v287 = vld [vmem:[#allocation2 + $0x678] sm:$0xff]
    %v288 = vld [vmem:[#allocation2 + $0x680] sm:$0xff]
    %v289 = vld [vmem:[#allocation2 + $0x688] sm:$0xff]
    %v290 = vld [vmem:[#allocation2 + $0x690] sm:$0xff]
    %v291 = vld [vmem:[#allocation2 + $0x698] sm:$0xff]
    %v292 = vld [vmem:[#allocation2 + $0x6a0] sm:$0xff]
    %v293 = vld [vmem:[#allocation2 + $0x6a8] sm:$0xff]
    %v294 = vld [vmem:[#allocation2 + $0x6b0] sm:$0xff]
    %v295 = vld [vmem:[#allocation2 + $0x6b8] sm:$0xff]
    %v296 = vld [vmem:[#allocation2 + $0x6c0] sm:$0xff]
    %v297 = vld [vmem:[#allocation2 + $0x6c8] sm:$0xff]
    %v298 = vld [vmem:[#allocation2 + $0x6d0] sm:$0xff]
    %v299 = vld [vmem:[#allocation2 + $0x6d8] sm:$0xff]
    %v300 = vld [vmem:[#allocation2 + $0x6e0] sm:$0xff]
    %v301 = vld [vmem:[#allocation2 + $0x6e8] sm:$0xff]
    %v302 = vld [vmem:[#allocation2 + $0x6f0] sm:$0xff]
    %v303 = vld [vmem:[#allocation2 + $0x6f8] sm:$0xff]
    %v304 = vld [vmem:[#allocation2 + $0x700] sm:$0xff]
    %v305 = vld [vmem:[#allocation2 + $0x708] sm:$0xff]
    %v306 = vld [vmem:[#allocation2 + $0x710] sm:$0xff]
    %v307 = vld [vmem:[#allocation2 + $0x718] sm:$0xff]
    %v308 = vld [vmem:[#allocation2 + $0x720] sm:$0xff]
    %v309 = vld [vmem:[#allocation2 + $0x728] sm:$0xff]
    %v310 = vld [vmem:[#allocation2 + $0x730] sm:$0xff]
    %v311 = vld [vmem:[#allocation2 + $0x738] sm:$0xff]
    %v312 = vld [vmem:[#allocation2 + $0x740] sm:$0xff]
    %v313 = vld [vmem:[#allocation2 + $0x748] sm:$0xff]
    %v314 = vld [vmem:[#allocation2 + $0x750] sm:$0xff]
    %v315 = vld [vmem:[#allocation2 + $0x758] sm:$0xff]
    %v316 = vld [vmem:[#allocation2 + $0x760] sm:$0xff]
    %v317 = vld [vmem:[#allocation2 + $0x768] sm:$0xff]
    %v318 = vld [vmem:[#allocation2 + $0x770] sm:$0xff]
    %v319 = vld [vmem:[#allocation2 + $0x778] sm:$0xff]
    %v320 = vld [vmem:[#allocation2 + $0x780] sm:$0xff]
    %v321 = vld [vmem:[#allocation2 + $0x788] sm:$0xff]
    %v322 = vld [vmem:[#allocation2 + $0x790] sm:$0xff]
    %v323 = vld [vmem:[#allocation2 + $0x798] sm:$0xff]
    %v324 = vld [vmem:[#allocation2 + $0x7a0] sm:$0xff]
    %v325 = vld [vmem:[#allocation2 + $0x7a8] sm:$0xff]
    %v326 = vld [vmem:[#allocation2 + $0x7b0] sm:$0xff]
    %v327 = vld [vmem:[#allocation2 + $0x7b8] sm:$0xff]
    %v328 = vld [vmem:[#allocation2 + $0x7c0] sm:$0xff]
    %v329 = vld [vmem:[#allocation2 + $0x7c8] sm:$0xff]
    %v330 = vld [vmem:[#allocation2 + $0x7d0] sm:$0xff]
    %v331 = vld [vmem:[#allocation2 + $0x7d8] sm:$0xff]
    %v332 = vld [vmem:[#allocation2 + $0x7e0] sm:$0xff]
    %v333 = vld [vmem:[#allocation2 + $0x7e8] sm:$0xff]
    %v334 = vld [vmem:[#allocation2 + $0x7f0] sm:$0xff]
    %v335 = vld [vmem:[#allocation2 + $0x7f8] sm:$0xff]
    %v336 = vld [vmem:[#allocation2 + $0x800] sm:$0xff]
    %v337 = vld [vmem:[#allocation2 + $0x808] sm:$0xff]
    %v338 = vld [vmem:[#allocation2 + $0x810] sm:$0xff]
    %v339 = vld [vmem:[#allocation2 + $0x818] sm:$0xff]
    %v340 = vld [vmem:[#allocation2 + $0x820] sm:$0xff]
    %v341 = vld [vmem:[#allocation2 + $0x828] sm:$0xff]
    %v342 = vld [vmem:[#allocation2 + $0x830] sm:$0xff]
    %v343 = vld [vmem:[#allocation2 + $0x838] sm:$0xff]
    %v344 = vld [vmem:[#allocation2 + $0x840] sm:$0xff]
    %v345 = vld [vmem:[#allocation2 + $0x848] sm:$0xff]
    %v346 = vld [vmem:[#allocation2 + $0x850] sm:$0xff]
    %v347 = vld [vmem:[#allocation2 + $0x858] sm:$0xff]
    %v348 = vld [vmem:[#allocation2 + $0x860] sm:$0xff]
    %v349 = vld [vmem:[#allocation2 + $0x868] sm:$0xff]
    %v350 = vld [vmem:[#allocation2 + $0x870] sm:$0xff]
    %v351 = vld [vmem:[#allocation2 + $0x878] sm:$0xff]
    %v352 = vld [vmem:[#allocation2 + $0x880] sm:$0xff]
    %v353 = vld [vmem:[#allocation2 + $0x888] sm:$0xff]
    %v354 = vld [vmem:[#allocation2 + $0x890] sm:$0xff]
    %v355 = vld [vmem:[#allocation2 + $0x898] sm:$0xff]
    %v356 = vld [vmem:[#allocation2 + $0x8a0] sm:$0xff]
    %v357 = vld [vmem:[#allocation2 + $0x8a8] sm:$0xff]
    %v358 = vld [vmem:[#allocation2 + $0x8b0] sm:$0xff]
    %v359 = vld [vmem:[#allocation2 + $0x8b8] sm:$0xff]
    %v360 = vld [vmem:[#allocation2 + $0x8c0] sm:$0xff]
    %v361 = vld [vmem:[#allocation2 + $0x8c8] sm:$0xff]
    %v362 = vld [vmem:[#allocation2 + $0x8d0] sm:$0xff]
    %v363 = vld [vmem:[#allocation2 + $0x8d8] sm:$0xff]
    %v364 = vld [vmem:[#allocation2 + $0x8e0] sm:$0xff]
    %v365 = vld [vmem:[#allocation2 + $0x8e8] sm:$0xff]
    %v366 = vld [vmem:[#allocation2 + $0x8f0] sm:$0xff]
    %v367 = vld [vmem:[#allocation2 + $0x8f8] sm:$0xff]
    %v368 = vld [vmem:[#allocation2 + $0x900] sm:$0xff]
    %v369 = vld [vmem:[#allocation2 + $0x908] sm:$0xff]
    %v370 = vld [vmem:[#allocation2 + $0x910] sm:$0xff]
    %v371 = vld [vmem:[#allocation2 + $0x918] sm:$0xff]
    %v372 = vld [vmem:[#allocation2 + $0x920] sm:$0xff]
    %v373 = vld [vmem:[#allocation2 + $0x928] sm:$0xff]
    %v374 = vld [vmem:[#allocation2 + $0x930] sm:$0xff]
    %v375 = vld [vmem:[#allocation2 + $0x938] sm:$0xff]
    %v376 = vld [vmem:[#allocation2 + $0x940] sm:$0xff]
    %v377 = vld [vmem:[#allocation2 + $0x948] sm:$0xff]
    %v378 = vld [vmem:[#allocation2 + $0x950] sm:$0xff]
    %v379 = vld [vmem:[#allocation2 + $0x958] sm:$0xff]
    %v380 = vld [vmem:[#allocation2 + $0x960] sm:$0xff]
    %v381 = vld [vmem:[#allocation2 + $0x968] sm:$0xff]
    %v382 = vld [vmem:[#allocation2 + $0x970] sm:$0xff]
    %v383 = vld [vmem:[#allocation2 + $0x978] sm:$0xff]
    %v384 = vld [vmem:[#allocation2 + $0x980] sm:$0xff]
    %v385 = vld [vmem:[#allocation2 + $0x988] sm:$0xff]
    %v386 = vld [vmem:[#allocation2 + $0x990] sm:$0xff]
    %v387 = vld [vmem:[#allocation2 + $0x998] sm:$0xff]
    %v388 = vld [vmem:[#allocation2 + $0x9a0] sm:$0xff]
    %v389 = vld [vmem:[#allocation2 + $0x9a8] sm:$0xff]
    %v390 = vld [vmem:[#allocation2 + $0x9b0] sm:$0xff]
    %v391 = vld [vmem:[#allocation2 + $0x9b8] sm:$0xff]
    %v392 = vld [vmem:[#allocation2 + $0x9c0] sm:$0xff]
    %v393 = vld [vmem:[#allocation2 + $0x9c8] sm:$0xff]
    %v394 = vld [vmem:[#allocation2 + $0x9d0] sm:$0xff]
    %v395 = vld [vmem:[#allocation2 + $0x9d8] sm:$0xff]
    %v396 = vld [vmem:[#allocation2 + $0x9e0] sm:$0xff]
    %v397 = vld [vmem:[#allocation2 + $0x9e8] sm:$0xff]
    %v398 = vld [vmem:[#allocation2 + $0x9f0] sm:$0xff]
    %v399 = vld [vmem:[#allocation2 + $0x9f8] sm:$0xff]
    %v400 = vld [vmem:[#allocation2 + $0xa00] sm:$0xff]
    %v401 = vld [vmem:[#allocation2 + $0xa08] sm:$0xff]
    %v402 = vld [vmem:[#allocation2 + $0xa10] sm:$0xff]
    %v403 = vld [vmem:[#allocation2 + $0xa18] sm:$0xff]
    %v404 = vld [vmem:[#allocation2 + $0xa20] sm:$0xff]
    %v405 = vld [vmem:[#allocation2 + $0xa28] sm:$0xff]
    %v406 = vld [vmem:[#allocation2 + $0xa30] sm:$0xff]
    %v407 = vld [vmem:[#allocation2 + $0xa38] sm:$0xff]
    %v408 = vld [vmem:[#allocation2 + $0xa40] sm:$0xff]
    %v409 = vld [vmem:[#allocation2 + $0xa48] sm:$0xff]
    %v410 = vld [vmem:[#allocation2 + $0xa50] sm:$0xff]
    %v411 = vld [vmem:[#allocation2 + $0xa58] sm:$0xff]
    %v412 = vld [vmem:[#allocation2 + $0xa60] sm:$0xff]
    %v413 = vld [vmem:[#allocation2 + $0xa68] sm:$0xff]
    %v414 = vld [vmem:[#allocation2 + $0xa70] sm:$0xff]
    %v415 = vld [vmem:[#allocation2 + $0xa78] sm:$0xff]
    %v416 = vld [vmem:[#allocation2 + $0xa80] sm:$0xff]
    %v417 = vld [vmem:[#allocation2 + $0xa88] sm:$0xff]
    %v418 = vld [vmem:[#allocation2 + $0xa90] sm:$0xff]
    %v419 = vld [vmem:[#allocation2 + $0xa98] sm:$0xff]
    %v420 = vld [vmem:[#allocation2 + $0xaa0] sm:$0xff]
    %v421 = vld [vmem:[#allocation2 + $0xaa8] sm:$0xff]
    %v422 = vld [vmem:[#allocation2 + $0xab0] sm:$0xff]
    %v423 = vld [vmem:[#allocation2 + $0xab8] sm:$0xff]
    %v424 = vld [vmem:[#allocation2 + $0xac0] sm:$0xff]
    %v425 = vld [vmem:[#allocation2 + $0xac8] sm:$0xff]
    %v426 = vld [vmem:[#allocation2 + $0xad0] sm:$0xff]
    %v427 = vld [vmem:[#allocation2 + $0xad8] sm:$0xff]
    %v428 = vld [vmem:[#allocation2 + $0xae0] sm:$0xff]
    %v429 = vld [vmem:[#allocation2 + $0xae8] sm:$0xff]
    %v430 = vld [vmem:[#allocation2 + $0xaf0] sm:$0xff]
    %v431 = vld [vmem:[#allocation2 + $0xaf8] sm:$0xff]
    %v432 = vld [vmem:[#allocation2 + $0xb00] sm:$0xff]
    %v433 = vld [vmem:[#allocation2 + $0xb08] sm:$0xff]
    %v434 = vld [vmem:[#allocation2 + $0xb10] sm:$0xff]
    %v435 = vld [vmem:[#allocation2 + $0xb18] sm:$0xff]
    %v436 = vld [vmem:[#allocation2 + $0xb20] sm:$0xff]
    %v437 = vld [vmem:[#allocation2 + $0xb28] sm:$0xff]
    %v438 = vld [vmem:[#allocation2 + $0xb30] sm:$0xff]
    %v439 = vld [vmem:[#allocation2 + $0xb38] sm:$0xff]
    %v440 = vld [vmem:[#allocation2 + $0xb40] sm:$0xff]
    %v441 = vld [vmem:[#allocation2 + $0xb48] sm:$0xff]
    %v442 = vld [vmem:[#allocation2 + $0xb50] sm:$0xff]
    %v443 = vld [vmem:[#allocation2 + $0xb58] sm:$0xff]
    %v444 = vld [vmem:[#allocation2 + $0xb60] sm:$0xff]
    %v445 = vld [vmem:[#allocation2 + $0xb68] sm:$0xff]
    %v446 = vld [vmem:[#allocation2 + $0xb70] sm:$0xff]
    %v447 = vld [vmem:[#allocation2 + $0xb78] sm:$0xff]
    %v448 = vld [vmem:[#allocation2 + $0xb80] sm:$0xff]
    %v449 = vld [vmem:[#allocation2 + $0xb88] sm:$0xff]
    %v450 = vld [vmem:[#allocation2 + $0xb90] sm:$0xff]
    %v451 = vld [vmem:[#allocation2 + $0xb98] sm:$0xff]
    %v452 = vld [vmem:[#allocation2 + $0xba0] sm:$0xff]
    %v453 = vld [vmem:[#allocation2 + $0xba8] sm:$0xff]
    %v454 = vld [vmem:[#allocation2 + $0xbb0] sm:$0xff]
    %v455 = vld [vmem:[#allocation2 + $0xbb8] sm:$0xff]
    %v456 = vld [vmem:[#allocation2 + $0xbc0] sm:$0xff]
    %v457 = vld [vmem:[#allocation2 + $0xbc8] sm:$0xff]
    %v458 = vld [vmem:[#allocation2 + $0xbd0] sm:$0xff]
    %v459 = vld [vmem:[#allocation2 + $0xbd8] sm:$0xff]
    %v460 = vld [vmem:[#allocation2 + $0xbe0] sm:$0xff]
    %v461 = vld [vmem:[#allocation2 + $0xbe8] sm:$0xff]
    %v462 = vld [vmem:[#allocation2 + $0xbf0] sm:$0xff]
    %v463 = vld [vmem:[#allocation2 + $0xbf8] sm:$0xff]
    %v464 = vld [vmem:[#allocation2 + $0xc00] sm:$0xff]
    %v465 = vld [vmem:[#allocation2 + $0xc08] sm:$0xff]
    %v466 = vld [vmem:[#allocation2 + $0xc10] sm:$0xff]
    %v467 = vld [vmem:[#allocation2 + $0xc18] sm:$0xff]
    %v468 = vld [vmem:[#allocation2 + $0xc20] sm:$0xff]
    %v469 = vld [vmem:[#allocation2 + $0xc28] sm:$0xff]
    %v470 = vld [vmem:[#allocation2 + $0xc30] sm:$0xff]
    %v471 = vld [vmem:[#allocation2 + $0xc38] sm:$0xff]
    %v472 = vld [vmem:[#allocation2 + $0xc40] sm:$0xff]
    %v473 = vld [vmem:[#allocation2 + $0xc48] sm:$0xff]
    %v474 = vld [vmem:[#allocation2 + $0xc50] sm:$0xff]
    %v475 = vld [vmem:[#allocation2 + $0xc58] sm:$0xff]
    %v476 = vld [vmem:[#allocation2 + $0xc60] sm:$0xff]
    %v477 = vld [vmem:[#allocation2 + $0xc68] sm:$0xff]
    %v478 = vld [vmem:[#allocation2 + $0xc70] sm:$0xff]
    %v479 = vld [vmem:[#allocation2 + $0xc78] sm:$0xff]
    %v480 = vld [vmem:[#allocation2 + $0xc80] sm:$0xff]
    %v481 = vld [vmem:[#allocation2 + $0xc88] sm:$0xff]
    %v482 = vld [vmem:[#allocation2 + $0xc90] sm:$0xff]
    %v483 = vld [vmem:[#allocation2 + $0xc98] sm:$0xff]
    %v484 = vld [vmem:[#allocation2 + $0xca0] sm:$0xff]
    %v485 = vld [vmem:[#allocation2 + $0xca8] sm:$0xff]
    %v486 = vld [vmem:[#allocation2 + $0xcb0] sm:$0xff]
    %v487 = vld [vmem:[#allocation2 + $0xcb8] sm:$0xff]
    %v488 = vld [vmem:[#allocation2 + $0xcc0] sm:$0xff]
    %v489 = vld [vmem:[#allocation2 + $0xcc8] sm:$0xff]
    %v490 = vld [vmem:[#allocation2 + $0xcd0] sm:$0xff]
    %v491 = vld [vmem:[#allocation2 + $0xcd8] sm:$0xff]
    %v492 = vld [vmem:[#allocation2 + $0xce0] sm:$0xff]
    %v493 = vld [vmem:[#allocation2 + $0xce8] sm:$0xff]
    %v494 = vld [vmem:[#allocation2 + $0xcf0] sm:$0xff]
    %v495 = vld [vmem:[#allocation2 + $0xcf8] sm:$0xff]
    %v496 = vld [vmem:[#allocation2 + $0xd00] sm:$0xff]
    %v497 = vld [vmem:[#allocation2 + $0xd08] sm:$0xff]
    %v498 = vld [vmem:[#allocation2 + $0xd10] sm:$0xff]
    %v499 = vld [vmem:[#allocation2 + $0xd18] sm:$0xff]
    %v500 = vld [vmem:[#allocation2 + $0xd20] sm:$0xff]
    %v501 = vld [vmem:[#allocation2 + $0xd28] sm:$0xff]
    %v502 = vld [vmem:[#allocation2 + $0xd30] sm:$0xff]
    %v503 = vld [vmem:[#allocation2 + $0xd38] sm:$0xff]
    %v504 = vld [vmem:[#allocation2 + $0xd40] sm:$0xff]
    %v505 = vld [vmem:[#allocation2 + $0xd48] sm:$0xff]
    %v506 = vld [vmem:[#allocation2 + $0xd50] sm:$0xff]
    %v507 = vld [vmem:[#allocation2 + $0xd58] sm:$0xff]
    %v508 = vld [vmem:[#allocation2 + $0xd60] sm:$0xff]
    %v509 = vld [vmem:[#allocation2 + $0xd68] sm:$0xff]
    %v510 = vld [vmem:[#allocation2 + $0xd70] sm:$0xff]
    %v511 = vld [vmem:[#allocation2 + $0xd78] sm:$0xff]
    %v512 = vld [vmem:[#allocation2 + $0xd80] sm:$0xff]
    %v513 = vld [vmem:[#allocation2 + $0xd88] sm:$0xff]
    %v514 = vld [vmem:[#allocation2 + $0xd90] sm:$0xff]
    %v515 = vld [vmem:[#allocation2 + $0xd98] sm:$0xff]
    %v516 = vld [vmem:[#allocation2 + $0xda0] sm:$0xff]
    %v517 = vld [vmem:[#allocation2 + $0xda8] sm:$0xff]
    %v518 = vld [vmem:[#allocation2 + $0xdb0] sm:$0xff]
    %v519 = vld [vmem:[#allocation2 + $0xdb8] sm:$0xff]
    %v520 = vld [vmem:[#allocation2 + $0xdc0] sm:$0xff]
    %v521 = vld [vmem:[#allocation2 + $0xdc8] sm:$0xff]
    %v522 = vld [vmem:[#allocation2 + $0xdd0] sm:$0xff]
    %v523 = vld [vmem:[#allocation2 + $0xdd8] sm:$0xff]
    %v524 = vld [vmem:[#allocation2 + $0xde0] sm:$0xff]
    %v525 = vld [vmem:[#allocation2 + $0xde8] sm:$0xff]
    %v526 = vld [vmem:[#allocation2 + $0xdf0] sm:$0xff]
    %v527 = vld [vmem:[#allocation2 + $0xdf8] sm:$0xff]
    %v528 = vld [vmem:[#allocation4] sm:$0xff]
    %v530 = vlaneseq
    %v531 = vshrl.u32 %v530, 7
    %v532 = vsub.s32 0, %v531
    %v533 = vrot.slane %v528, %v532
    %v534 = vlaneseq
    %v535 = vshrl.u32 %v534, 7
    %v536 = vsub.s32 1, %v535
    %v537 = vrot.slane %v528, %v536
    %v538 = vlaneseq
    %v539 = vshrl.u32 %v538, 7
    %v540 = vsub.s32 2, %v539
    %v541 = vrot.slane %v528, %v540
    %v542 = vlaneseq
    %v543 = vshrl.u32 %v542, 7
    %v544 = vsub.s32 3, %v543
    %v545 = vrot.slane %v528, %v544
    %v546 = vlaneseq
    %v547 = vshrl.u32 %v546, 7
    %v548 = vsub.s32 4, %v547
    %v549 = vrot.slane %v528, %v548
    %v550 = vlaneseq
    %v551 = vshrl.u32 %v550, 7
    %v552 = vsub.s32 5, %v551
    %v553 = vrot.slane %v528, %v552
    %v554 = vlaneseq
    %v555 = vshrl.u32 %v554, 7
    %v556 = vsub.s32 6, %v555
    %v557 = vrot.slane %v528, %v556
    %v558 = vlaneseq
    %v559 = vshrl.u32 %v558, 7
    %v560 = vsub.s32 7, %v559
    %v561 = vrot.slane %v528, %v560
    %v578 = vunpack.c.l.b16 %v72
    %v579 = vunpack.c.h.b16 %v72
    %v580 = vunpack.c.l.b16 %v73
    %v581 = vunpack.c.h.b16 %v73
    %v582 = vunpack.c.l.b16 %v74
    %v583 = vunpack.c.h.b16 %v74
    %v584 = vunpack.c.l.b16 %v75
    %v585 = vunpack.c.l.b16 %v76
    %v586 = vunpack.c.h.b16 %v76
    %v587 = vunpack.c.l.b16 %v77
    %v588 = vunpack.c.h.b16 %v77
    %v589 = vunpack.c.l.b16 %v78
    %v590 = vunpack.c.h.b16 %v78
    %v591 = vunpack.c.l.b16 %v79
    %v592 = vpack.c.b16 %v585, %v578
    %v593 = vpack.c.b16 %v586, %v579
    %v594 = vpack.c.b16 %v587, %v580
    %v595 = vpack.c.b16 %v588, %v581
    %v596 = vpack.c.b16 %v589, %v582
    %v597 = vpack.c.b16 %v590, %v583
    %v598 = vpack.c.b16 %v591, %v584
    %v1054 = vunpack.c.l.b16 %v80
    %v1055 = vunpack.c.h.b16 %v80
    %v1056 = vunpack.c.l.b16 %v81
    %v1057 = vunpack.c.h.b16 %v81
    %v1058 = vunpack.c.l.b16 %v82
    %v1059 = vunpack.c.h.b16 %v82
    %v1060 = vunpack.c.l.b16 %v83
    %v1061 = vunpack.c.h.b16 %v83
    %v1062 = vunpack.c.l.b16 %v84
    %v1063 = vunpack.c.h.b16 %v84
    %v1064 = vunpack.c.l.b16 %v85
    %v1065 = vunpack.c.h.b16 %v85
    %v1066 = vunpack.c.l.b16 %v86
    %v1067 = vunpack.c.h.b16 %v86
    %v1068 = vunpack.c.l.b16 %v87
    %v1069 = vunpack.c.h.b16 %v87
    %v1070 = vunpack.c.l.b16 %v88
    %v1071 = vunpack.c.h.b16 %v88
    %v1072 = vunpack.c.l.b16 %v89
    %v1073 = vunpack.c.h.b16 %v89
    %v1074 = vunpack.c.l.b16 %v90
    %v1075 = vunpack.c.h.b16 %v90
    %v1076 = vunpack.c.l.b16 %v91
    %v1077 = vunpack.c.h.b16 %v91
    %v1078 = vunpack.c.l.b16 %v92
    %v1079 = vunpack.c.h.b16 %v92
    %v1080 = vunpack.c.l.b16 %v93
    %v1081 = vunpack.c.h.b16 %v93
    %v1082 = vunpack.c.l.b16 %v94
    %v1083 = vunpack.c.h.b16 %v94
    %v1084 = vunpack.c.l.b16 %v95
    %v1085 = vunpack.c.h.b16 %v95
    %v1086 = vunpack.c.l.b16 %v96
    %v1087 = vunpack.c.h.b16 %v96
    %v1088 = vunpack.c.l.b16 %v97
    %v1089 = vunpack.c.h.b16 %v97
    %v1090 = vunpack.c.l.b16 %v98
    %v1091 = vunpack.c.h.b16 %v98
    %v1092 = vunpack.c.l.b16 %v99
    %v1093 = vunpack.c.h.b16 %v99
    %v1094 = vunpack.c.l.b16 %v100
    %v1095 = vunpack.c.h.b16 %v100
    %v1096 = vunpack.c.l.b16 %v101
    %v1097 = vunpack.c.h.b16 %v101
    %v1098 = vunpack.c.l.b16 %v102
    %v1099 = vunpack.c.h.b16 %v102
    %v1100 = vunpack.c.l.b16 %v103
    %v1101 = vunpack.c.h.b16 %v103
    %v1102 = vunpack.c.l.b16 %v104
    %v1103 = vunpack.c.h.b16 %v104
    %v1104 = vunpack.c.l.b16 %v105
    %v1105 = vunpack.c.h.b16 %v105
    %v1106 = vunpack.c.l.b16 %v106
    %v1107 = vunpack.c.h.b16 %v106
    %v1108 = vunpack.c.l.b16 %v107
    %v1109 = vunpack.c.h.b16 %v107
    %v1110 = vunpack.c.l.b16 %v108
    %v1111 = vunpack.c.h.b16 %v108
    %v1112 = vunpack.c.l.b16 %v109
    %v1113 = vunpack.c.h.b16 %v109
    %v1114 = vunpack.c.l.b16 %v110
    %v1115 = vunpack.c.h.b16 %v110
    %v1116 = vunpack.c.l.b16 %v111
    %v1117 = vunpack.c.h.b16 %v111
    %v1118 = vunpack.c.l.b16 %v112
    %v1119 = vunpack.c.h.b16 %v112
    %v1120 = vunpack.c.l.b16 %v113
    %v1121 = vunpack.c.h.b16 %v113
    %v1122 = vunpack.c.l.b16 %v114
    %v1123 = vunpack.c.h.b16 %v114
    %v1124 = vunpack.c.l.b16 %v115
    %v1125 = vunpack.c.h.b16 %v115
    %v1126 = vunpack.c.l.b16 %v116
    %v1127 = vunpack.c.h.b16 %v116
    %v1128 = vunpack.c.l.b16 %v117
    %v1129 = vunpack.c.h.b16 %v117
    %v1130 = vunpack.c.l.b16 %v118
    %v1131 = vunpack.c.h.b16 %v118
    %v1132 = vunpack.c.l.b16 %v119
    %v1133 = vunpack.c.h.b16 %v119
    %v1134 = vunpack.c.l.b16 %v120
    %v1135 = vunpack.c.h.b16 %v120
    %v1136 = vunpack.c.l.b16 %v121
    %v1137 = vunpack.c.h.b16 %v121
    %v1138 = vunpack.c.l.b16 %v122
    %v1139 = vunpack.c.h.b16 %v122
    %v1140 = vunpack.c.l.b16 %v123
    %v1141 = vunpack.c.h.b16 %v123
    %v1142 = vunpack.c.l.b16 %v124
    %v1143 = vunpack.c.h.b16 %v124
    %v1144 = vunpack.c.l.b16 %v125
    %v1145 = vunpack.c.h.b16 %v125
    %v1146 = vunpack.c.l.b16 %v126
    %v1147 = vunpack.c.h.b16 %v126
    %v1148 = vunpack.c.l.b16 %v127
    %v1149 = vunpack.c.h.b16 %v127
    %v1150 = vunpack.c.l.b16 %v128
    %v1151 = vunpack.c.h.b16 %v128
    %v1152 = vunpack.c.l.b16 %v129
    %v1153 = vunpack.c.h.b16 %v129
    %v1154 = vunpack.c.l.b16 %v130
    %v1155 = vunpack.c.h.b16 %v130
    %v1156 = vunpack.c.l.b16 %v131
    %v1157 = vunpack.c.h.b16 %v131
    %v1158 = vunpack.c.l.b16 %v132
    %v1159 = vunpack.c.h.b16 %v132
    %v1160 = vunpack.c.l.b16 %v133
    %v1161 = vunpack.c.h.b16 %v133
    %v1162 = vunpack.c.l.b16 %v134
    %v1163 = vunpack.c.h.b16 %v134
    %v1164 = vunpack.c.l.b16 %v135
    %v1165 = vunpack.c.h.b16 %v135
    %v1166 = vunpack.c.l.b16 %v136
    %v1167 = vunpack.c.h.b16 %v136
    %v1168 = vunpack.c.l.b16 %v137
    %v1169 = vunpack.c.h.b16 %v137
    %v1170 = vunpack.c.l.b16 %v138
    %v1171 = vunpack.c.h.b16 %v138
    %v1172 = vunpack.c.l.b16 %v139
    %v1173 = vunpack.c.h.b16 %v139
    %v1174 = vunpack.c.l.b16 %v140
    %v1175 = vunpack.c.h.b16 %v140
    %v1176 = vunpack.c.l.b16 %v141
    %v1177 = vunpack.c.h.b16 %v141
    %v1178 = vunpack.c.l.b16 %v142
    %v1179 = vunpack.c.h.b16 %v142
    %v1180 = vunpack.c.l.b16 %v143
    %v1181 = vunpack.c.h.b16 %v143
    %v1182 = vunpack.c.l.b16 %v144
    %v1183 = vunpack.c.h.b16 %v144
    %v1184 = vunpack.c.l.b16 %v145
    %v1185 = vunpack.c.h.b16 %v145
    %v1186 = vunpack.c.l.b16 %v146
    %v1187 = vunpack.c.h.b16 %v146
    %v1188 = vunpack.c.l.b16 %v147
    %v1189 = vunpack.c.h.b16 %v147
    %v1190 = vunpack.c.l.b16 %v148
    %v1191 = vunpack.c.h.b16 %v148
    %v1192 = vunpack.c.l.b16 %v149
    %v1193 = vunpack.c.h.b16 %v149
    %v1194 = vunpack.c.l.b16 %v150
    %v1195 = vunpack.c.h.b16 %v150
    %v1196 = vunpack.c.l.b16 %v151
    %v1197 = vunpack.c.h.b16 %v151
    %v1198 = vunpack.c.l.b16 %v152
    %v1199 = vunpack.c.h.b16 %v152
    %v1200 = vunpack.c.l.b16 %v153
    %v1201 = vunpack.c.h.b16 %v153
    %v1202 = vunpack.c.l.b16 %v154
    %v1203 = vunpack.c.h.b16 %v154
    %v1204 = vunpack.c.l.b16 %v155
    %v1205 = vunpack.c.h.b16 %v155
    %v1206 = vunpack.c.l.b16 %v156
    %v1207 = vunpack.c.h.b16 %v156
    %v1208 = vunpack.c.l.b16 %v157
    %v1209 = vunpack.c.h.b16 %v157
    %v1210 = vunpack.c.l.b16 %v158
    %v1211 = vunpack.c.h.b16 %v158
    %v1212 = vunpack.c.l.b16 %v159
    %v1213 = vunpack.c.h.b16 %v159
    %v1214 = vunpack.c.l.b16 %v160
    %v1215 = vunpack.c.h.b16 %v160
    %v1216 = vunpack.c.l.b16 %v161
    %v1217 = vunpack.c.h.b16 %v161
    %v1218 = vunpack.c.l.b16 %v162
    %v1219 = vunpack.c.h.b16 %v162
    %v1220 = vunpack.c.l.b16 %v163
    %v1221 = vunpack.c.h.b16 %v163
    %v1222 = vunpack.c.l.b16 %v164
    %v1223 = vunpack.c.h.b16 %v164
    %v1224 = vunpack.c.l.b16 %v165
    %v1225 = vunpack.c.h.b16 %v165
    %v1226 = vunpack.c.l.b16 %v166
    %v1227 = vunpack.c.h.b16 %v166
    %v1228 = vunpack.c.l.b16 %v167
    %v1229 = vunpack.c.h.b16 %v167
    %v1230 = vunpack.c.l.b16 %v168
    %v1231 = vunpack.c.h.b16 %v168
    %v1232 = vunpack.c.l.b16 %v169
    %v1233 = vunpack.c.h.b16 %v169
    %v1234 = vunpack.c.l.b16 %v170
    %v1235 = vunpack.c.h.b16 %v170
    %v1236 = vunpack.c.l.b16 %v171
    %v1237 = vunpack.c.h.b16 %v171
    %v1238 = vunpack.c.l.b16 %v172
    %v1239 = vunpack.c.h.b16 %v172
    %v1240 = vunpack.c.l.b16 %v173
    %v1241 = vunpack.c.h.b16 %v173
    %v1242 = vunpack.c.l.b16 %v174
    %v1243 = vunpack.c.h.b16 %v174
    %v1244 = vunpack.c.l.b16 %v175
    %v1245 = vunpack.c.h.b16 %v175
    %v1246 = vunpack.c.l.b16 %v176
    %v1247 = vunpack.c.h.b16 %v176
    %v1248 = vunpack.c.l.b16 %v177
    %v1249 = vunpack.c.h.b16 %v177
    %v1250 = vunpack.c.l.b16 %v178
    %v1251 = vunpack.c.h.b16 %v178
    %v1252 = vunpack.c.l.b16 %v179
    %v1253 = vunpack.c.h.b16 %v179
    %v1254 = vunpack.c.l.b16 %v180
    %v1255 = vunpack.c.h.b16 %v180
    %v1256 = vunpack.c.l.b16 %v181
    %v1257 = vunpack.c.h.b16 %v181
    %v1258 = vunpack.c.l.b16 %v182
    %v1259 = vunpack.c.h.b16 %v182
    %v1260 = vunpack.c.l.b16 %v183
    %v1261 = vunpack.c.h.b16 %v183
    %v1262 = vunpack.c.l.b16 %v184
    %v1263 = vunpack.c.h.b16 %v184
    %v1264 = vunpack.c.l.b16 %v185
    %v1265 = vunpack.c.h.b16 %v185
    %v1266 = vunpack.c.l.b16 %v186
    %v1267 = vunpack.c.h.b16 %v186
    %v1268 = vunpack.c.l.b16 %v187
    %v1269 = vunpack.c.h.b16 %v187
    %v1270 = vunpack.c.l.b16 %v188
    %v1271 = vunpack.c.h.b16 %v188
    %v1272 = vunpack.c.l.b16 %v189
    %v1273 = vunpack.c.h.b16 %v189
    %v1274 = vunpack.c.l.b16 %v190
    %v1275 = vunpack.c.h.b16 %v190
    %v1276 = vunpack.c.l.b16 %v191
    %v1277 = vunpack.c.h.b16 %v191
    %v1278 = vunpack.c.l.b16 %v192
    %v1279 = vunpack.c.h.b16 %v192
    %v1280 = vunpack.c.l.b16 %v193
    %v1281 = vunpack.c.h.b16 %v193
    %v1282 = vunpack.c.l.b16 %v194
    %v1283 = vunpack.c.h.b16 %v194
    %v1284 = vunpack.c.l.b16 %v195
    %v1285 = vunpack.c.h.b16 %v195
    %v1286 = vunpack.c.l.b16 %v196
    %v1287 = vunpack.c.h.b16 %v196
    %v1288 = vunpack.c.l.b16 %v197
    %v1289 = vunpack.c.h.b16 %v197
    %v1290 = vunpack.c.l.b16 %v198
    %v1291 = vunpack.c.h.b16 %v198
    %v1292 = vunpack.c.l.b16 %v199
    %v1293 = vunpack.c.h.b16 %v199
    %v1294 = vunpack.c.l.b16 %v200
    %v1295 = vunpack.c.h.b16 %v200
    %v1296 = vunpack.c.l.b16 %v201
    %v1297 = vunpack.c.h.b16 %v201
    %v1298 = vunpack.c.l.b16 %v202
    %v1299 = vunpack.c.h.b16 %v202
    %v1300 = vunpack.c.l.b16 %v203
    %v1301 = vunpack.c.h.b16 %v203
    %v1302 = vunpack.c.l.b16 %v204
    %v1303 = vunpack.c.h.b16 %v204
    %v1304 = vunpack.c.l.b16 %v205
    %v1305 = vunpack.c.h.b16 %v205
    %v1306 = vunpack.c.l.b16 %v206
    %v1307 = vunpack.c.h.b16 %v206
    %v1308 = vunpack.c.l.b16 %v207
    %v1309 = vunpack.c.h.b16 %v207
    %v1310 = vunpack.c.l.b16 %v208
    %v1311 = vunpack.c.h.b16 %v208
    %v1312 = vunpack.c.l.b16 %v209
    %v1313 = vunpack.c.h.b16 %v209
    %v1314 = vunpack.c.l.b16 %v210
    %v1315 = vunpack.c.h.b16 %v210
    %v1316 = vunpack.c.l.b16 %v211
    %v1317 = vunpack.c.h.b16 %v211
    %v1318 = vunpack.c.l.b16 %v212
    %v1319 = vunpack.c.h.b16 %v212
    %v1320 = vunpack.c.l.b16 %v213
    %v1321 = vunpack.c.h.b16 %v213
    %v1322 = vunpack.c.l.b16 %v214
    %v1323 = vunpack.c.h.b16 %v214
    %v1324 = vunpack.c.l.b16 %v215
    %v1325 = vunpack.c.h.b16 %v215
    %v1326 = vunpack.c.l.b16 %v216
    %v1327 = vunpack.c.h.b16 %v216
    %v1328 = vunpack.c.l.b16 %v217
    %v1329 = vunpack.c.h.b16 %v217
    %v1330 = vunpack.c.l.b16 %v218
    %v1331 = vunpack.c.h.b16 %v218
    %v1332 = vunpack.c.l.b16 %v219
    %v1333 = vunpack.c.h.b16 %v219
    %v1334 = vunpack.c.l.b16 %v220
    %v1335 = vunpack.c.h.b16 %v220
    %v1336 = vunpack.c.l.b16 %v221
    %v1337 = vunpack.c.h.b16 %v221
    %v1338 = vunpack.c.l.b16 %v222
    %v1339 = vunpack.c.h.b16 %v222
    %v1340 = vunpack.c.l.b16 %v223
    %v1341 = vunpack.c.h.b16 %v223
    %v1342 = vunpack.c.l.b16 %v224
    %v1343 = vunpack.c.h.b16 %v224
    %v1344 = vunpack.c.l.b16 %v225
    %v1345 = vunpack.c.h.b16 %v225
    %v1346 = vunpack.c.l.b16 %v226
    %v1347 = vunpack.c.h.b16 %v226
    %v1348 = vunpack.c.l.b16 %v227
    %v1349 = vunpack.c.h.b16 %v227
    %v1350 = vunpack.c.l.b16 %v228
    %v1351 = vunpack.c.h.b16 %v228
    %v1352 = vunpack.c.l.b16 %v229
    %v1353 = vunpack.c.h.b16 %v229
    %v1354 = vunpack.c.l.b16 %v230
    %v1355 = vunpack.c.h.b16 %v230
    %v1356 = vunpack.c.l.b16 %v231
    %v1357 = vunpack.c.h.b16 %v231
    %v1358 = vunpack.c.l.b16 %v232
    %v1359 = vunpack.c.h.b16 %v232
    %v1360 = vunpack.c.l.b16 %v233
    %v1361 = vunpack.c.h.b16 %v233
    %v1362 = vunpack.c.l.b16 %v234
    %v1363 = vunpack.c.h.b16 %v234
    %v1364 = vunpack.c.l.b16 %v235
    %v1365 = vunpack.c.h.b16 %v235
    %v1366 = vunpack.c.l.b16 %v236
    %v1367 = vunpack.c.h.b16 %v236
    %v1368 = vunpack.c.l.b16 %v237
    %v1369 = vunpack.c.h.b16 %v237
    %v1370 = vunpack.c.l.b16 %v238
    %v1371 = vunpack.c.h.b16 %v238
    %v1372 = vunpack.c.l.b16 %v239
    %v1373 = vunpack.c.h.b16 %v239
    %v1374 = vunpack.c.l.b16 %v240
    %v1375 = vunpack.c.h.b16 %v240
    %v1376 = vunpack.c.l.b16 %v241
    %v1377 = vunpack.c.h.b16 %v241
    %v1378 = vunpack.c.l.b16 %v242
    %v1379 = vunpack.c.h.b16 %v242
    %v1380 = vunpack.c.l.b16 %v243
    %v1381 = vunpack.c.h.b16 %v243
    %v1382 = vunpack.c.l.b16 %v244
    %v1383 = vunpack.c.h.b16 %v244
    %v1384 = vunpack.c.l.b16 %v245
    %v1385 = vunpack.c.h.b16 %v245
    %v1386 = vunpack.c.l.b16 %v246
    %v1387 = vunpack.c.h.b16 %v246
    %v1388 = vunpack.c.l.b16 %v247
    %v1389 = vunpack.c.h.b16 %v247
    %v1390 = vunpack.c.l.b16 %v248
    %v1391 = vunpack.c.h.b16 %v248
    %v1392 = vunpack.c.l.b16 %v249
    %v1393 = vunpack.c.h.b16 %v249
    %v1394 = vunpack.c.l.b16 %v250
    %v1395 = vunpack.c.h.b16 %v250
    %v1396 = vunpack.c.l.b16 %v251
    %v1397 = vunpack.c.h.b16 %v251
    %v1398 = vunpack.c.l.b16 %v252
    %v1399 = vunpack.c.h.b16 %v252
    %v1400 = vunpack.c.l.b16 %v253
    %v1401 = vunpack.c.h.b16 %v253
    %v1402 = vunpack.c.l.b16 %v254
    %v1403 = vunpack.c.h.b16 %v254
    %v1404 = vunpack.c.l.b16 %v255
    %v1405 = vunpack.c.h.b16 %v255
    %v1406 = vunpack.c.l.b16 %v256
    %v1407 = vunpack.c.h.b16 %v256
    %v1408 = vunpack.c.l.b16 %v257
    %v1409 = vunpack.c.h.b16 %v257
    %v1410 = vunpack.c.l.b16 %v258
    %v1411 = vunpack.c.h.b16 %v258
    %v1412 = vunpack.c.l.b16 %v259
    %v1413 = vunpack.c.h.b16 %v259
    %v1414 = vunpack.c.l.b16 %v260
    %v1415 = vunpack.c.h.b16 %v260
    %v1416 = vunpack.c.l.b16 %v261
    %v1417 = vunpack.c.h.b16 %v261
    %v1418 = vunpack.c.l.b16 %v262
    %v1419 = vunpack.c.h.b16 %v262
    %v1420 = vunpack.c.l.b16 %v263
    %v1421 = vunpack.c.h.b16 %v263
    %v1422 = vunpack.c.l.b16 %v264
    %v1423 = vunpack.c.h.b16 %v264
    %v1424 = vunpack.c.l.b16 %v265
    %v1425 = vunpack.c.h.b16 %v265
    %v1426 = vunpack.c.l.b16 %v266
    %v1427 = vunpack.c.h.b16 %v266
    %v1428 = vunpack.c.l.b16 %v267
    %v1429 = vunpack.c.h.b16 %v267
    %v1430 = vunpack.c.l.b16 %v268
    %v1431 = vunpack.c.h.b16 %v268
    %v1432 = vunpack.c.l.b16 %v269
    %v1433 = vunpack.c.h.b16 %v269
    %v1434 = vunpack.c.l.b16 %v270
    %v1435 = vunpack.c.h.b16 %v270
    %v1436 = vunpack.c.l.b16 %v271
    %v1437 = vunpack.c.h.b16 %v271
    %v1438 = vunpack.c.l.b16 %v272
    %v1439 = vunpack.c.h.b16 %v272
    %v1440 = vunpack.c.l.b16 %v273
    %v1441 = vunpack.c.h.b16 %v273
    %v1442 = vunpack.c.l.b16 %v274
    %v1443 = vunpack.c.h.b16 %v274
    %v1444 = vunpack.c.l.b16 %v275
    %v1445 = vunpack.c.h.b16 %v275
    %v1446 = vunpack.c.l.b16 %v276
    %v1447 = vunpack.c.h.b16 %v276
    %v1448 = vunpack.c.l.b16 %v277
    %v1449 = vunpack.c.h.b16 %v277
    %v1450 = vunpack.c.l.b16 %v278
    %v1451 = vunpack.c.h.b16 %v278
    %v1452 = vunpack.c.l.b16 %v279
    %v1453 = vunpack.c.h.b16 %v279
    %v1454 = vunpack.c.l.b16 %v280
    %v1455 = vunpack.c.h.b16 %v280
    %v1456 = vunpack.c.l.b16 %v281
    %v1457 = vunpack.c.h.b16 %v281
    %v1458 = vunpack.c.l.b16 %v282
    %v1459 = vunpack.c.h.b16 %v282
    %v1460 = vunpack.c.l.b16 %v283
    %v1461 = vunpack.c.h.b16 %v283
    %v1462 = vunpack.c.l.b16 %v284
    %v1463 = vunpack.c.h.b16 %v284
    %v1464 = vunpack.c.l.b16 %v285
    %v1465 = vunpack.c.h.b16 %v285
    %v1466 = vunpack.c.l.b16 %v286
    %v1467 = vunpack.c.h.b16 %v286
    %v1468 = vunpack.c.l.b16 %v287
    %v1469 = vunpack.c.h.b16 %v287
    %v1470 = vunpack.c.l.b16 %v288
    %v1471 = vunpack.c.h.b16 %v288
    %v1472 = vunpack.c.l.b16 %v289
    %v1473 = vunpack.c.h.b16 %v289
    %v1474 = vunpack.c.l.b16 %v290
    %v1475 = vunpack.c.h.b16 %v290
    %v1476 = vunpack.c.l.b16 %v291
    %v1477 = vunpack.c.h.b16 %v291
    %v1478 = vunpack.c.l.b16 %v292
    %v1479 = vunpack.c.h.b16 %v292
    %v1480 = vunpack.c.l.b16 %v293
    %v1481 = vunpack.c.h.b16 %v293
    %v1482 = vunpack.c.l.b16 %v294
    %v1483 = vunpack.c.h.b16 %v294
    %v1484 = vunpack.c.l.b16 %v295
    %v1485 = vunpack.c.h.b16 %v295
    %v1486 = vunpack.c.l.b16 %v296
    %v1487 = vunpack.c.h.b16 %v296
    %v1488 = vunpack.c.l.b16 %v297
    %v1489 = vunpack.c.h.b16 %v297
    %v1490 = vunpack.c.l.b16 %v298
    %v1491 = vunpack.c.h.b16 %v298
    %v1492 = vunpack.c.l.b16 %v299
    %v1493 = vunpack.c.h.b16 %v299
    %v1494 = vunpack.c.l.b16 %v300
    %v1495 = vunpack.c.h.b16 %v300
    %v1496 = vunpack.c.l.b16 %v301
    %v1497 = vunpack.c.h.b16 %v301
    %v1498 = vunpack.c.l.b16 %v302
    %v1499 = vunpack.c.h.b16 %v302
    %v1500 = vunpack.c.l.b16 %v303
    %v1501 = vunpack.c.h.b16 %v303
    %v1502 = vunpack.c.l.b16 %v304
    %v1503 = vunpack.c.h.b16 %v304
    %v1504 = vunpack.c.l.b16 %v305
    %v1505 = vunpack.c.h.b16 %v305
    %v1506 = vunpack.c.l.b16 %v306
    %v1507 = vunpack.c.h.b16 %v306
    %v1508 = vunpack.c.l.b16 %v307
    %v1509 = vunpack.c.h.b16 %v307
    %v1510 = vunpack.c.l.b16 %v308
    %v1511 = vunpack.c.h.b16 %v308
    %v1512 = vunpack.c.l.b16 %v309
    %v1513 = vunpack.c.h.b16 %v309
    %v1514 = vunpack.c.l.b16 %v310
    %v1515 = vunpack.c.h.b16 %v310
    %v1516 = vunpack.c.l.b16 %v311
    %v1517 = vunpack.c.h.b16 %v311
    %v1518 = vunpack.c.l.b16 %v312
    %v1519 = vunpack.c.h.b16 %v312
    %v1520 = vunpack.c.l.b16 %v313
    %v1521 = vunpack.c.h.b16 %v313
    %v1522 = vunpack.c.l.b16 %v314
    %v1523 = vunpack.c.h.b16 %v314
    %v1524 = vunpack.c.l.b16 %v315
    %v1525 = vunpack.c.h.b16 %v315
    %v1526 = vunpack.c.l.b16 %v316
    %v1527 = vunpack.c.h.b16 %v316
    %v1528 = vunpack.c.l.b16 %v317
    %v1529 = vunpack.c.h.b16 %v317
    %v1530 = vunpack.c.l.b16 %v318
    %v1531 = vunpack.c.h.b16 %v318
    %v1532 = vunpack.c.l.b16 %v319
    %v1533 = vunpack.c.h.b16 %v319
    %v1534 = vunpack.c.l.b16 %v320
    %v1535 = vunpack.c.h.b16 %v320
    %v1536 = vunpack.c.l.b16 %v321
    %v1537 = vunpack.c.h.b16 %v321
    %v1538 = vunpack.c.l.b16 %v322
    %v1539 = vunpack.c.h.b16 %v322
    %v1540 = vunpack.c.l.b16 %v323
    %v1541 = vunpack.c.h.b16 %v323
    %v1542 = vunpack.c.l.b16 %v324
    %v1543 = vunpack.c.h.b16 %v324
    %v1544 = vunpack.c.l.b16 %v325
    %v1545 = vunpack.c.h.b16 %v325
    %v1546 = vunpack.c.l.b16 %v326
    %v1547 = vunpack.c.h.b16 %v326
    %v1548 = vunpack.c.l.b16 %v327
    %v1549 = vunpack.c.h.b16 %v327
    %v1550 = vunpack.c.l.b16 %v328
    %v1551 = vunpack.c.h.b16 %v328
    %v1552 = vunpack.c.l.b16 %v329
    %v1553 = vunpack.c.h.b16 %v329
    %v1554 = vunpack.c.l.b16 %v330
    %v1555 = vunpack.c.h.b16 %v330
    %v1556 = vunpack.c.l.b16 %v331
    %v1557 = vunpack.c.h.b16 %v331
    %v1558 = vunpack.c.l.b16 %v332
    %v1559 = vunpack.c.h.b16 %v332
    %v1560 = vunpack.c.l.b16 %v333
    %v1561 = vunpack.c.h.b16 %v333
    %v1562 = vunpack.c.l.b16 %v334
    %v1563 = vunpack.c.h.b16 %v334
    %v1564 = vunpack.c.l.b16 %v335
    %v1565 = vunpack.c.h.b16 %v335
    %v1566 = vunpack.c.l.b16 %v336
    %v1567 = vunpack.c.h.b16 %v336
    %v1568 = vunpack.c.l.b16 %v337
    %v1569 = vunpack.c.h.b16 %v337
    %v1570 = vunpack.c.l.b16 %v338
    %v1571 = vunpack.c.h.b16 %v338
    %v1572 = vunpack.c.l.b16 %v339
    %v1573 = vunpack.c.h.b16 %v339
    %v1574 = vunpack.c.l.b16 %v340
    %v1575 = vunpack.c.h.b16 %v340
    %v1576 = vunpack.c.l.b16 %v341
    %v1577 = vunpack.c.h.b16 %v341
    %v1578 = vunpack.c.l.b16 %v342
    %v1579 = vunpack.c.h.b16 %v342
    %v1580 = vunpack.c.l.b16 %v343
    %v1581 = vunpack.c.h.b16 %v343
    %v1582 = vunpack.c.l.b16 %v344
    %v1583 = vunpack.c.h.b16 %v344
    %v1584 = vunpack.c.l.b16 %v345
    %v1585 = vunpack.c.h.b16 %v345
    %v1586 = vunpack.c.l.b16 %v346
    %v1587 = vunpack.c.h.b16 %v346
    %v1588 = vunpack.c.l.b16 %v347
    %v1589 = vunpack.c.h.b16 %v347
    %v1590 = vunpack.c.l.b16 %v348
    %v1591 = vunpack.c.h.b16 %v348
    %v1592 = vunpack.c.l.b16 %v349
    %v1593 = vunpack.c.h.b16 %v349
    %v1594 = vunpack.c.l.b16 %v350
    %v1595 = vunpack.c.h.b16 %v350
    %v1596 = vunpack.c.l.b16 %v351
    %v1597 = vunpack.c.h.b16 %v351
    %v1598 = vunpack.c.l.b16 %v352
    %v1599 = vunpack.c.h.b16 %v352
    %v1600 = vunpack.c.l.b16 %v353
    %v1601 = vunpack.c.h.b16 %v353
    %v1602 = vunpack.c.l.b16 %v354
    %v1603 = vunpack.c.h.b16 %v354
    %v1604 = vunpack.c.l.b16 %v355
    %v1605 = vunpack.c.h.b16 %v355
    %v1606 = vunpack.c.l.b16 %v356
    %v1607 = vunpack.c.h.b16 %v356
    %v1608 = vunpack.c.l.b16 %v357
    %v1609 = vunpack.c.h.b16 %v357
    %v1610 = vunpack.c.l.b16 %v358
    %v1611 = vunpack.c.h.b16 %v358
    %v1612 = vunpack.c.l.b16 %v359
    %v1613 = vunpack.c.h.b16 %v359
    %v1614 = vunpack.c.l.b16 %v360
    %v1615 = vunpack.c.h.b16 %v360
    %v1616 = vunpack.c.l.b16 %v361
    %v1617 = vunpack.c.h.b16 %v361
    %v1618 = vunpack.c.l.b16 %v362
    %v1619 = vunpack.c.h.b16 %v362
    %v1620 = vunpack.c.l.b16 %v363
    %v1621 = vunpack.c.h.b16 %v363
    %v1622 = vunpack.c.l.b16 %v364
    %v1623 = vunpack.c.h.b16 %v364
    %v1624 = vunpack.c.l.b16 %v365
    %v1625 = vunpack.c.h.b16 %v365
    %v1626 = vunpack.c.l.b16 %v366
    %v1627 = vunpack.c.h.b16 %v366
    %v1628 = vunpack.c.l.b16 %v367
    %v1629 = vunpack.c.h.b16 %v367
    %v1630 = vunpack.c.l.b16 %v368
    %v1631 = vunpack.c.h.b16 %v368
    %v1632 = vunpack.c.l.b16 %v369
    %v1633 = vunpack.c.h.b16 %v369
    %v1634 = vunpack.c.l.b16 %v370
    %v1635 = vunpack.c.h.b16 %v370
    %v1636 = vunpack.c.l.b16 %v371
    %v1637 = vunpack.c.h.b16 %v371
    %v1638 = vunpack.c.l.b16 %v372
    %v1639 = vunpack.c.h.b16 %v372
    %v1640 = vunpack.c.l.b16 %v373
    %v1641 = vunpack.c.h.b16 %v373
    %v1642 = vunpack.c.l.b16 %v374
    %v1643 = vunpack.c.h.b16 %v374
    %v1644 = vunpack.c.l.b16 %v375
    %v1645 = vunpack.c.h.b16 %v375
    %v1646 = vunpack.c.l.b16 %v376
    %v1647 = vunpack.c.h.b16 %v376
    %v1648 = vunpack.c.l.b16 %v377
    %v1649 = vunpack.c.h.b16 %v377
    %v1650 = vunpack.c.l.b16 %v378
    %v1651 = vunpack.c.h.b16 %v378
    %v1652 = vunpack.c.l.b16 %v379
    %v1653 = vunpack.c.h.b16 %v379
    %v1654 = vunpack.c.l.b16 %v380
    %v1655 = vunpack.c.h.b16 %v380
    %v1656 = vunpack.c.l.b16 %v381
    %v1657 = vunpack.c.h.b16 %v381
    %v1658 = vunpack.c.l.b16 %v382
    %v1659 = vunpack.c.h.b16 %v382
    %v1660 = vunpack.c.l.b16 %v383
    %v1661 = vunpack.c.h.b16 %v383
    %v1662 = vunpack.c.l.b16 %v384
    %v1663 = vunpack.c.h.b16 %v384
    %v1664 = vunpack.c.l.b16 %v385
    %v1665 = vunpack.c.h.b16 %v385
    %v1666 = vunpack.c.l.b16 %v386
    %v1667 = vunpack.c.h.b16 %v386
    %v1668 = vunpack.c.l.b16 %v387
    %v1669 = vunpack.c.h.b16 %v387
    %v1670 = vunpack.c.l.b16 %v388
    %v1671 = vunpack.c.h.b16 %v388
    %v1672 = vunpack.c.l.b16 %v389
    %v1673 = vunpack.c.h.b16 %v389
    %v1674 = vunpack.c.l.b16 %v390
    %v1675 = vunpack.c.h.b16 %v390
    %v1676 = vunpack.c.l.b16 %v391
    %v1677 = vunpack.c.h.b16 %v391
    %v1678 = vunpack.c.l.b16 %v392
    %v1679 = vunpack.c.h.b16 %v392
    %v1680 = vunpack.c.l.b16 %v393
    %v1681 = vunpack.c.h.b16 %v393
    %v1682 = vunpack.c.l.b16 %v394
    %v1683 = vunpack.c.h.b16 %v394
    %v1684 = vunpack.c.l.b16 %v395
    %v1685 = vunpack.c.h.b16 %v395
    %v1686 = vunpack.c.l.b16 %v396
    %v1687 = vunpack.c.h.b16 %v396
    %v1688 = vunpack.c.l.b16 %v397
    %v1689 = vunpack.c.h.b16 %v397
    %v1690 = vunpack.c.l.b16 %v398
    %v1691 = vunpack.c.h.b16 %v398
    %v1692 = vunpack.c.l.b16 %v399
    %v1693 = vunpack.c.h.b16 %v399
    %v1694 = vunpack.c.l.b16 %v400
    %v1695 = vunpack.c.h.b16 %v400
    %v1696 = vunpack.c.l.b16 %v401
    %v1697 = vunpack.c.h.b16 %v401
    %v1698 = vunpack.c.l.b16 %v402
    %v1699 = vunpack.c.h.b16 %v402
    %v1700 = vunpack.c.l.b16 %v403
    %v1701 = vunpack.c.h.b16 %v403
    %v1702 = vunpack.c.l.b16 %v404
    %v1703 = vunpack.c.h.b16 %v404
    %v1704 = vunpack.c.l.b16 %v405
    %v1705 = vunpack.c.h.b16 %v405
    %v1706 = vunpack.c.l.b16 %v406
    %v1707 = vunpack.c.h.b16 %v406
    %v1708 = vunpack.c.l.b16 %v407
    %v1709 = vunpack.c.h.b16 %v407
    %v1710 = vunpack.c.l.b16 %v408
    %v1711 = vunpack.c.h.b16 %v408
    %v1712 = vunpack.c.l.b16 %v409
    %v1713 = vunpack.c.h.b16 %v409
    %v1714 = vunpack.c.l.b16 %v410
    %v1715 = vunpack.c.h.b16 %v410
    %v1716 = vunpack.c.l.b16 %v411
    %v1717 = vunpack.c.h.b16 %v411
    %v1718 = vunpack.c.l.b16 %v412
    %v1719 = vunpack.c.h.b16 %v412
    %v1720 = vunpack.c.l.b16 %v413
    %v1721 = vunpack.c.h.b16 %v413
    %v1722 = vunpack.c.l.b16 %v414
    %v1723 = vunpack.c.h.b16 %v414
    %v1724 = vunpack.c.l.b16 %v415
    %v1725 = vunpack.c.h.b16 %v415
    %v1726 = vunpack.c.l.b16 %v416
    %v1727 = vunpack.c.h.b16 %v416
    %v1728 = vunpack.c.l.b16 %v417
    %v1729 = vunpack.c.h.b16 %v417
    %v1730 = vunpack.c.l.b16 %v418
    %v1731 = vunpack.c.h.b16 %v418
    %v1732 = vunpack.c.l.b16 %v419
    %v1733 = vunpack.c.h.b16 %v419
    %v1734 = vunpack.c.l.b16 %v420
    %v1735 = vunpack.c.h.b16 %v420
    %v1736 = vunpack.c.l.b16 %v421
    %v1737 = vunpack.c.h.b16 %v421
    %v1738 = vunpack.c.l.b16 %v422
    %v1739 = vunpack.c.h.b16 %v422
    %v1740 = vunpack.c.l.b16 %v423
    %v1741 = vunpack.c.h.b16 %v423
    %v1742 = vunpack.c.l.b16 %v424
    %v1743 = vunpack.c.h.b16 %v424
    %v1744 = vunpack.c.l.b16 %v425
    %v1745 = vunpack.c.h.b16 %v425
    %v1746 = vunpack.c.l.b16 %v426
    %v1747 = vunpack.c.h.b16 %v426
    %v1748 = vunpack.c.l.b16 %v427
    %v1749 = vunpack.c.h.b16 %v427
    %v1750 = vunpack.c.l.b16 %v428
    %v1751 = vunpack.c.h.b16 %v428
    %v1752 = vunpack.c.l.b16 %v429
    %v1753 = vunpack.c.h.b16 %v429
    %v1754 = vunpack.c.l.b16 %v430
    %v1755 = vunpack.c.h.b16 %v430
    %v1756 = vunpack.c.l.b16 %v431
    %v1757 = vunpack.c.h.b16 %v431
    %v1758 = vunpack.c.l.b16 %v432
    %v1759 = vunpack.c.h.b16 %v432
    %v1760 = vunpack.c.l.b16 %v433
    %v1761 = vunpack.c.h.b16 %v433
    %v1762 = vunpack.c.l.b16 %v434
    %v1763 = vunpack.c.h.b16 %v434
    %v1764 = vunpack.c.l.b16 %v435
    %v1765 = vunpack.c.h.b16 %v435
    %v1766 = vunpack.c.l.b16 %v436
    %v1767 = vunpack.c.h.b16 %v436
    %v1768 = vunpack.c.l.b16 %v437
    %v1769 = vunpack.c.h.b16 %v437
    %v1770 = vunpack.c.l.b16 %v438
    %v1771 = vunpack.c.h.b16 %v438
    %v1772 = vunpack.c.l.b16 %v439
    %v1773 = vunpack.c.h.b16 %v439
    %v1774 = vunpack.c.l.b16 %v440
    %v1775 = vunpack.c.h.b16 %v440
    %v1776 = vunpack.c.l.b16 %v441
    %v1777 = vunpack.c.h.b16 %v441
    %v1778 = vunpack.c.l.b16 %v442
    %v1779 = vunpack.c.h.b16 %v442
    %v1780 = vunpack.c.l.b16 %v443
    %v1781 = vunpack.c.h.b16 %v443
    %v1782 = vunpack.c.l.b16 %v444
    %v1783 = vunpack.c.h.b16 %v444
    %v1784 = vunpack.c.l.b16 %v445
    %v1785 = vunpack.c.h.b16 %v445
    %v1786 = vunpack.c.l.b16 %v446
    %v1787 = vunpack.c.h.b16 %v446
    %v1788 = vunpack.c.l.b16 %v447
    %v1789 = vunpack.c.h.b16 %v447
    %v1790 = vunpack.c.l.b16 %v448
    %v1791 = vunpack.c.h.b16 %v448
    %v1792 = vunpack.c.l.b16 %v449
    %v1793 = vunpack.c.h.b16 %v449
    %v1794 = vunpack.c.l.b16 %v450
    %v1795 = vunpack.c.h.b16 %v450
    %v1796 = vunpack.c.l.b16 %v451
    %v1797 = vunpack.c.h.b16 %v451
    %v1798 = vunpack.c.l.b16 %v452
    %v1799 = vunpack.c.h.b16 %v452
    %v1800 = vunpack.c.l.b16 %v453
    %v1801 = vunpack.c.h.b16 %v453
    %v1802 = vunpack.c.l.b16 %v454
    %v1803 = vunpack.c.h.b16 %v454
    %v1804 = vunpack.c.l.b16 %v455
    %v1805 = vunpack.c.h.b16 %v455
    %v1806 = vunpack.c.l.b16 %v456
    %v1807 = vunpack.c.h.b16 %v456
    %v1808 = vunpack.c.l.b16 %v457
    %v1809 = vunpack.c.h.b16 %v457
    %v1810 = vunpack.c.l.b16 %v458
    %v1811 = vunpack.c.h.b16 %v458
    %v1812 = vunpack.c.l.b16 %v459
    %v1813 = vunpack.c.h.b16 %v459
    %v1814 = vunpack.c.l.b16 %v460
    %v1815 = vunpack.c.h.b16 %v460
    %v1816 = vunpack.c.l.b16 %v461
    %v1817 = vunpack.c.h.b16 %v461
    %v1818 = vunpack.c.l.b16 %v462
    %v1819 = vunpack.c.h.b16 %v462
    %v1820 = vunpack.c.l.b16 %v463
    %v1821 = vunpack.c.h.b16 %v463
    %v1822 = vunpack.c.l.b16 %v464
    %v1823 = vunpack.c.h.b16 %v464
    %v1824 = vunpack.c.l.b16 %v465
    %v1825 = vunpack.c.h.b16 %v465
    %v1826 = vunpack.c.l.b16 %v466
    %v1827 = vunpack.c.h.b16 %v466
    %v1828 = vunpack.c.l.b16 %v467
    %v1829 = vunpack.c.h.b16 %v467
    %v1830 = vunpack.c.l.b16 %v468
    %v1831 = vunpack.c.h.b16 %v468
    %v1832 = vunpack.c.l.b16 %v469
    %v1833 = vunpack.c.h.b16 %v469
    %v1834 = vunpack.c.l.b16 %v470
    %v1835 = vunpack.c.h.b16 %v470
    %v1836 = vunpack.c.l.b16 %v471
    %v1837 = vunpack.c.h.b16 %v471
    %v1838 = vunpack.c.l.b16 %v472
    %v1839 = vunpack.c.h.b16 %v472
    %v1840 = vunpack.c.l.b16 %v473
    %v1841 = vunpack.c.h.b16 %v473
    %v1842 = vunpack.c.l.b16 %v474
    %v1843 = vunpack.c.h.b16 %v474
    %v1844 = vunpack.c.l.b16 %v475
    %v1845 = vunpack.c.h.b16 %v475
    %v1846 = vunpack.c.l.b16 %v476
    %v1847 = vunpack.c.h.b16 %v476
    %v1848 = vunpack.c.l.b16 %v477
    %v1849 = vunpack.c.h.b16 %v477
    %v1850 = vunpack.c.l.b16 %v478
    %v1851 = vunpack.c.h.b16 %v478
    %v1852 = vunpack.c.l.b16 %v479
    %v1853 = vunpack.c.h.b16 %v479
    %v1854 = vunpack.c.l.b16 %v480
    %v1855 = vunpack.c.h.b16 %v480
    %v1856 = vunpack.c.l.b16 %v481
    %v1857 = vunpack.c.h.b16 %v481
    %v1858 = vunpack.c.l.b16 %v482
    %v1859 = vunpack.c.h.b16 %v482
    %v1860 = vunpack.c.l.b16 %v483
    %v1861 = vunpack.c.h.b16 %v483
    %v1862 = vunpack.c.l.b16 %v484
    %v1863 = vunpack.c.h.b16 %v484
    %v1864 = vunpack.c.l.b16 %v485
    %v1865 = vunpack.c.h.b16 %v485
    %v1866 = vunpack.c.l.b16 %v486
    %v1867 = vunpack.c.h.b16 %v486
    %v1868 = vunpack.c.l.b16 %v487
    %v1869 = vunpack.c.h.b16 %v487
    %v1870 = vunpack.c.l.b16 %v488
    %v1871 = vunpack.c.h.b16 %v488
    %v1872 = vunpack.c.l.b16 %v489
    %v1873 = vunpack.c.h.b16 %v489
    %v1874 = vunpack.c.l.b16 %v490
    %v1875 = vunpack.c.h.b16 %v490
    %v1876 = vunpack.c.l.b16 %v491
    %v1877 = vunpack.c.h.b16 %v491
    %v1878 = vunpack.c.l.b16 %v492
    %v1879 = vunpack.c.h.b16 %v492
    %v1880 = vunpack.c.l.b16 %v493
    %v1881 = vunpack.c.h.b16 %v493
    %v1882 = vunpack.c.l.b16 %v494
    %v1883 = vunpack.c.h.b16 %v494
    %v1884 = vunpack.c.l.b16 %v495
    %v1885 = vunpack.c.h.b16 %v495
    %v1886 = vunpack.c.l.b16 %v496
    %v1887 = vunpack.c.h.b16 %v496
    %v1888 = vunpack.c.l.b16 %v497
    %v1889 = vunpack.c.h.b16 %v497
    %v1890 = vunpack.c.l.b16 %v498
    %v1891 = vunpack.c.h.b16 %v498
    %v1892 = vunpack.c.l.b16 %v499
    %v1893 = vunpack.c.h.b16 %v499
    %v1894 = vunpack.c.l.b16 %v500
    %v1895 = vunpack.c.h.b16 %v500
    %v1896 = vunpack.c.l.b16 %v501
    %v1897 = vunpack.c.h.b16 %v501
    %v1898 = vunpack.c.l.b16 %v502
    %v1899 = vunpack.c.h.b16 %v502
    %v1900 = vunpack.c.l.b16 %v503
    %v1901 = vunpack.c.h.b16 %v503
    %v1902 = vunpack.c.l.b16 %v504
    %v1903 = vunpack.c.h.b16 %v504
    %v1904 = vunpack.c.l.b16 %v505
    %v1905 = vunpack.c.h.b16 %v505
    %v1906 = vunpack.c.l.b16 %v506
    %v1907 = vunpack.c.h.b16 %v506
    %v1908 = vunpack.c.l.b16 %v507
    %v1909 = vunpack.c.h.b16 %v507
    %v1910 = vunpack.c.l.b16 %v508
    %v1911 = vunpack.c.h.b16 %v508
    %v1912 = vunpack.c.l.b16 %v509
    %v1913 = vunpack.c.h.b16 %v509
    %v1914 = vunpack.c.l.b16 %v510
    %v1915 = vunpack.c.h.b16 %v510
    %v1916 = vunpack.c.l.b16 %v511
    %v1917 = vunpack.c.h.b16 %v511
    %v1918 = vunpack.c.l.b16 %v512
    %v1919 = vunpack.c.h.b16 %v512
    %v1920 = vunpack.c.l.b16 %v513
    %v1921 = vunpack.c.h.b16 %v513
    %v1922 = vunpack.c.l.b16 %v514
    %v1923 = vunpack.c.h.b16 %v514
    %v1924 = vunpack.c.l.b16 %v515
    %v1925 = vunpack.c.h.b16 %v515
    %v1926 = vunpack.c.l.b16 %v516
    %v1927 = vunpack.c.h.b16 %v516
    %v1928 = vunpack.c.l.b16 %v517
    %v1929 = vunpack.c.h.b16 %v517
    %v1930 = vunpack.c.l.b16 %v518
    %v1931 = vunpack.c.h.b16 %v518
    %v1932 = vunpack.c.l.b16 %v519
    %v1933 = vunpack.c.h.b16 %v519
    %v1934 = vunpack.c.l.b16 %v520
    %v1935 = vunpack.c.h.b16 %v520
    %v1936 = vunpack.c.l.b16 %v521
    %v1937 = vunpack.c.h.b16 %v521
    %v1938 = vunpack.c.l.b16 %v522
    %v1939 = vunpack.c.h.b16 %v522
    %v1940 = vunpack.c.l.b16 %v523
    %v1941 = vunpack.c.h.b16 %v523
    %v1942 = vunpack.c.l.b16 %v524
    %v1943 = vunpack.c.h.b16 %v524
    %v1944 = vunpack.c.l.b16 %v525
    %v1945 = vunpack.c.h.b16 %v525
    %v1946 = vunpack.c.l.b16 %v526
    %v1947 = vunpack.c.h.b16 %v526
    %v1948 = vunpack.c.l.b16 %v527
    %v1949 = vunpack.c.h.b16 %v527
    %v1950 = vpack.c.b16 %v1062, %v1054
    %v1951 = vpack.c.b16 %v1063, %v1055
    %v1952 = vpack.c.b16 %v1064, %v1056
    %v1953 = vpack.c.b16 %v1065, %v1057
    %v1954 = vpack.c.b16 %v1066, %v1058
    %v1955 = vpack.c.b16 %v1067, %v1059
    %v1956 = vpack.c.b16 %v1068, %v1060
    %v1957 = vpack.c.b16 %v1069, %v1061
    %v1958 = vpack.c.b16 %v1078, %v1070
    %v1959 = vpack.c.b16 %v1079, %v1071
    %v1960 = vpack.c.b16 %v1080, %v1072
    %v1961 = vpack.c.b16 %v1081, %v1073
    %v1962 = vpack.c.b16 %v1082, %v1074
    %v1963 = vpack.c.b16 %v1083, %v1075
    %v1964 = vpack.c.b16 %v1084, %v1076
    %v1965 = vpack.c.b16 %v1085, %v1077
    %v1966 = vpack.c.b16 %v1094, %v1086
    %v1967 = vpack.c.b16 %v1095, %v1087
    %v1968 = vpack.c.b16 %v1096, %v1088
    %v1969 = vpack.c.b16 %v1097, %v1089
    %v1970 = vpack.c.b16 %v1098, %v1090
    %v1971 = vpack.c.b16 %v1099, %v1091
    %v1972 = vpack.c.b16 %v1100, %v1092
    %v1973 = vpack.c.b16 %v1101, %v1093
    %v1974 = vpack.c.b16 %v1110, %v1102
    %v1975 = vpack.c.b16 %v1111, %v1103
    %v1976 = vpack.c.b16 %v1112, %v1104
    %v1977 = vpack.c.b16 %v1113, %v1105
    %v1978 = vpack.c.b16 %v1114, %v1106
    %v1979 = vpack.c.b16 %v1115, %v1107
    %v1980 = vpack.c.b16 %v1116, %v1108
    %v1981 = vpack.c.b16 %v1117, %v1109
    %v1982 = vpack.c.b16 %v1126, %v1118
    %v1983 = vpack.c.b16 %v1127, %v1119
    %v1984 = vpack.c.b16 %v1128, %v1120
    %v1985 = vpack.c.b16 %v1129, %v1121
    %v1986 = vpack.c.b16 %v1130, %v1122
    %v1987 = vpack.c.b16 %v1131, %v1123
    %v1988 = vpack.c.b16 %v1132, %v1124
    %v1989 = vpack.c.b16 %v1133, %v1125
    %v1990 = vpack.c.b16 %v1142, %v1134
    %v1991 = vpack.c.b16 %v1143, %v1135
    %v1992 = vpack.c.b16 %v1144, %v1136
    %v1993 = vpack.c.b16 %v1145, %v1137
    %v1994 = vpack.c.b16 %v1146, %v1138
    %v1995 = vpack.c.b16 %v1147, %v1139
    %v1996 = vpack.c.b16 %v1148, %v1140
    %v1997 = vpack.c.b16 %v1149, %v1141
    %v1998 = vpack.c.b16 %v1158, %v1150
    %v1999 = vpack.c.b16 %v1159, %v1151
    %v2000 = vpack.c.b16 %v1160, %v1152
    %v2001 = vpack.c.b16 %v1161, %v1153
    %v2002 = vpack.c.b16 %v1162, %v1154
    %v2003 = vpack.c.b16 %v1163, %v1155
    %v2004 = vpack.c.b16 %v1164, %v1156
    %v2005 = vpack.c.b16 %v1165, %v1157
    %v2006 = vpack.c.b16 %v1174, %v1166
    %v2007 = vpack.c.b16 %v1175, %v1167
    %v2008 = vpack.c.b16 %v1176, %v1168
    %v2009 = vpack.c.b16 %v1177, %v1169
    %v2010 = vpack.c.b16 %v1178, %v1170
    %v2011 = vpack.c.b16 %v1179, %v1171
    %v2012 = vpack.c.b16 %v1180, %v1172
    %v2013 = vpack.c.b16 %v1181, %v1173
    %v2014 = vpack.c.b16 %v1190, %v1182
    %v2015 = vpack.c.b16 %v1191, %v1183
    %v2016 = vpack.c.b16 %v1192, %v1184
    %v2017 = vpack.c.b16 %v1193, %v1185
    %v2018 = vpack.c.b16 %v1194, %v1186
    %v2019 = vpack.c.b16 %v1195, %v1187
    %v2020 = vpack.c.b16 %v1196, %v1188
    %v2021 = vpack.c.b16 %v1197, %v1189
    %v2022 = vpack.c.b16 %v1206, %v1198
    %v2023 = vpack.c.b16 %v1207, %v1199
    %v2024 = vpack.c.b16 %v1208, %v1200
    %v2025 = vpack.c.b16 %v1209, %v1201
    %v2026 = vpack.c.b16 %v1210, %v1202
    %v2027 = vpack.c.b16 %v1211, %v1203
    %v2028 = vpack.c.b16 %v1212, %v1204
    %v2029 = vpack.c.b16 %v1213, %v1205
    %v2030 = vpack.c.b16 %v1222, %v1214
    %v2031 = vpack.c.b16 %v1223, %v1215
    %v2032 = vpack.c.b16 %v1224, %v1216
    %v2033 = vpack.c.b16 %v1225, %v1217
    %v2034 = vpack.c.b16 %v1226, %v1218
    %v2035 = vpack.c.b16 %v1227, %v1219
    %v2036 = vpack.c.b16 %v1228, %v1220
    %v2037 = vpack.c.b16 %v1229, %v1221
    %v2038 = vpack.c.b16 %v1238, %v1230
    %v2039 = vpack.c.b16 %v1239, %v1231
    %v2040 = vpack.c.b16 %v1240, %v1232
    %v2041 = vpack.c.b16 %v1241, %v1233
    %v2042 = vpack.c.b16 %v1242, %v1234
    %v2043 = vpack.c.b16 %v1243, %v1235
    %v2044 = vpack.c.b16 %v1244, %v1236
    %v2045 = vpack.c.b16 %v1245, %v1237
    %v2046 = vpack.c.b16 %v1254, %v1246
    %v2047 = vpack.c.b16 %v1255, %v1247
    %v2048 = vpack.c.b16 %v1256, %v1248
    %v2049 = vpack.c.b16 %v1257, %v1249
    %v2050 = vpack.c.b16 %v1258, %v1250
    %v2051 = vpack.c.b16 %v1259, %v1251
    %v2052 = vpack.c.b16 %v1260, %v1252
    %v2053 = vpack.c.b16 %v1261, %v1253
    %v2054 = vpack.c.b16 %v1270, %v1262
    %v2055 = vpack.c.b16 %v1271, %v1263
    %v2056 = vpack.c.b16 %v1272, %v1264
    %v2057 = vpack.c.b16 %v1273, %v1265
    %v2058 = vpack.c.b16 %v1274, %v1266
    %v2059 = vpack.c.b16 %v1275, %v1267
    %v2060 = vpack.c.b16 %v1276, %v1268
    %v2061 = vpack.c.b16 %v1277, %v1269
    %v2062 = vpack.c.b16 %v1286, %v1278
    %v2063 = vpack.c.b16 %v1287, %v1279
    %v2064 = vpack.c.b16 %v1288, %v1280
    %v2065 = vpack.c.b16 %v1289, %v1281
    %v2066 = vpack.c.b16 %v1290, %v1282
    %v2067 = vpack.c.b16 %v1291, %v1283
    %v2068 = vpack.c.b16 %v1292, %v1284
    %v2069 = vpack.c.b16 %v1293, %v1285
    %v2070 = vpack.c.b16 %v1302, %v1294
    %v2071 = vpack.c.b16 %v1303, %v1295
    %v2072 = vpack.c.b16 %v1304, %v1296
    %v2073 = vpack.c.b16 %v1305, %v1297
    %v2074 = vpack.c.b16 %v1306, %v1298
    %v2075 = vpack.c.b16 %v1307, %v1299
    %v2076 = vpack.c.b16 %v1308, %v1300
    %v2077 = vpack.c.b16 %v1309, %v1301
    %v2078 = vpack.c.b16 %v1318, %v1310
    %v2079 = vpack.c.b16 %v1319, %v1311
    %v2080 = vpack.c.b16 %v1320, %v1312
    %v2081 = vpack.c.b16 %v1321, %v1313
    %v2082 = vpack.c.b16 %v1322, %v1314
    %v2083 = vpack.c.b16 %v1323, %v1315
    %v2084 = vpack.c.b16 %v1324, %v1316
    %v2085 = vpack.c.b16 %v1325, %v1317
    %v2086 = vpack.c.b16 %v1334, %v1326
    %v2087 = vpack.c.b16 %v1335, %v1327
    %v2088 = vpack.c.b16 %v1336, %v1328
    %v2089 = vpack.c.b16 %v1337, %v1329
    %v2090 = vpack.c.b16 %v1338, %v1330
    %v2091 = vpack.c.b16 %v1339, %v1331
    %v2092 = vpack.c.b16 %v1340, %v1332
    %v2093 = vpack.c.b16 %v1341, %v1333
    %v2094 = vpack.c.b16 %v1350, %v1342
    %v2095 = vpack.c.b16 %v1351, %v1343
    %v2096 = vpack.c.b16 %v1352, %v1344
    %v2097 = vpack.c.b16 %v1353, %v1345
    %v2098 = vpack.c.b16 %v1354, %v1346
    %v2099 = vpack.c.b16 %v1355, %v1347
    %v2100 = vpack.c.b16 %v1356, %v1348
    %v2101 = vpack.c.b16 %v1357, %v1349
    %v2102 = vpack.c.b16 %v1366, %v1358
    %v2103 = vpack.c.b16 %v1367, %v1359
    %v2104 = vpack.c.b16 %v1368, %v1360
    %v2105 = vpack.c.b16 %v1369, %v1361
    %v2106 = vpack.c.b16 %v1370, %v1362
    %v2107 = vpack.c.b16 %v1371, %v1363
    %v2108 = vpack.c.b16 %v1372, %v1364
    %v2109 = vpack.c.b16 %v1373, %v1365
    %v2110 = vpack.c.b16 %v1382, %v1374
    %v2111 = vpack.c.b16 %v1383, %v1375
    %v2112 = vpack.c.b16 %v1384, %v1376
    %v2113 = vpack.c.b16 %v1385, %v1377
    %v2114 = vpack.c.b16 %v1386, %v1378
    %v2115 = vpack.c.b16 %v1387, %v1379
    %v2116 = vpack.c.b16 %v1388, %v1380
    %v2117 = vpack.c.b16 %v1389, %v1381
    %v2118 = vpack.c.b16 %v1398, %v1390
    %v2119 = vpack.c.b16 %v1399, %v1391
    %v2120 = vpack.c.b16 %v1400, %v1392
    %v2121 = vpack.c.b16 %v1401, %v1393
    %v2122 = vpack.c.b16 %v1402, %v1394
    %v2123 = vpack.c.b16 %v1403, %v1395
    %v2124 = vpack.c.b16 %v1404, %v1396
    %v2125 = vpack.c.b16 %v1405, %v1397
    %v2126 = vpack.c.b16 %v1414, %v1406
    %v2127 = vpack.c.b16 %v1415, %v1407
    %v2128 = vpack.c.b16 %v1416, %v1408
    %v2129 = vpack.c.b16 %v1417, %v1409
    %v2130 = vpack.c.b16 %v1418, %v1410
    %v2131 = vpack.c.b16 %v1419, %v1411
    %v2132 = vpack.c.b16 %v1420, %v1412
    %v2133 = vpack.c.b16 %v1421, %v1413
    %v2134 = vpack.c.b16 %v1430, %v1422
    %v2135 = vpack.c.b16 %v1431, %v1423
    %v2136 = vpack.c.b16 %v1432, %v1424
    %v2137 = vpack.c.b16 %v1433, %v1425
    %v2138 = vpack.c.b16 %v1434, %v1426
    %v2139 = vpack.c.b16 %v1435, %v1427
    %v2140 = vpack.c.b16 %v1436, %v1428
    %v2141 = vpack.c.b16 %v1437, %v1429
    %v2142 = vpack.c.b16 %v1446, %v1438
    %v2143 = vpack.c.b16 %v1447, %v1439
    %v2144 = vpack.c.b16 %v1448, %v1440
    %v2145 = vpack.c.b16 %v1449, %v1441
    %v2146 = vpack.c.b16 %v1450, %v1442
    %v2147 = vpack.c.b16 %v1451, %v1443
    %v2148 = vpack.c.b16 %v1452, %v1444
    %v2149 = vpack.c.b16 %v1453, %v1445
    %v2150 = vpack.c.b16 %v1462, %v1454
    %v2151 = vpack.c.b16 %v1463, %v1455
    %v2152 = vpack.c.b16 %v1464, %v1456
    %v2153 = vpack.c.b16 %v1465, %v1457
    %v2154 = vpack.c.b16 %v1466, %v1458
    %v2155 = vpack.c.b16 %v1467, %v1459
    %v2156 = vpack.c.b16 %v1468, %v1460
    %v2157 = vpack.c.b16 %v1469, %v1461
    %v2158 = vpack.c.b16 %v1478, %v1470
    %v2159 = vpack.c.b16 %v1479, %v1471
    %v2160 = vpack.c.b16 %v1480, %v1472
    %v2161 = vpack.c.b16 %v1481, %v1473
    %v2162 = vpack.c.b16 %v1482, %v1474
    %v2163 = vpack.c.b16 %v1483, %v1475
    %v2164 = vpack.c.b16 %v1484, %v1476
    %v2165 = vpack.c.b16 %v1485, %v1477
    %v2166 = vpack.c.b16 %v1494, %v1486
    %v2167 = vpack.c.b16 %v1495, %v1487
    %v2168 = vpack.c.b16 %v1496, %v1488
    %v2169 = vpack.c.b16 %v1497, %v1489
    %v2170 = vpack.c.b16 %v1498, %v1490
    %v2171 = vpack.c.b16 %v1499, %v1491
    %v2172 = vpack.c.b16 %v1500, %v1492
    %v2173 = vpack.c.b16 %v1501, %v1493
    %v2174 = vpack.c.b16 %v1510, %v1502
    %v2175 = vpack.c.b16 %v1511, %v1503
    %v2176 = vpack.c.b16 %v1512, %v1504
    %v2177 = vpack.c.b16 %v1513, %v1505
    %v2178 = vpack.c.b16 %v1514, %v1506
    %v2179 = vpack.c.b16 %v1515, %v1507
    %v2180 = vpack.c.b16 %v1516, %v1508
    %v2181 = vpack.c.b16 %v1517, %v1509
    %v2182 = vpack.c.b16 %v1526, %v1518
    %v2183 = vpack.c.b16 %v1527, %v1519
    %v2184 = vpack.c.b16 %v1528, %v1520
    %v2185 = vpack.c.b16 %v1529, %v1521
    %v2186 = vpack.c.b16 %v1530, %v1522
    %v2187 = vpack.c.b16 %v1531, %v1523
    %v2188 = vpack.c.b16 %v1532, %v1524
    %v2189 = vpack.c.b16 %v1533, %v1525
    %v2190 = vpack.c.b16 %v1542, %v1534
    %v2191 = vpack.c.b16 %v1543, %v1535
    %v2192 = vpack.c.b16 %v1544, %v1536
    %v2193 = vpack.c.b16 %v1545, %v1537
    %v2194 = vpack.c.b16 %v1546, %v1538
    %v2195 = vpack.c.b16 %v1547, %v1539
    %v2196 = vpack.c.b16 %v1548, %v1540
    %v2197 = vpack.c.b16 %v1549, %v1541
    %v2198 = vpack.c.b16 %v1558, %v1550
    %v2199 = vpack.c.b16 %v1559, %v1551
    %v2200 = vpack.c.b16 %v1560, %v1552
    %v2201 = vpack.c.b16 %v1561, %v1553
    %v2202 = vpack.c.b16 %v1562, %v1554
    %v2203 = vpack.c.b16 %v1563, %v1555
    %v2204 = vpack.c.b16 %v1564, %v1556
    %v2205 = vpack.c.b16 %v1565, %v1557
    %v2206 = vpack.c.b16 %v1574, %v1566
    %v2207 = vpack.c.b16 %v1575, %v1567
    %v2208 = vpack.c.b16 %v1576, %v1568
    %v2209 = vpack.c.b16 %v1577, %v1569
    %v2210 = vpack.c.b16 %v1578, %v1570
    %v2211 = vpack.c.b16 %v1579, %v1571
    %v2212 = vpack.c.b16 %v1580, %v1572
    %v2213 = vpack.c.b16 %v1581, %v1573
    %v2214 = vpack.c.b16 %v1590, %v1582
    %v2215 = vpack.c.b16 %v1591, %v1583
    %v2216 = vpack.c.b16 %v1592, %v1584
    %v2217 = vpack.c.b16 %v1593, %v1585
    %v2218 = vpack.c.b16 %v1594, %v1586
    %v2219 = vpack.c.b16 %v1595, %v1587
    %v2220 = vpack.c.b16 %v1596, %v1588
    %v2221 = vpack.c.b16 %v1597, %v1589
    %v2222 = vpack.c.b16 %v1606, %v1598
    %v2223 = vpack.c.b16 %v1607, %v1599
    %v2224 = vpack.c.b16 %v1608, %v1600
    %v2225 = vpack.c.b16 %v1609, %v1601
    %v2226 = vpack.c.b16 %v1610, %v1602
    %v2227 = vpack.c.b16 %v1611, %v1603
    %v2228 = vpack.c.b16 %v1612, %v1604
    %v2229 = vpack.c.b16 %v1613, %v1605
    %v2230 = vpack.c.b16 %v1622, %v1614
    %v2231 = vpack.c.b16 %v1623, %v1615
    %v2232 = vpack.c.b16 %v1624, %v1616
    %v2233 = vpack.c.b16 %v1625, %v1617
    %v2234 = vpack.c.b16 %v1626, %v1618
    %v2235 = vpack.c.b16 %v1627, %v1619
    %v2236 = vpack.c.b16 %v1628, %v1620
    %v2237 = vpack.c.b16 %v1629, %v1621
    %v2238 = vpack.c.b16 %v1638, %v1630
    %v2239 = vpack.c.b16 %v1639, %v1631
    %v2240 = vpack.c.b16 %v1640, %v1632
    %v2241 = vpack.c.b16 %v1641, %v1633
    %v2242 = vpack.c.b16 %v1642, %v1634
    %v2243 = vpack.c.b16 %v1643, %v1635
    %v2244 = vpack.c.b16 %v1644, %v1636
    %v2245 = vpack.c.b16 %v1645, %v1637
    %v2246 = vpack.c.b16 %v1654, %v1646
    %v2247 = vpack.c.b16 %v1655, %v1647
    %v2248 = vpack.c.b16 %v1656, %v1648
    %v2249 = vpack.c.b16 %v1657, %v1649
    %v2250 = vpack.c.b16 %v1658, %v1650
    %v2251 = vpack.c.b16 %v1659, %v1651
    %v2252 = vpack.c.b16 %v1660, %v1652
    %v2253 = vpack.c.b16 %v1661, %v1653
    %v2254 = vpack.c.b16 %v1670, %v1662
    %v2255 = vpack.c.b16 %v1671, %v1663
    %v2256 = vpack.c.b16 %v1672, %v1664
    %v2257 = vpack.c.b16 %v1673, %v1665
    %v2258 = vpack.c.b16 %v1674, %v1666
    %v2259 = vpack.c.b16 %v1675, %v1667
    %v2260 = vpack.c.b16 %v1676, %v1668
    %v2261 = vpack.c.b16 %v1677, %v1669
    %v2262 = vpack.c.b16 %v1686, %v1678
    %v2263 = vpack.c.b16 %v1687, %v1679
    %v2264 = vpack.c.b16 %v1688, %v1680
    %v2265 = vpack.c.b16 %v1689, %v1681
    %v2266 = vpack.c.b16 %v1690, %v1682
    %v2267 = vpack.c.b16 %v1691, %v1683
    %v2268 = vpack.c.b16 %v1692, %v1684
    %v2269 = vpack.c.b16 %v1693, %v1685
    %v2270 = vpack.c.b16 %v1702, %v1694
    %v2271 = vpack.c.b16 %v1703, %v1695
    %v2272 = vpack.c.b16 %v1704, %v1696
    %v2273 = vpack.c.b16 %v1705, %v1697
    %v2274 = vpack.c.b16 %v1706, %v1698
    %v2275 = vpack.c.b16 %v1707, %v1699
    %v2276 = vpack.c.b16 %v1708, %v1700
    %v2277 = vpack.c.b16 %v1709, %v1701
    %v2278 = vpack.c.b16 %v1718, %v1710
    %v2279 = vpack.c.b16 %v1719, %v1711
    %v2280 = vpack.c.b16 %v1720, %v1712
    %v2281 = vpack.c.b16 %v1721, %v1713
    %v2282 = vpack.c.b16 %v1722, %v1714
    %v2283 = vpack.c.b16 %v1723, %v1715
    %v2284 = vpack.c.b16 %v1724, %v1716
    %v2285 = vpack.c.b16 %v1725, %v1717
    %v2286 = vpack.c.b16 %v1734, %v1726
    %v2287 = vpack.c.b16 %v1735, %v1727
    %v2288 = vpack.c.b16 %v1736, %v1728
    %v2289 = vpack.c.b16 %v1737, %v1729
    %v2290 = vpack.c.b16 %v1738, %v1730
    %v2291 = vpack.c.b16 %v1739, %v1731
    %v2292 = vpack.c.b16 %v1740, %v1732
    %v2293 = vpack.c.b16 %v1741, %v1733
    %v2294 = vpack.c.b16 %v1750, %v1742
    %v2295 = vpack.c.b16 %v1751, %v1743
    %v2296 = vpack.c.b16 %v1752, %v1744
    %v2297 = vpack.c.b16 %v1753, %v1745
    %v2298 = vpack.c.b16 %v1754, %v1746
    %v2299 = vpack.c.b16 %v1755, %v1747
    %v2300 = vpack.c.b16 %v1756, %v1748
    %v2301 = vpack.c.b16 %v1757, %v1749
    %v2302 = vpack.c.b16 %v1766, %v1758
    %v2303 = vpack.c.b16 %v1767, %v1759
    %v2304 = vpack.c.b16 %v1768, %v1760
    %v2305 = vpack.c.b16 %v1769, %v1761
    %v2306 = vpack.c.b16 %v1770, %v1762
    %v2307 = vpack.c.b16 %v1771, %v1763
    %v2308 = vpack.c.b16 %v1772, %v1764
    %v2309 = vpack.c.b16 %v1773, %v1765
    %v2310 = vpack.c.b16 %v1782, %v1774
    %v2311 = vpack.c.b16 %v1783, %v1775
    %v2312 = vpack.c.b16 %v1784, %v1776
    %v2313 = vpack.c.b16 %v1785, %v1777
    %v2314 = vpack.c.b16 %v1786, %v1778
    %v2315 = vpack.c.b16 %v1787, %v1779
    %v2316 = vpack.c.b16 %v1788, %v1780
    %v2317 = vpack.c.b16 %v1789, %v1781
    %v2318 = vpack.c.b16 %v1798, %v1790
    %v2319 = vpack.c.b16 %v1799, %v1791
    %v2320 = vpack.c.b16 %v1800, %v1792
    %v2321 = vpack.c.b16 %v1801, %v1793
    %v2322 = vpack.c.b16 %v1802, %v1794
    %v2323 = vpack.c.b16 %v1803, %v1795
    %v2324 = vpack.c.b16 %v1804, %v1796
    %v2325 = vpack.c.b16 %v1805, %v1797
    %v2326 = vpack.c.b16 %v1814, %v1806
    %v2327 = vpack.c.b16 %v1815, %v1807
    %v2328 = vpack.c.b16 %v1816, %v1808
    %v2329 = vpack.c.b16 %v1817, %v1809
    %v2330 = vpack.c.b16 %v1818, %v1810
    %v2331 = vpack.c.b16 %v1819, %v1811
    %v2332 = vpack.c.b16 %v1820, %v1812
    %v2333 = vpack.c.b16 %v1821, %v1813
    %v2334 = vpack.c.b16 %v1830, %v1822
    %v2335 = vpack.c.b16 %v1831, %v1823
    %v2336 = vpack.c.b16 %v1832, %v1824
    %v2337 = vpack.c.b16 %v1833, %v1825
    %v2338 = vpack.c.b16 %v1834, %v1826
    %v2339 = vpack.c.b16 %v1835, %v1827
    %v2340 = vpack.c.b16 %v1836, %v1828
    %v2341 = vpack.c.b16 %v1837, %v1829
    %v2342 = vpack.c.b16 %v1846, %v1838
    %v2343 = vpack.c.b16 %v1847, %v1839
    %v2344 = vpack.c.b16 %v1848, %v1840
    %v2345 = vpack.c.b16 %v1849, %v1841
    %v2346 = vpack.c.b16 %v1850, %v1842
    %v2347 = vpack.c.b16 %v1851, %v1843
    %v2348 = vpack.c.b16 %v1852, %v1844
    %v2349 = vpack.c.b16 %v1853, %v1845
    %v2350 = vpack.c.b16 %v1862, %v1854
    %v2351 = vpack.c.b16 %v1863, %v1855
    %v2352 = vpack.c.b16 %v1864, %v1856
    %v2353 = vpack.c.b16 %v1865, %v1857
    %v2354 = vpack.c.b16 %v1866, %v1858
    %v2355 = vpack.c.b16 %v1867, %v1859
    %v2356 = vpack.c.b16 %v1868, %v1860
    %v2357 = vpack.c.b16 %v1869, %v1861
    %v2358 = vpack.c.b16 %v1878, %v1870
    %v2359 = vpack.c.b16 %v1879, %v1871
    %v2360 = vpack.c.b16 %v1880, %v1872
    %v2361 = vpack.c.b16 %v1881, %v1873
    %v2362 = vpack.c.b16 %v1882, %v1874
    %v2363 = vpack.c.b16 %v1883, %v1875
    %v2364 = vpack.c.b16 %v1884, %v1876
    %v2365 = vpack.c.b16 %v1885, %v1877
    %v2366 = vpack.c.b16 %v1894, %v1886
    %v2367 = vpack.c.b16 %v1895, %v1887
    %v2368 = vpack.c.b16 %v1896, %v1888
    %v2369 = vpack.c.b16 %v1897, %v1889
    %v2370 = vpack.c.b16 %v1898, %v1890
    %v2371 = vpack.c.b16 %v1899, %v1891
    %v2372 = vpack.c.b16 %v1900, %v1892
    %v2373 = vpack.c.b16 %v1901, %v1893
    %v2374 = vpack.c.b16 %v1910, %v1902
    %v2375 = vpack.c.b16 %v1911, %v1903
    %v2376 = vpack.c.b16 %v1912, %v1904
    %v2377 = vpack.c.b16 %v1913, %v1905
    %v2378 = vpack.c.b16 %v1914, %v1906
    %v2379 = vpack.c.b16 %v1915, %v1907
    %v2380 = vpack.c.b16 %v1916, %v1908
    %v2381 = vpack.c.b16 %v1917, %v1909
    %v2382 = vpack.c.b16 %v1926, %v1918
    %v2383 = vpack.c.b16 %v1927, %v1919
    %v2384 = vpack.c.b16 %v1928, %v1920
    %v2385 = vpack.c.b16 %v1929, %v1921
    %v2386 = vpack.c.b16 %v1930, %v1922
    %v2387 = vpack.c.b16 %v1931, %v1923
    %v2388 = vpack.c.b16 %v1932, %v1924
    %v2389 = vpack.c.b16 %v1933, %v1925
    %v2390 = vpack.c.b16 %v1942, %v1934
    %v2391 = vpack.c.b16 %v1943, %v1935
    %v2392 = vpack.c.b16 %v1944, %v1936
    %v2393 = vpack.c.b16 %v1945, %v1937
    %v2394 = vpack.c.b16 %v1946, %v1938
    %v2395 = vpack.c.b16 %v1947, %v1939
    %v2396 = vpack.c.b16 %v1948, %v1940
    %v2397 = vpack.c.b16 %v1949, %v1941
    %2846 = vmatprep.subr.bf16.mxu0 %v2007
    %2847 = vmatpush1.bf16.msra.mxu0 %v2006
    %2848 = vmatprep.subr.bf16.mxu0 %v1999
    %2849 = vmatpush1.bf16.msra.mxu0 %v1998
    %2850 = vmatprep.subr.bf16.mxu0 %v1991
    %2851 = vmatpush1.bf16.msra.mxu0 %v1990
    %2852 = vmatprep.subr.bf16.mxu0 %v1983
    %2853 = vmatpush1.bf16.msra.mxu0 %v1982
    %2854 = vmatprep.subr.bf16.mxu0 %v1975
    %2855 = vmatpush1.bf16.msra.mxu0 %v1974
    %2856 = vmatprep.subr.bf16.mxu0 %v1967
    %2857 = vmatpush1.bf16.msra.mxu0 %v1966
    %2858 = vmatprep.subr.bf16.mxu0 %v1959
    %2859 = vmatpush1.bf16.msra.mxu0 %v1958
    %2860 = vmatprep.subr.bf16.mxu0 %v1951
    %2861 = vmatpush1.bf16.msra.mxu0 %v1950
    %2862 = vmatprep.subr.bf16.mxu0 %v2071
    %2863 = vmatpush2.bf16.msra.mxu0 %v2070
    %2864 = vmatprep.subr.bf16.mxu0 %v2063
    %2865 = vmatpush2.bf16.msra.mxu0 %v2062
    %2866 = vmatprep.subr.bf16.mxu0 %v2055
    %2867 = vmatpush2.bf16.msra.mxu0 %v2054
    %2868 = vmatprep.subr.bf16.mxu0 %v2047
    %2869 = vmatpush2.bf16.msra.mxu0 %v2046
    %2870 = vmatprep.subr.bf16.mxu0 %v2039
    %2871 = vmatpush2.bf16.msra.mxu0 %v2038
    %2872 = vmatprep.subr.bf16.mxu0 %v2031
    %2873 = vmatpush2.bf16.msra.mxu0 %v2030
    %2874 = vmatprep.subr.bf16.mxu0 %v2023
    %2875 = vmatpush2.bf16.msra.mxu0 %v2022
    %2876 = vmatprep.subr.bf16.mxu0 %v2015
    %2877 = vmatpush2.bf16.msra.mxu0 %v2014
    %2878 = vmatprep.mubr.bf16.mxu0 %v593
    %2879 = vmatmul.mubr.bf16.gmra.mxu0 %v592
    %v2880 = vpop.f32.mrf.mxu0
    %v2881 = vadd.f32 %v533, %v2880
    %v2882 = vpop.f32.mrf.mxu0
    %v2883 = vadd.f32 %v537, %v2882
    %v2884 = vpop.f32.mrf.mxu0
    %v2885 = vadd.f32 %v533, %v2884
    %v2886 = vpop.f32.mrf.mxu0
    %v2887 = vadd.f32 %v537, %v2886
    %2888 = vdwg.mxu0
    %2889 = vmatprep.subr.bf16.mxu0 %v2135
    %2890 = vmatpush1.bf16.msra.mxu0 %v2134
    %2891 = vmatprep.subr.bf16.mxu0 %v2127
    %2892 = vmatpush1.bf16.msra.mxu0 %v2126
    %2893 = vmatprep.subr.bf16.mxu0 %v2119
    %2894 = vmatpush1.bf16.msra.mxu0 %v2118
    %2895 = vmatprep.subr.bf16.mxu0 %v2111
    %2896 = vmatpush1.bf16.msra.mxu0 %v2110
    %2897 = vmatprep.subr.bf16.mxu0 %v2103
    %2898 = vmatpush1.bf16.msra.mxu0 %v2102
    %2899 = vmatprep.subr.bf16.mxu0 %v2095
    %2900 = vmatpush1.bf16.msra.mxu0 %v2094
    %2901 = vmatprep.subr.bf16.mxu0 %v2087
    %2902 = vmatpush1.bf16.msra.mxu0 %v2086
    %2903 = vmatprep.subr.bf16.mxu0 %v2079
    %2904 = vmatpush1.bf16.msra.mxu0 %v2078
    %2905 = vmatprep.subr.bf16.mxu0 %v2199
    %2906 = vmatpush2.bf16.msra.mxu0 %v2198
    %2907 = vmatprep.subr.bf16.mxu0 %v2191
    %2908 = vmatpush2.bf16.msra.mxu0 %v2190
    %2909 = vmatprep.subr.bf16.mxu0 %v2183
    %2910 = vmatpush2.bf16.msra.mxu0 %v2182
    %2911 = vmatprep.subr.bf16.mxu0 %v2175
    %2912 = vmatpush2.bf16.msra.mxu0 %v2174
    %2913 = vmatprep.subr.bf16.mxu0 %v2167
    %2914 = vmatpush2.bf16.msra.mxu0 %v2166
    %2915 = vmatprep.subr.bf16.mxu0 %v2159
    %2916 = vmatpush2.bf16.msra.mxu0 %v2158
    %2917 = vmatprep.subr.bf16.mxu0 %v2151
    %2918 = vmatpush2.bf16.msra.mxu0 %v2150
    %2919 = vmatprep.subr.bf16.mxu0 %v2143
    %2920 = vmatpush2.bf16.msra.mxu0 %v2142
    %2921 = vmatprep.mubr.bf16.mxu0 %v595
    %2922 = vmatmul.mubr.bf16.gmra.mxu0 %v594
    %v2923 = vpop.f32.mrf.mxu0
    %v2924 = vadd.f32 %v2881, %v2923
    %v2925 = vpop.f32.mrf.mxu0
    %v2926 = vadd.f32 %v2883, %v2925
    %v2927 = vpop.f32.mrf.mxu0
    %v2928 = vadd.f32 %v2885, %v2927
    %v2929 = vpop.f32.mrf.mxu0
    %v2930 = vadd.f32 %v2887, %v2929
    %2931 = vdwg.mxu0
    %2932 = vmatprep.subr.bf16.mxu0 %v2263
    %2933 = vmatpush1.bf16.msra.mxu0 %v2262
    %2934 = vmatprep.subr.bf16.mxu0 %v2255
    %2935 = vmatpush1.bf16.msra.mxu0 %v2254
    %2936 = vmatprep.subr.bf16.mxu0 %v2247
    %2937 = vmatpush1.bf16.msra.mxu0 %v2246
    %2938 = vmatprep.subr.bf16.mxu0 %v2239
    %2939 = vmatpush1.bf16.msra.mxu0 %v2238
    %2940 = vmatprep.subr.bf16.mxu0 %v2231
    %2941 = vmatpush1.bf16.msra.mxu0 %v2230
    %2942 = vmatprep.subr.bf16.mxu0 %v2223
    %2943 = vmatpush1.bf16.msra.mxu0 %v2222
    %2944 = vmatprep.subr.bf16.mxu0 %v2215
    %2945 = vmatpush1.bf16.msra.mxu0 %v2214
    %2946 = vmatprep.subr.bf16.mxu0 %v2207
    %2947 = vmatpush1.bf16.msra.mxu0 %v2206
    %2948 = vmatprep.subr.bf16.mxu0 %v2327
    %2949 = vmatpush2.bf16.msra.mxu0 %v2326
    %2950 = vmatprep.subr.bf16.mxu0 %v2319
    %2951 = vmatpush2.bf16.msra.mxu0 %v2318
    %2952 = vmatprep.subr.bf16.mxu0 %v2311
    %2953 = vmatpush2.bf16.msra.mxu0 %v2310
    %2954 = vmatprep.subr.bf16.mxu0 %v2303
    %2955 = vmatpush2.bf16.msra.mxu0 %v2302
    %2956 = vmatprep.subr.bf16.mxu0 %v2295
    %2957 = vmatpush2.bf16.msra.mxu0 %v2294
    %2958 = vmatprep.subr.bf16.mxu0 %v2287
    %2959 = vmatpush2.bf16.msra.mxu0 %v2286
    %2960 = vmatprep.subr.bf16.mxu0 %v2279
    %2961 = vmatpush2.bf16.msra.mxu0 %v2278
    %2962 = vmatprep.subr.bf16.mxu0 %v2271
    %2963 = vmatpush2.bf16.msra.mxu0 %v2270
    %2964 = vmatprep.mubr.bf16.mxu0 %v597
    %2965 = vmatmul.mubr.bf16.gmra.mxu0 %v596
    %v2966 = vpop.f32.mrf.mxu0
    %v2967 = vadd.f32 %v2924, %v2966
    %v2968 = vpop.f32.mrf.mxu0
    %v2969 = vadd.f32 %v2926, %v2968
    %v2970 = vpop.f32.mrf.mxu0
    %v2971 = vadd.f32 %v2928, %v2970
    %v2972 = vpop.f32.mrf.mxu0
    %v2973 = vadd.f32 %v2930, %v2972
    %2974 = vdwg.mxu0
    %2975 = vmatprep.subr.bf16.mxu0 %v2391
    %2976 = vmatpush1.bf16.msra.mxu0 %v2390
    %2977 = vmatprep.subr.bf16.mxu0 %v2383
    %2978 = vmatpush1.bf16.msra.mxu0 %v2382
    %2979 = vmatprep.subr.bf16.mxu0 %v2375
    %2980 = vmatpush1.bf16.msra.mxu0 %v2374
    %2981 = vmatprep.subr.bf16.mxu0 %v2367
    %2982 = vmatpush1.bf16.msra.mxu0 %v2366
    %2983 = vmatprep.subr.bf16.mxu0 %v2359
    %2984 = vmatpush1.bf16.msra.mxu0 %v2358
    %2985 = vmatprep.subr.bf16.mxu0 %v2351
    %2986 = vmatpush1.bf16.msra.mxu0 %v2350
    %2987 = vmatprep.subr.bf16.mxu0 %v2343
    %2988 = vmatpush1.bf16.msra.mxu0 %v2342
    %2989 = vmatprep.subr.bf16.mxu0 %v2335
    %2990 = vmatpush1.bf16.msra.mxu0 %v2334
    %2991 = vmatprep.subr.bf16.mxu0 0
    %2992 = vmatpush2.bf16.msra.mxu0 0
    %2993 = vmatprep.subr.bf16.mxu0 0
    %2994 = vmatpush2.bf16.msra.mxu0 0
    %2995 = vmatprep.subr.bf16.mxu0 0
    %2996 = vmatpush2.bf16.msra.mxu0 0
    %2997 = vmatprep.subr.bf16.mxu0 0
    %2998 = vmatpush2.bf16.msra.mxu0 0
    %2999 = vmatprep.subr.bf16.mxu0 0
    %3000 = vmatpush2.bf16.msra.mxu0 0
    %3001 = vmatprep.subr.bf16.mxu0 0
    %3002 = vmatpush2.bf16.msra.mxu0 0
    %3003 = vmatprep.subr.bf16.mxu0 0
    %3004 = vmatpush2.bf16.msra.mxu0 0
    %3005 = vmatprep.subr.bf16.mxu0 0
    %3006 = vmatpush2.bf16.msra.mxu0 0
    %3007 = vmatprep.mubr.bf16.mxu0 0
    %3008 = vmatmul.mubr.bf16.gmra.mxu0 %v598
    %v3009 = vpop.f32.mrf.mxu0
    %v3010 = vadd.f32 %v2967, %v3009
    %v3011 = vpop.f32.mrf.mxu0
    %v3012 = vadd.f32 %v2969, %v3011
    %v3013 = vpop.f32.mrf.mxu0
    %v3014 = vadd.f32 %v2971, %v3013
    %v3015 = vpop.f32.mrf.mxu0
    %v3016 = vadd.f32 %v2973, %v3015
    %3017 = vdwg.mxu0
    %3018 = vmatprep.subr.bf16.mxu0 %v2009
    %3019 = vmatpush1.bf16.msra.mxu0 %v2008
    %3020 = vmatprep.subr.bf16.mxu0 %v2001
    %3021 = vmatpush1.bf16.msra.mxu0 %v2000
    %3022 = vmatprep.subr.bf16.mxu0 %v1993
    %3023 = vmatpush1.bf16.msra.mxu0 %v1992
    %3024 = vmatprep.subr.bf16.mxu0 %v1985
    %3025 = vmatpush1.bf16.msra.mxu0 %v1984
    %3026 = vmatprep.subr.bf16.mxu0 %v1977
    %3027 = vmatpush1.bf16.msra.mxu0 %v1976
    %3028 = vmatprep.subr.bf16.mxu0 %v1969
    %3029 = vmatpush1.bf16.msra.mxu0 %v1968
    %3030 = vmatprep.subr.bf16.mxu0 %v1961
    %3031 = vmatpush1.bf16.msra.mxu0 %v1960
    %3032 = vmatprep.subr.bf16.mxu0 %v1953
    %3033 = vmatpush1.bf16.msra.mxu0 %v1952
    %3034 = vmatprep.subr.bf16.mxu0 %v2073
    %3035 = vmatpush2.bf16.msra.mxu0 %v2072
    %3036 = vmatprep.subr.bf16.mxu0 %v2065
    %3037 = vmatpush2.bf16.msra.mxu0 %v2064
    %3038 = vmatprep.subr.bf16.mxu0 %v2057
    %3039 = vmatpush2.bf16.msra.mxu0 %v2056
    %3040 = vmatprep.subr.bf16.mxu0 %v2049
    %3041 = vmatpush2.bf16.msra.mxu0 %v2048
    %3042 = vmatprep.subr.bf16.mxu0 %v2041
    %3043 = vmatpush2.bf16.msra.mxu0 %v2040
    %3044 = vmatprep.subr.bf16.mxu0 %v2033
    %3045 = vmatpush2.bf16.msra.mxu0 %v2032
    %3046 = vmatprep.subr.bf16.mxu0 %v2025
    %3047 = vmatpush2.bf16.msra.mxu0 %v2024
    %3048 = vmatprep.subr.bf16.mxu0 %v2017
    %3049 = vmatpush2.bf16.msra.mxu0 %v2016
    %3050 = vmatprep.mubr.bf16.mxu0 %v593
    %3051 = vmatmul.mubr.bf16.gmra.mxu0 %v592
    %v3052 = vpop.f32.mrf.mxu0
    %v3053 = vadd.f32 %v541, %v3052
    %v3054 = vpop.f32.mrf.mxu0
    %v3055 = vadd.f32 %v545, %v3054
    %v3056 = vpop.f32.mrf.mxu0
    %v3057 = vadd.f32 %v541, %v3056
    %v3058 = vpop.f32.mrf.mxu0
    %v3059 = vadd.f32 %v545, %v3058
    %3060 = vdwg.mxu0
    %3061 = vmatprep.subr.bf16.mxu0 %v2137
    %3062 = vmatpush1.bf16.msra.mxu0 %v2136
    %3063 = vmatprep.subr.bf16.mxu0 %v2129
    %3064 = vmatpush1.bf16.msra.mxu0 %v2128
    %3065 = vmatprep.subr.bf16.mxu0 %v2121
    %3066 = vmatpush1.bf16.msra.mxu0 %v2120
    %3067 = vmatprep.subr.bf16.mxu0 %v2113
    %3068 = vmatpush1.bf16.msra.mxu0 %v2112
    %3069 = vmatprep.subr.bf16.mxu0 %v2105
    %3070 = vmatpush1.bf16.msra.mxu0 %v2104
    %3071 = vmatprep.subr.bf16.mxu0 %v2097
    %3072 = vmatpush1.bf16.msra.mxu0 %v2096
    %3073 = vmatprep.subr.bf16.mxu0 %v2089
    %3074 = vmatpush1.bf16.msra.mxu0 %v2088
    %3075 = vmatprep.subr.bf16.mxu0 %v2081
    %3076 = vmatpush1.bf16.msra.mxu0 %v2080
    %3077 = vmatprep.subr.bf16.mxu0 %v2201
    %3078 = vmatpush2.bf16.msra.mxu0 %v2200
    %3079 = vmatprep.subr.bf16.mxu0 %v2193
    %3080 = vmatpush2.bf16.msra.mxu0 %v2192
    %3081 = vmatprep.subr.bf16.mxu0 %v2185
    %3082 = vmatpush2.bf16.msra.mxu0 %v2184
    %3083 = vmatprep.subr.bf16.mxu0 %v2177
    %3084 = vmatpush2.bf16.msra.mxu0 %v2176
    %3085 = vmatprep.subr.bf16.mxu0 %v2169
    %3086 = vmatpush2.bf16.msra.mxu0 %v2168
    %3087 = vmatprep.subr.bf16.mxu0 %v2161
    %3088 = vmatpush2.bf16.msra.mxu0 %v2160
    %3089 = vmatprep.subr.bf16.mxu0 %v2153
    %3090 = vmatpush2.bf16.msra.mxu0 %v2152
    %3091 = vmatprep.subr.bf16.mxu0 %v2145
    %3092 = vmatpush2.bf16.msra.mxu0 %v2144
    %3093 = vmatprep.mubr.bf16.mxu0 %v595
    %3094 = vmatmul.mubr.bf16.gmra.mxu0 %v594
    %v3095 = vpop.f32.mrf.mxu0
    %v3096 = vadd.f32 %v3053, %v3095
    %v3097 = vpop.f32.mrf.mxu0
    %v3098 = vadd.f32 %v3055, %v3097
    %v3099 = vpop.f32.mrf.mxu0
    %v3100 = vadd.f32 %v3057, %v3099
    %v3101 = vpop.f32.mrf.mxu0
    %v3102 = vadd.f32 %v3059, %v3101
    %3103 = vdwg.mxu0
    %3104 = vmatprep.subr.bf16.mxu0 %v2265
    %3105 = vmatpush1.bf16.msra.mxu0 %v2264
    %3106 = vmatprep.subr.bf16.mxu0 %v2257
    %3107 = vmatpush1.bf16.msra.mxu0 %v2256
    %3108 = vmatprep.subr.bf16.mxu0 %v2249
    %3109 = vmatpush1.bf16.msra.mxu0 %v2248
    %3110 = vmatprep.subr.bf16.mxu0 %v2241
    %3111 = vmatpush1.bf16.msra.mxu0 %v2240
    %3112 = vmatprep.subr.bf16.mxu0 %v2233
    %3113 = vmatpush1.bf16.msra.mxu0 %v2232
    %3114 = vmatprep.subr.bf16.mxu0 %v2225
    %3115 = vmatpush1.bf16.msra.mxu0 %v2224
    %3116 = vmatprep.subr.bf16.mxu0 %v2217
    %3117 = vmatpush1.bf16.msra.mxu0 %v2216
    %3118 = vmatprep.subr.bf16.mxu0 %v2209
    %3119 = vmatpush1.bf16.msra.mxu0 %v2208
    %3120 = vmatprep.subr.bf16.mxu0 %v2329
    %3121 = vmatpush2.bf16.msra.mxu0 %v2328
    %3122 = vmatprep.subr.bf16.mxu0 %v2321
    %3123 = vmatpush2.bf16.msra.mxu0 %v2320
    %3124 = vmatprep.subr.bf16.mxu0 %v2313
    %3125 = vmatpush2.bf16.msra.mxu0 %v2312
    %3126 = vmatprep.subr.bf16.mxu0 %v2305
    %3127 = vmatpush2.bf16.msra.mxu0 %v2304
    %3128 = vmatprep.subr.bf16.mxu0 %v2297
    %3129 = vmatpush2.bf16.msra.mxu0 %v2296
    %3130 = vmatprep.subr.bf16.mxu0 %v2289
    %3131 = vmatpush2.bf16.msra.mxu0 %v2288
    %3132 = vmatprep.subr.bf16.mxu0 %v2281
    %3133 = vmatpush2.bf16.msra.mxu0 %v2280
    %3134 = vmatprep.subr.bf16.mxu0 %v2273
    %3135 = vmatpush2.bf16.msra.mxu0 %v2272
    %3136 = vmatprep.mubr.bf16.mxu0 %v597
    %3137 = vmatmul.mubr.bf16.gmra.mxu0 %v596
    %v3138 = vpop.f32.mrf.mxu0
    %v3139 = vadd.f32 %v3096, %v3138
    %v3140 = vpop.f32.mrf.mxu0
    %v3141 = vadd.f32 %v3098, %v3140
    %v3142 = vpop.f32.mrf.mxu0
    %v3143 = vadd.f32 %v3100, %v3142
    %v3144 = vpop.f32.mrf.mxu0
    %v3145 = vadd.f32 %v3102, %v3144
    %3146 = vdwg.mxu0
    %3147 = vmatprep.subr.bf16.mxu0 %v2393
    %3148 = vmatpush1.bf16.msra.mxu0 %v2392
    %3149 = vmatprep.subr.bf16.mxu0 %v2385
    %3150 = vmatpush1.bf16.msra.mxu0 %v2384
    %3151 = vmatprep.subr.bf16.mxu0 %v2377
    %3152 = vmatpush1.bf16.msra.mxu0 %v2376
    %3153 = vmatprep.subr.bf16.mxu0 %v2369
    %3154 = vmatpush1.bf16.msra.mxu0 %v2368
    %3155 = vmatprep.subr.bf16.mxu0 %v2361
    %3156 = vmatpush1.bf16.msra.mxu0 %v2360
    %3157 = vmatprep.subr.bf16.mxu0 %v2353
    %3158 = vmatpush1.bf16.msra.mxu0 %v2352
    %3159 = vmatprep.subr.bf16.mxu0 %v2345
    %3160 = vmatpush1.bf16.msra.mxu0 %v2344
    %3161 = vmatprep.subr.bf16.mxu0 %v2337
    %3162 = vmatpush1.bf16.msra.mxu0 %v2336
    %3163 = vmatprep.subr.bf16.mxu0 0
    %3164 = vmatpush2.bf16.msra.mxu0 0
    %3165 = vmatprep.subr.bf16.mxu0 0
    %3166 = vmatpush2.bf16.msra.mxu0 0
    %3167 = vmatprep.subr.bf16.mxu0 0
    %3168 = vmatpush2.bf16.msra.mxu0 0
    %3169 = vmatprep.subr.bf16.mxu0 0
    %3170 = vmatpush2.bf16.msra.mxu0 0
    %3171 = vmatprep.subr.bf16.mxu0 0
    %3172 = vmatpush2.bf16.msra.mxu0 0
    %3173 = vmatprep.subr.bf16.mxu0 0
    %3174 = vmatpush2.bf16.msra.mxu0 0
    %3175 = vmatprep.subr.bf16.mxu0 0
    %3176 = vmatpush2.bf16.msra.mxu0 0
    %3177 = vmatprep.subr.bf16.mxu0 0
    %3178 = vmatpush2.bf16.msra.mxu0 0
    %3179 = vmatprep.mubr.bf16.mxu0 0
    %3180 = vmatmul.mubr.bf16.gmra.mxu0 %v598
    %v3181 = vpop.f32.mrf.mxu0
    %v3182 = vadd.f32 %v3139, %v3181
    %v3183 = vpop.f32.mrf.mxu0
    %v3184 = vadd.f32 %v3141, %v3183
    %v3185 = vpop.f32.mrf.mxu0
    %v3186 = vadd.f32 %v3143, %v3185
    %v3187 = vpop.f32.mrf.mxu0
    %v3188 = vadd.f32 %v3145, %v3187
    %3189 = vdwg.mxu0
    %3190 = vmatprep.subr.bf16.mxu0 %v2011
    %3191 = vmatpush1.bf16.msra.mxu0 %v2010
    %3192 = vmatprep.subr.bf16.mxu0 %v2003
    %3193 = vmatpush1.bf16.msra.mxu0 %v2002
    %3194 = vmatprep.subr.bf16.mxu0 %v1995
    %3195 = vmatpush1.bf16.msra.mxu0 %v1994
    %3196 = vmatprep.subr.bf16.mxu0 %v1987
    %3197 = vmatpush1.bf16.msra.mxu0 %v1986
    %3198 = vmatprep.subr.bf16.mxu0 %v1979
    %3199 = vmatpush1.bf16.msra.mxu0 %v1978
    %3200 = vmatprep.subr.bf16.mxu0 %v1971
    %3201 = vmatpush1.bf16.msra.mxu0 %v1970
    %3202 = vmatprep.subr.bf16.mxu0 %v1963
    %3203 = vmatpush1.bf16.msra.mxu0 %v1962
    %3204 = vmatprep.subr.bf16.mxu0 %v1955
    %3205 = vmatpush1.bf16.msra.mxu0 %v1954
    %3206 = vmatprep.subr.bf16.mxu0 %v2075
    %3207 = vmatpush2.bf16.msra.mxu0 %v2074
    %3208 = vmatprep.subr.bf16.mxu0 %v2067
    %3209 = vmatpush2.bf16.msra.mxu0 %v2066
    %3210 = vmatprep.subr.bf16.mxu0 %v2059
    %3211 = vmatpush2.bf16.msra.mxu0 %v2058
    %3212 = vmatprep.subr.bf16.mxu0 %v2051
    %3213 = vmatpush2.bf16.msra.mxu0 %v2050
    %3214 = vmatprep.subr.bf16.mxu0 %v2043
    %3215 = vmatpush2.bf16.msra.mxu0 %v2042
    %3216 = vmatprep.subr.bf16.mxu0 %v2035
    %3217 = vmatpush2.bf16.msra.mxu0 %v2034
    %3218 = vmatprep.subr.bf16.mxu0 %v2027
    %3219 = vmatpush2.bf16.msra.mxu0 %v2026
    %3220 = vmatprep.subr.bf16.mxu0 %v2019
    %3221 = vmatpush2.bf16.msra.mxu0 %v2018
    %3222 = vmatprep.mubr.bf16.mxu0 %v593
    %3223 = vmatmul.mubr.bf16.gmra.mxu0 %v592
    %v3224 = vpop.f32.mrf.mxu0
    %v3225 = vadd.f32 %v549, %v3224
    %v3226 = vpop.f32.mrf.mxu0
    %v3227 = vadd.f32 %v553, %v3226
    %v3228 = vpop.f32.mrf.mxu0
    %v3229 = vadd.f32 %v549, %v3228
    %v3230 = vpop.f32.mrf.mxu0
    %v3231 = vadd.f32 %v553, %v3230
    %3232 = vdwg.mxu0
    %3233 = vmatprep.subr.bf16.mxu0 %v2139
    %3234 = vmatpush1.bf16.msra.mxu0 %v2138
    %3235 = vmatprep.subr.bf16.mxu0 %v2131
    %3236 = vmatpush1.bf16.msra.mxu0 %v2130
    %3237 = vmatprep.subr.bf16.mxu0 %v2123
    %3238 = vmatpush1.bf16.msra.mxu0 %v2122
    %3239 = vmatprep.subr.bf16.mxu0 %v2115
    %3240 = vmatpush1.bf16.msra.mxu0 %v2114
    %3241 = vmatprep.subr.bf16.mxu0 %v2107
    %3242 = vmatpush1.bf16.msra.mxu0 %v2106
    %3243 = vmatprep.subr.bf16.mxu0 %v2099
    %3244 = vmatpush1.bf16.msra.mxu0 %v2098
    %3245 = vmatprep.subr.bf16.mxu0 %v2091
    %3246 = vmatpush1.bf16.msra.mxu0 %v2090
    %3247 = vmatprep.subr.bf16.mxu0 %v2083
    %3248 = vmatpush1.bf16.msra.mxu0 %v2082
    %3249 = vmatprep.subr.bf16.mxu0 %v2203
    %3250 = vmatpush2.bf16.msra.mxu0 %v2202
    %3251 = vmatprep.subr.bf16.mxu0 %v2195
    %3252 = vmatpush2.bf16.msra.mxu0 %v2194
    %3253 = vmatprep.subr.bf16.mxu0 %v2187
    %3254 = vmatpush2.bf16.msra.mxu0 %v2186
    %3255 = vmatprep.subr.bf16.mxu0 %v2179
    %3256 = vmatpush2.bf16.msra.mxu0 %v2178
    %3257 = vmatprep.subr.bf16.mxu0 %v2171
    %3258 = vmatpush2.bf16.msra.mxu0 %v2170
    %3259 = vmatprep.subr.bf16.mxu0 %v2163
    %3260 = vmatpush2.bf16.msra.mxu0 %v2162
    %3261 = vmatprep.subr.bf16.mxu0 %v2155
    %3262 = vmatpush2.bf16.msra.mxu0 %v2154
    %3263 = vmatprep.subr.bf16.mxu0 %v2147
    %3264 = vmatpush2.bf16.msra.mxu0 %v2146
    %3265 = vmatprep.mubr.bf16.mxu0 %v595
    %3266 = vmatmul.mubr.bf16.gmra.mxu0 %v594
    %v3267 = vpop.f32.mrf.mxu0
    %v3268 = vadd.f32 %v3225, %v3267
    %v3269 = vpop.f32.mrf.mxu0
    %v3270 = vadd.f32 %v3227, %v3269
    %v3271 = vpop.f32.mrf.mxu0
    %v3272 = vadd.f32 %v3229, %v3271
    %v3273 = vpop.f32.mrf.mxu0
    %v3274 = vadd.f32 %v3231, %v3273
    %3275 = vdwg.mxu0
    %3276 = vmatprep.subr.bf16.mxu0 %v2267
    %3277 = vmatpush1.bf16.msra.mxu0 %v2266
    %3278 = vmatprep.subr.bf16.mxu0 %v2259
    %3279 = vmatpush1.bf16.msra.mxu0 %v2258
    %3280 = vmatprep.subr.bf16.mxu0 %v2251
    %3281 = vmatpush1.bf16.msra.mxu0 %v2250
    %3282 = vmatprep.subr.bf16.mxu0 %v2243
    %3283 = vmatpush1.bf16.msra.mxu0 %v2242
    %3284 = vmatprep.subr.bf16.mxu0 %v2235
    %3285 = vmatpush1.bf16.msra.mxu0 %v2234
    %3286 = vmatprep.subr.bf16.mxu0 %v2227
    %3287 = vmatpush1.bf16.msra.mxu0 %v2226
    %3288 = vmatprep.subr.bf16.mxu0 %v2219
    %3289 = vmatpush1.bf16.msra.mxu0 %v2218
    %3290 = vmatprep.subr.bf16.mxu0 %v2211
    %3291 = vmatpush1.bf16.msra.mxu0 %v2210
    %3292 = vmatprep.subr.bf16.mxu0 %v2331
    %3293 = vmatpush2.bf16.msra.mxu0 %v2330
    %3294 = vmatprep.subr.bf16.mxu0 %v2323
    %3295 = vmatpush2.bf16.msra.mxu0 %v2322
    %3296 = vmatprep.subr.bf16.mxu0 %v2315
    %3297 = vmatpush2.bf16.msra.mxu0 %v2314
    %3298 = vmatprep.subr.bf16.mxu0 %v2307
    %3299 = vmatpush2.bf16.msra.mxu0 %v2306
    %3300 = vmatprep.subr.bf16.mxu0 %v2299
    %3301 = vmatpush2.bf16.msra.mxu0 %v2298
    %3302 = vmatprep.subr.bf16.mxu0 %v2291
    %3303 = vmatpush2.bf16.msra.mxu0 %v2290
    %3304 = vmatprep.subr.bf16.mxu0 %v2283
    %3305 = vmatpush2.bf16.msra.mxu0 %v2282
    %3306 = vmatprep.subr.bf16.mxu0 %v2275
    %3307 = vmatpush2.bf16.msra.mxu0 %v2274
    %3308 = vmatprep.mubr.bf16.mxu0 %v597
    %3309 = vmatmul.mubr.bf16.gmra.mxu0 %v596
    %v3310 = vpop.f32.mrf.mxu0
    %v3311 = vadd.f32 %v3268, %v3310
    %v3312 = vpop.f32.mrf.mxu0
    %v3313 = vadd.f32 %v3270, %v3312
    %v3314 = vpop.f32.mrf.mxu0
    %v3315 = vadd.f32 %v3272, %v3314
    %v3316 = vpop.f32.mrf.mxu0
    %v3317 = vadd.f32 %v3274, %v3316
    %3318 = vdwg.mxu0
    %3319 = vmatprep.subr.bf16.mxu0 %v2395
    %3320 = vmatpush1.bf16.msra.mxu0 %v2394
    %3321 = vmatprep.subr.bf16.mxu0 %v2387
    %3322 = vmatpush1.bf16.msra.mxu0 %v2386
    %3323 = vmatprep.subr.bf16.mxu0 %v2379
    %3324 = vmatpush1.bf16.msra.mxu0 %v2378
    %3325 = vmatprep.subr.bf16.mxu0 %v2371
    %3326 = vmatpush1.bf16.msra.mxu0 %v2370
    %3327 = vmatprep.subr.bf16.mxu0 %v2363
    %3328 = vmatpush1.bf16.msra.mxu0 %v2362
    %3329 = vmatprep.subr.bf16.mxu0 %v2355
    %3330 = vmatpush1.bf16.msra.mxu0 %v2354
    %3331 = vmatprep.subr.bf16.mxu0 %v2347
    %3332 = vmatpush1.bf16.msra.mxu0 %v2346
    %3333 = vmatprep.subr.bf16.mxu0 %v2339
    %3334 = vmatpush1.bf16.msra.mxu0 %v2338
    %3335 = vmatprep.subr.bf16.mxu0 0
    %3336 = vmatpush2.bf16.msra.mxu0 0
    %3337 = vmatprep.subr.bf16.mxu0 0
    %3338 = vmatpush2.bf16.msra.mxu0 0
    %3339 = vmatprep.subr.bf16.mxu0 0
    %3340 = vmatpush2.bf16.msra.mxu0 0
    %3341 = vmatprep.subr.bf16.mxu0 0
    %3342 = vmatpush2.bf16.msra.mxu0 0
    %3343 = vmatprep.subr.bf16.mxu0 0
    %3344 = vmatpush2.bf16.msra.mxu0 0
    %3345 = vmatprep.subr.bf16.mxu0 0
    %3346 = vmatpush2.bf16.msra.mxu0 0
    %3347 = vmatprep.subr.bf16.mxu0 0
    %3348 = vmatpush2.bf16.msra.mxu0 0
    %3349 = vmatprep.subr.bf16.mxu0 0
    %3350 = vmatpush2.bf16.msra.mxu0 0
    %3351 = vmatprep.mubr.bf16.mxu0 0
    %3352 = vmatmul.mubr.bf16.gmra.mxu0 %v598
    %v3353 = vpop.f32.mrf.mxu0
    %v3354 = vadd.f32 %v3311, %v3353
    %v3355 = vpop.f32.mrf.mxu0
    %v3356 = vadd.f32 %v3313, %v3355
    %v3357 = vpop.f32.mrf.mxu0
    %v3358 = vadd.f32 %v3315, %v3357
    %v3359 = vpop.f32.mrf.mxu0
    %v3360 = vadd.f32 %v3317, %v3359
    %3361 = vdwg.mxu0
    %3362 = vmatprep.subr.bf16.mxu0 %v2013
    %3363 = vmatpush1.bf16.msra.mxu0 %v2012
    %3364 = vmatprep.subr.bf16.mxu0 %v2005
    %3365 = vmatpush1.bf16.msra.mxu0 %v2004
    %3366 = vmatprep.subr.bf16.mxu0 %v1997
    %3367 = vmatpush1.bf16.msra.mxu0 %v1996
    %3368 = vmatprep.subr.bf16.mxu0 %v1989
    %3369 = vmatpush1.bf16.msra.mxu0 %v1988
    %3370 = vmatprep.subr.bf16.mxu0 %v1981
    %3371 = vmatpush1.bf16.msra.mxu0 %v1980
    %3372 = vmatprep.subr.bf16.mxu0 %v1973
    %3373 = vmatpush1.bf16.msra.mxu0 %v1972
    %3374 = vmatprep.subr.bf16.mxu0 %v1965
    %3375 = vmatpush1.bf16.msra.mxu0 %v1964
    %3376 = vmatprep.subr.bf16.mxu0 %v1957
    %3377 = vmatpush1.bf16.msra.mxu0 %v1956
    %3378 = vmatprep.subr.bf16.mxu0 %v2077
    %3379 = vmatpush2.bf16.msra.mxu0 %v2076
    %3380 = vmatprep.subr.bf16.mxu0 %v2069
    %3381 = vmatpush2.bf16.msra.mxu0 %v2068
    %3382 = vmatprep.subr.bf16.mxu0 %v2061
    %3383 = vmatpush2.bf16.msra.mxu0 %v2060
    %3384 = vmatprep.subr.bf16.mxu0 %v2053
    %3385 = vmatpush2.bf16.msra.mxu0 %v2052
    %3386 = vmatprep.subr.bf16.mxu0 %v2045
    %3387 = vmatpush2.bf16.msra.mxu0 %v2044
    %3388 = vmatprep.subr.bf16.mxu0 %v2037
    %3389 = vmatpush2.bf16.msra.mxu0 %v2036
    %3390 = vmatprep.subr.bf16.mxu0 %v2029
    %3391 = vmatpush2.bf16.msra.mxu0 %v2028
    %3392 = vmatprep.subr.bf16.mxu0 %v2021
    %3393 = vmatpush2.bf16.msra.mxu0 %v2020
    %3394 = vmatprep.mubr.bf16.mxu0 %v593
    %3395 = vmatmul.mubr.bf16.gmra.mxu0 %v592
    %v3396 = vpop.f32.mrf.mxu0
    %v3397 = vadd.f32 %v557, %v3396
    %v3398 = vpop.f32.mrf.mxu0
    %v3399 = vadd.f32 %v561, %v3398
    %v3400 = vpop.f32.mrf.mxu0
    %v3401 = vadd.f32 %v557, %v3400
    %v3402 = vpop.f32.mrf.mxu0
    %v3403 = vadd.f32 %v561, %v3402
    %3404 = vdwg.mxu0
    %3405 = vmatprep.subr.bf16.mxu0 %v2141
    %3406 = vmatpush1.bf16.msra.mxu0 %v2140
    %3407 = vmatprep.subr.bf16.mxu0 %v2133
    %3408 = vmatpush1.bf16.msra.mxu0 %v2132
    %3409 = vmatprep.subr.bf16.mxu0 %v2125
    %3410 = vmatpush1.bf16.msra.mxu0 %v2124
    %3411 = vmatprep.subr.bf16.mxu0 %v2117
    %3412 = vmatpush1.bf16.msra.mxu0 %v2116
    %3413 = vmatprep.subr.bf16.mxu0 %v2109
    %3414 = vmatpush1.bf16.msra.mxu0 %v2108
    %3415 = vmatprep.subr.bf16.mxu0 %v2101
    %3416 = vmatpush1.bf16.msra.mxu0 %v2100
    %3417 = vmatprep.subr.bf16.mxu0 %v2093
    %3418 = vmatpush1.bf16.msra.mxu0 %v2092
    %3419 = vmatprep.subr.bf16.mxu0 %v2085
    %3420 = vmatpush1.bf16.msra.mxu0 %v2084
    %3421 = vmatprep.subr.bf16.mxu0 %v2205
    %3422 = vmatpush2.bf16.msra.mxu0 %v2204
    %3423 = vmatprep.subr.bf16.mxu0 %v2197
    %3424 = vmatpush2.bf16.msra.mxu0 %v2196
    %3425 = vmatprep.subr.bf16.mxu0 %v2189
    %3426 = vmatpush2.bf16.msra.mxu0 %v2188
    %3427 = vmatprep.subr.bf16.mxu0 %v2181
    %3428 = vmatpush2.bf16.msra.mxu0 %v2180
    %3429 = vmatprep.subr.bf16.mxu0 %v2173
    %3430 = vmatpush2.bf16.msra.mxu0 %v2172
    %3431 = vmatprep.subr.bf16.mxu0 %v2165
    %3432 = vmatpush2.bf16.msra.mxu0 %v2164
    %3433 = vmatprep.subr.bf16.mxu0 %v2157
    %3434 = vmatpush2.bf16.msra.mxu0 %v2156
    %3435 = vmatprep.subr.bf16.mxu0 %v2149
    %3436 = vmatpush2.bf16.msra.mxu0 %v2148
    %3437 = vmatprep.mubr.bf16.mxu0 %v595
    %3438 = vmatmul.mubr.bf16.gmra.mxu0 %v594
    %v3439 = vpop.f32.mrf.mxu0
    %v3440 = vadd.f32 %v3397, %v3439
    %v3441 = vpop.f32.mrf.mxu0
    %v3442 = vadd.f32 %v3399, %v3441
    %v3443 = vpop.f32.mrf.mxu0
    %v3444 = vadd.f32 %v3401, %v3443
    %v3445 = vpop.f32.mrf.mxu0
    %v3446 = vadd.f32 %v3403, %v3445
    %3447 = vdwg.mxu0
    %3448 = vmatprep.subr.bf16.mxu0 %v2269
    %3449 = vmatpush1.bf16.msra.mxu0 %v2268
    %3450 = vmatprep.subr.bf16.mxu0 %v2261
    %3451 = vmatpush1.bf16.msra.mxu0 %v2260
    %3452 = vmatprep.subr.bf16.mxu0 %v2253
    %3453 = vmatpush1.bf16.msra.mxu0 %v2252
    %3454 = vmatprep.subr.bf16.mxu0 %v2245
    %3455 = vmatpush1.bf16.msra.mxu0 %v2244
    %3456 = vmatprep.subr.bf16.mxu0 %v2237
    %3457 = vmatpush1.bf16.msra.mxu0 %v2236
    %3458 = vmatprep.subr.bf16.mxu0 %v2229
    %3459 = vmatpush1.bf16.msra.mxu0 %v2228
    %3460 = vmatprep.subr.bf16.mxu0 %v2221
    %3461 = vmatpush1.bf16.msra.mxu0 %v2220
    %3462 = vmatprep.subr.bf16.mxu0 %v2213
    %3463 = vmatpush1.bf16.msra.mxu0 %v2212
    %3464 = vmatprep.subr.bf16.mxu0 %v2333
    %3465 = vmatpush2.bf16.msra.mxu0 %v2332
    %3466 = vmatprep.subr.bf16.mxu0 %v2325
    %3467 = vmatpush2.bf16.msra.mxu0 %v2324
    %3468 = vmatprep.subr.bf16.mxu0 %v2317
    %3469 = vmatpush2.bf16.msra.mxu0 %v2316
    %3470 = vmatprep.subr.bf16.mxu0 %v2309
    %3471 = vmatpush2.bf16.msra.mxu0 %v2308
    %3472 = vmatprep.subr.bf16.mxu0 %v2301
    %3473 = vmatpush2.bf16.msra.mxu0 %v2300
    %3474 = vmatprep.subr.bf16.mxu0 %v2293
    %3475 = vmatpush2.bf16.msra.mxu0 %v2292
    %3476 = vmatprep.subr.bf16.mxu0 %v2285
    %3477 = vmatpush2.bf16.msra.mxu0 %v2284
    %3478 = vmatprep.subr.bf16.mxu0 %v2277
    %3479 = vmatpush2.bf16.msra.mxu0 %v2276
    %3480 = vmatprep.mubr.bf16.mxu0 %v597
    %3481 = vmatmul.mubr.bf16.gmra.mxu0 %v596
    %v3482 = vpop.f32.mrf.mxu0
    %v3483 = vadd.f32 %v3440, %v3482
    %v3484 = vpop.f32.mrf.mxu0
    %v3485 = vadd.f32 %v3442, %v3484
    %v3486 = vpop.f32.mrf.mxu0
    %v3487 = vadd.f32 %v3444, %v3486
    %v3488 = vpop.f32.mrf.mxu0
    %v3489 = vadd.f32 %v3446, %v3488
    %3490 = vdwg.mxu0
    %3491 = vmatprep.subr.bf16.mxu0 %v2397
    %3492 = vmatpush1.bf16.msra.mxu0 %v2396
    %3493 = vmatprep.subr.bf16.mxu0 %v2389
    %3494 = vmatpush1.bf16.msra.mxu0 %v2388
    %3495 = vmatprep.subr.bf16.mxu0 %v2381
    %3496 = vmatpush1.bf16.msra.mxu0 %v2380
    %3497 = vmatprep.subr.bf16.mxu0 %v2373
    %3498 = vmatpush1.bf16.msra.mxu0 %v2372
    %3499 = vmatprep.subr.bf16.mxu0 %v2365
    %3500 = vmatpush1.bf16.msra.mxu0 %v2364
    %3501 = vmatprep.subr.bf16.mxu0 %v2357
    %3502 = vmatpush1.bf16.msra.mxu0 %v2356
    %3503 = vmatprep.subr.bf16.mxu0 %v2349
    %3504 = vmatpush1.bf16.msra.mxu0 %v2348
    %3505 = vmatprep.subr.bf16.mxu0 %v2341
    %3506 = vmatpush1.bf16.msra.mxu0 %v2340
    %3507 = vmatprep.subr.bf16.mxu0 0
    %3508 = vmatpush2.bf16.msra.mxu0 0
    %3509 = vmatprep.subr.bf16.mxu0 0
    %3510 = vmatpush2.bf16.msra.mxu0 0
    %3511 = vmatprep.subr.bf16.mxu0 0
    %3512 = vmatpush2.bf16.msra.mxu0 0
    %3513 = vmatprep.subr.bf16.mxu0 0
    %3514 = vmatpush2.bf16.msra.mxu0 0
    %3515 = vmatprep.subr.bf16.mxu0 0
    %3516 = vmatpush2.bf16.msra.mxu0 0
    %3517 = vmatprep.subr.bf16.mxu0 0
    %3518 = vmatpush2.bf16.msra.mxu0 0
    %3519 = vmatprep.subr.bf16.mxu0 0
    %3520 = vmatpush2.bf16.msra.mxu0 0
    %3521 = vmatprep.subr.bf16.mxu0 0
    %3522 = vmatpush2.bf16.msra.mxu0 0
    %3523 = vmatprep.mubr.bf16.mxu0 0
    %3524 = vmatmul.mubr.bf16.gmra.mxu0 %v598
    %v3525 = vpop.f32.mrf.mxu0
    %v3526 = vadd.f32 %v3483, %v3525
    %v3527 = vpop.f32.mrf.mxu0
    %v3528 = vadd.f32 %v3485, %v3527
    %v3529 = vpop.f32.mrf.mxu0
    %v3530 = vadd.f32 %v3487, %v3529
    %v3531 = vpop.f32.mrf.mxu0
    %v3532 = vadd.f32 %v3489, %v3531
    %3533 = vdwg.mxu0
    %v3534 = vmax.f32 %v3010, 0.0
    %v3535 = vmax.f32 %v3012, 0.0
    %v3536 = vmax.f32 %v3182, 0.0
    %v3537 = vmax.f32 %v3184, 0.0
    %v3538 = vmax.f32 %v3354, 0.0
    %v3539 = vmax.f32 %v3356, 0.0
    %v3540 = vmax.f32 %v3526, 0.0
    %v3541 = vmax.f32 %v3528, 0.0
    %v3542 = vmax.f32 %v3014, 0.0
    %v3543 = vmax.f32 %v3016, 0.0
    %v3544 = vmax.f32 %v3186, 0.0
    %v3545 = vmax.f32 %v3188, 0.0
    %v3546 = vmax.f32 %v3358, 0.0
    %v3547 = vmax.f32 %v3360, 0.0
    %v3548 = vmax.f32 %v3530, 0.0
    %v3549 = vmax.f32 %v3532, 0.0
    %v3550 = vpack.c.bf16 %v3542, %v3534
    %v3551 = vpack.c.bf16 %v3543, %v3535
    %v3552 = vpack.c.bf16 %v3544, %v3536
    %v3553 = vpack.c.bf16 %v3545, %v3537
    %v3554 = vpack.c.bf16 %v3546, %v3538
    %v3555 = vpack.c.bf16 %v3547, %v3539
    %v3556 = vpack.c.bf16 %v3548, %v3540
    %v3557 = vpack.c.bf16 %v3549, %v3541
    %v3558 = vld [vmem:[#allocation6] sm:$0xf]
    %v3559 = vld [vmem:[#allocation6 + $0x4] sm:$0xf]
    %v3560 = vld [vmem:[#allocation6 + $0x8] sm:$0xf]
    %v3561 = vld [vmem:[#allocation6 + $0xc] sm:$0xf]
    %v3562 = vld [vmem:[#allocation6 + $0x10] sm:$0xf]
    %v3563 = vld [vmem:[#allocation6 + $0x14] sm:$0xf]
    %v3564 = vld [vmem:[#allocation6 + $0x18] sm:$0xf]
    %v3565 = vld [vmem:[#allocation6 + $0x1c] sm:$0xf]
    %v3566 = vld [vmem:[#allocation6 + $0x20] sm:$0xf]
    %v3567 = vld [vmem:[#allocation6 + $0x24] sm:$0xf]
    %v3568 = vld [vmem:[#allocation6 + $0x28] sm:$0xf]
    %v3569 = vld [vmem:[#allocation6 + $0x2c] sm:$0xf]
    %v3570 = vld [vmem:[#allocation6 + $0x30] sm:$0xf]
    %v3571 = vld [vmem:[#allocation6 + $0x34] sm:$0xf]
    %v3572 = vld [vmem:[#allocation6 + $0x38] sm:$0xf]
    %v3573 = vld [vmem:[#allocation6 + $0x3c] sm:$0xf]
    %v3574 = vld [vmem:[#allocation6 + $0x40] sm:$0xf]
    %v3575 = vld [vmem:[#allocation6 + $0x44] sm:$0xf]
    %v3576 = vld [vmem:[#allocation6 + $0x48] sm:$0xf]
    %v3577 = vld [vmem:[#allocation6 + $0x4c] sm:$0xf]
    %v3578 = vld [vmem:[#allocation6 + $0x50] sm:$0xf]
    %v3579 = vld [vmem:[#allocation6 + $0x54] sm:$0xf]
    %v3580 = vld [vmem:[#allocation6 + $0x58] sm:$0xf]
    %v3581 = vld [vmem:[#allocation6 + $0x5c] sm:$0xf]
    %v3582 = vld [vmem:[#allocation6 + $0x60] sm:$0xf]
    %v3583 = vld [vmem:[#allocation6 + $0x64] sm:$0xf]
    %v3584 = vld [vmem:[#allocation6 + $0x68] sm:$0xf]
    %v3585 = vld [vmem:[#allocation6 + $0x6c] sm:$0xf]
    %v3586 = vld [vmem:[#allocation6 + $0x70] sm:$0xf]
    %v3587 = vld [vmem:[#allocation6 + $0x74] sm:$0xf]
    %v3588 = vld [vmem:[#allocation6 + $0x78] sm:$0xf]
    %v3589 = vld [vmem:[#allocation6 + $0x7c] sm:$0xf]
    %v3590 = vld [vmem:[#allocation6 + $0x80] sm:$0xf]
    %v3591 = vld [vmem:[#allocation6 + $0x84] sm:$0xf]
    %v3592 = vld [vmem:[#allocation6 + $0x88] sm:$0xf]
    %v3593 = vld [vmem:[#allocation6 + $0x8c] sm:$0xf]
    %v3594 = vld [vmem:[#allocation6 + $0x90] sm:$0xf]
    %v3595 = vld [vmem:[#allocation6 + $0x94] sm:$0xf]
    %v3596 = vld [vmem:[#allocation6 + $0x98] sm:$0xf]
    %v3597 = vld [vmem:[#allocation6 + $0x9c] sm:$0xf]
    %v3598 = vld [vmem:[#allocation6 + $0xa0] sm:$0xf]
    %v3599 = vld [vmem:[#allocation6 + $0xa4] sm:$0xf]
    %v3600 = vld [vmem:[#allocation6 + $0xa8] sm:$0xf]
    %v3601 = vld [vmem:[#allocation6 + $0xac] sm:$0xf]
    %v3602 = vld [vmem:[#allocation6 + $0xb0] sm:$0xf]
    %v3603 = vld [vmem:[#allocation6 + $0xb4] sm:$0xf]
    %v3604 = vld [vmem:[#allocation6 + $0xb8] sm:$0xf]
    %v3605 = vld [vmem:[#allocation6 + $0xbc] sm:$0xf]
    %v3606 = vld [vmem:[#allocation6 + $0xc0] sm:$0xf]
    %v3607 = vld [vmem:[#allocation6 + $0xc4] sm:$0xf]
    %v3608 = vld [vmem:[#allocation6 + $0xc8] sm:$0xf]
    %v3609 = vld [vmem:[#allocation6 + $0xcc] sm:$0xf]
    %v3610 = vld [vmem:[#allocation6 + $0xd0] sm:$0xf]
    %v3611 = vld [vmem:[#allocation6 + $0xd4] sm:$0xf]
    %v3612 = vld [vmem:[#allocation6 + $0xd8] sm:$0xf]
    %v3613 = vld [vmem:[#allocation6 + $0xdc] sm:$0xf]
    %v3614 = vld [vmem:[#allocation6 + $0xe0] sm:$0xf]
    %v3615 = vld [vmem:[#allocation6 + $0xe4] sm:$0xf]
    %v3616 = vld [vmem:[#allocation6 + $0xe8] sm:$0xf]
    %v3617 = vld [vmem:[#allocation6 + $0xec] sm:$0xf]
    %v3618 = vld [vmem:[#allocation6 + $0xf0] sm:$0xf]
    %v3619 = vld [vmem:[#allocation6 + $0xf4] sm:$0xf]
    %v3620 = vld [vmem:[#allocation6 + $0xf8] sm:$0xf]
    %v3621 = vld [vmem:[#allocation6 + $0xfc] sm:$0xf]
    %v3622 = vld [vmem:[#allocation6 + $0x100] sm:$0xf]
    %v3623 = vld [vmem:[#allocation6 + $0x104] sm:$0xf]
    %v3624 = vld [vmem:[#allocation6 + $0x108] sm:$0xf]
    %v3625 = vld [vmem:[#allocation6 + $0x10c] sm:$0xf]
    %v3626 = vld [vmem:[#allocation6 + $0x110] sm:$0xf]
    %v3627 = vld [vmem:[#allocation6 + $0x114] sm:$0xf]
    %v3628 = vld [vmem:[#allocation6 + $0x118] sm:$0xf]
    %v3629 = vld [vmem:[#allocation6 + $0x11c] sm:$0xf]
    %v3630 = vld [vmem:[#allocation6 + $0x120] sm:$0xf]
    %v3631 = vld [vmem:[#allocation6 + $0x124] sm:$0xf]
    %v3632 = vld [vmem:[#allocation6 + $0x128] sm:$0xf]
    %v3633 = vld [vmem:[#allocation6 + $0x12c] sm:$0xf]
    %v3634 = vld [vmem:[#allocation6 + $0x130] sm:$0xf]
    %v3635 = vld [vmem:[#allocation6 + $0x134] sm:$0xf]
    %v3636 = vld [vmem:[#allocation6 + $0x138] sm:$0xf]
    %v3637 = vld [vmem:[#allocation6 + $0x13c] sm:$0xf]
    %v3638 = vld [vmem:[#allocation6 + $0x140] sm:$0xf]
    %v3639 = vld [vmem:[#allocation6 + $0x144] sm:$0xf]
    %v3640 = vld [vmem:[#allocation6 + $0x148] sm:$0xf]
    %v3641 = vld [vmem:[#allocation6 + $0x14c] sm:$0xf]
    %v3642 = vld [vmem:[#allocation6 + $0x150] sm:$0xf]
    %v3643 = vld [vmem:[#allocation6 + $0x154] sm:$0xf]
    %v3644 = vld [vmem:[#allocation6 + $0x158] sm:$0xf]
    %v3645 = vld [vmem:[#allocation6 + $0x15c] sm:$0xf]
    %v3646 = vld [vmem:[#allocation6 + $0x160] sm:$0xf]
    %v3647 = vld [vmem:[#allocation6 + $0x164] sm:$0xf]
    %v3648 = vld [vmem:[#allocation6 + $0x168] sm:$0xf]
    %v3649 = vld [vmem:[#allocation6 + $0x16c] sm:$0xf]
    %v3650 = vld [vmem:[#allocation6 + $0x170] sm:$0xf]
    %v3651 = vld [vmem:[#allocation6 + $0x174] sm:$0xf]
    %v3652 = vld [vmem:[#allocation6 + $0x178] sm:$0xf]
    %v3653 = vld [vmem:[#allocation6 + $0x17c] sm:$0xf]
    %v3654 = vld [vmem:[#allocation6 + $0x180] sm:$0xf]
    %v3655 = vld [vmem:[#allocation6 + $0x184] sm:$0xf]
    %v3656 = vld [vmem:[#allocation6 + $0x188] sm:$0xf]
    %v3657 = vld [vmem:[#allocation6 + $0x18c] sm:$0xf]
    %v3658 = vld [vmem:[#allocation6 + $0x190] sm:$0xf]
    %v3659 = vld [vmem:[#allocation6 + $0x194] sm:$0xf]
    %v3660 = vld [vmem:[#allocation6 + $0x198] sm:$0xf]
    %v3661 = vld [vmem:[#allocation6 + $0x19c] sm:$0xf]
    %v3662 = vld [vmem:[#allocation6 + $0x1a0] sm:$0xf]
    %v3663 = vld [vmem:[#allocation6 + $0x1a4] sm:$0xf]
    %v3664 = vld [vmem:[#allocation6 + $0x1a8] sm:$0xf]
    %v3665 = vld [vmem:[#allocation6 + $0x1ac] sm:$0xf]
    %v3666 = vld [vmem:[#allocation6 + $0x1b0] sm:$0xf]
    %v3667 = vld [vmem:[#allocation6 + $0x1b4] sm:$0xf]
    %v3668 = vld [vmem:[#allocation6 + $0x1b8] sm:$0xf]
    %v3669 = vld [vmem:[#allocation6 + $0x1bc] sm:$0xf]
    %v3670 = vld [vmem:[#allocation6 + $0x1c0] sm:$0xf]
    %v3671 = vld [vmem:[#allocation6 + $0x1c4] sm:$0xf]
    %v3672 = vld [vmem:[#allocation6 + $0x1c8] sm:$0xf]
    %v3673 = vld [vmem:[#allocation6 + $0x1cc] sm:$0xf]
    %v3674 = vld [vmem:[#allocation6 + $0x1d0] sm:$0xf]
    %v3675 = vld [vmem:[#allocation6 + $0x1d4] sm:$0xf]
    %v3676 = vld [vmem:[#allocation6 + $0x1d8] sm:$0xf]
    %v3677 = vld [vmem:[#allocation6 + $0x1dc] sm:$0xf]
    %v3678 = vld [vmem:[#allocation6 + $0x1e0] sm:$0xf]
    %v3679 = vld [vmem:[#allocation6 + $0x1e4] sm:$0xf]
    %v3680 = vld [vmem:[#allocation6 + $0x1e8] sm:$0xf]
    %v3681 = vld [vmem:[#allocation6 + $0x1ec] sm:$0xf]
    %v3682 = vld [vmem:[#allocation6 + $0x1f0] sm:$0xf]
    %v3683 = vld [vmem:[#allocation6 + $0x1f4] sm:$0xf]
    %v3684 = vld [vmem:[#allocation6 + $0x1f8] sm:$0xf]
    %v3685 = vld [vmem:[#allocation6 + $0x1fc] sm:$0xf]
    %v3686 = vld [vmem:[#allocation7] sm:$0x1]
    %v3688 = vlaneseq
    %v3689 = vshrl.u32 %v3688, 7
    %v3690 = vsub.s32 0, %v3689
    %v3691 = vrot.slane %v3686, %v3690
    %v3821 = vunpack.c.l.b16 %v3558
    %v3822 = vunpack.c.l.b16 %v3559
    %v3823 = vunpack.c.l.b16 %v3560
    %v3824 = vunpack.c.l.b16 %v3561
    %v3825 = vunpack.c.l.b16 %v3562
    %v3826 = vunpack.c.l.b16 %v3563
    %v3827 = vunpack.c.l.b16 %v3564
    %v3828 = vunpack.c.l.b16 %v3565
    %v3829 = vunpack.c.l.b16 %v3566
    %v3830 = vunpack.c.l.b16 %v3567
    %v3831 = vunpack.c.l.b16 %v3568
    %v3832 = vunpack.c.l.b16 %v3569
    %v3833 = vunpack.c.l.b16 %v3570
    %v3834 = vunpack.c.l.b16 %v3571
    %v3835 = vunpack.c.l.b16 %v3572
    %v3836 = vunpack.c.l.b16 %v3573
    %v3837 = vunpack.c.l.b16 %v3574
    %v3838 = vunpack.c.l.b16 %v3575
    %v3839 = vunpack.c.l.b16 %v3576
    %v3840 = vunpack.c.l.b16 %v3577
    %v3841 = vunpack.c.l.b16 %v3578
    %v3842 = vunpack.c.l.b16 %v3579
    %v3843 = vunpack.c.l.b16 %v3580
    %v3844 = vunpack.c.l.b16 %v3581
    %v3845 = vunpack.c.l.b16 %v3582
    %v3846 = vunpack.c.l.b16 %v3583
    %v3847 = vunpack.c.l.b16 %v3584
    %v3848 = vunpack.c.l.b16 %v3585
    %v3849 = vunpack.c.l.b16 %v3586
    %v3850 = vunpack.c.l.b16 %v3587
    %v3851 = vunpack.c.l.b16 %v3588
    %v3852 = vunpack.c.l.b16 %v3589
    %v3853 = vunpack.c.l.b16 %v3590
    %v3854 = vunpack.c.l.b16 %v3591
    %v3855 = vunpack.c.l.b16 %v3592
    %v3856 = vunpack.c.l.b16 %v3593
    %v3857 = vunpack.c.l.b16 %v3594
    %v3858 = vunpack.c.l.b16 %v3595
    %v3859 = vunpack.c.l.b16 %v3596
    %v3860 = vunpack.c.l.b16 %v3597
    %v3861 = vunpack.c.l.b16 %v3598
    %v3862 = vunpack.c.l.b16 %v3599
    %v3863 = vunpack.c.l.b16 %v3600
    %v3864 = vunpack.c.l.b16 %v3601
    %v3865 = vunpack.c.l.b16 %v3602
    %v3866 = vunpack.c.l.b16 %v3603
    %v3867 = vunpack.c.l.b16 %v3604
    %v3868 = vunpack.c.l.b16 %v3605
    %v3869 = vunpack.c.l.b16 %v3606
    %v3870 = vunpack.c.l.b16 %v3607
    %v3871 = vunpack.c.l.b16 %v3608
    %v3872 = vunpack.c.l.b16 %v3609
    %v3873 = vunpack.c.l.b16 %v3610
    %v3874 = vunpack.c.l.b16 %v3611
    %v3875 = vunpack.c.l.b16 %v3612
    %v3876 = vunpack.c.l.b16 %v3613
    %v3877 = vunpack.c.l.b16 %v3614
    %v3878 = vunpack.c.l.b16 %v3615
    %v3879 = vunpack.c.l.b16 %v3616
    %v3880 = vunpack.c.l.b16 %v3617
    %v3881 = vunpack.c.l.b16 %v3618
    %v3882 = vunpack.c.l.b16 %v3619
    %v3883 = vunpack.c.l.b16 %v3620
    %v3884 = vunpack.c.l.b16 %v3621
    %v3885 = vunpack.c.l.b16 %v3622
    %v3886 = vunpack.c.l.b16 %v3623
    %v3887 = vunpack.c.l.b16 %v3624
    %v3888 = vunpack.c.l.b16 %v3625
    %v3889 = vunpack.c.l.b16 %v3626
    %v3890 = vunpack.c.l.b16 %v3627
    %v3891 = vunpack.c.l.b16 %v3628
    %v3892 = vunpack.c.l.b16 %v3629
    %v3893 = vunpack.c.l.b16 %v3630
    %v3894 = vunpack.c.l.b16 %v3631
    %v3895 = vunpack.c.l.b16 %v3632
    %v3896 = vunpack.c.l.b16 %v3633
    %v3897 = vunpack.c.l.b16 %v3634
    %v3898 = vunpack.c.l.b16 %v3635
    %v3899 = vunpack.c.l.b16 %v3636
    %v3900 = vunpack.c.l.b16 %v3637
    %v3901 = vunpack.c.l.b16 %v3638
    %v3902 = vunpack.c.l.b16 %v3639
    %v3903 = vunpack.c.l.b16 %v3640
    %v3904 = vunpack.c.l.b16 %v3641
    %v3905 = vunpack.c.l.b16 %v3642
    %v3906 = vunpack.c.l.b16 %v3643
    %v3907 = vunpack.c.l.b16 %v3644
    %v3908 = vunpack.c.l.b16 %v3645
    %v3909 = vunpack.c.l.b16 %v3646
    %v3910 = vunpack.c.l.b16 %v3647
    %v3911 = vunpack.c.l.b16 %v3648
    %v3912 = vunpack.c.l.b16 %v3649
    %v3913 = vunpack.c.l.b16 %v3650
    %v3914 = vunpack.c.l.b16 %v3651
    %v3915 = vunpack.c.l.b16 %v3652
    %v3916 = vunpack.c.l.b16 %v3653
    %v3917 = vunpack.c.l.b16 %v3654
    %v3918 = vunpack.c.l.b16 %v3655
    %v3919 = vunpack.c.l.b16 %v3656
    %v3920 = vunpack.c.l.b16 %v3657
    %v3921 = vunpack.c.l.b16 %v3658
    %v3922 = vunpack.c.l.b16 %v3659
    %v3923 = vunpack.c.l.b16 %v3660
    %v3924 = vunpack.c.l.b16 %v3661
    %v3925 = vunpack.c.l.b16 %v3662
    %v3926 = vunpack.c.l.b16 %v3663
    %v3927 = vunpack.c.l.b16 %v3664
    %v3928 = vunpack.c.l.b16 %v3665
    %v3929 = vunpack.c.l.b16 %v3666
    %v3930 = vunpack.c.l.b16 %v3667
    %v3931 = vunpack.c.l.b16 %v3668
    %v3932 = vunpack.c.l.b16 %v3669
    %v3933 = vunpack.c.l.b16 %v3670
    %v3934 = vunpack.c.l.b16 %v3671
    %v3935 = vunpack.c.l.b16 %v3672
    %v3936 = vunpack.c.l.b16 %v3673
    %v3937 = vunpack.c.l.b16 %v3674
    %v3938 = vunpack.c.l.b16 %v3675
    %v3939 = vunpack.c.l.b16 %v3676
    %v3940 = vunpack.c.l.b16 %v3677
    %v3941 = vunpack.c.l.b16 %v3678
    %v3942 = vunpack.c.l.b16 %v3679
    %v3943 = vunpack.c.l.b16 %v3680
    %v3944 = vunpack.c.l.b16 %v3681
    %v3945 = vunpack.c.l.b16 %v3682
    %v3946 = vunpack.c.l.b16 %v3683
    %v3947 = vunpack.c.l.b16 %v3684
    %v3948 = vunpack.c.l.b16 %v3685
    %v3949 = vpack.c.b16 %v3822, %v3821
    %v3950 = vpack.c.b16 %v3824, %v3823
    %v3951 = vpack.c.b16 %v3826, %v3825
    %v3952 = vpack.c.b16 %v3828, %v3827
    %v3953 = vpack.c.b16 %v3830, %v3829
    %v3954 = vpack.c.b16 %v3832, %v3831
    %v3955 = vpack.c.b16 %v3834, %v3833
    %v3956 = vpack.c.b16 %v3836, %v3835
    %v3957 = vpack.c.b16 %v3838, %v3837
    %v3958 = vpack.c.b16 %v3840, %v3839
    %v3959 = vpack.c.b16 %v3842, %v3841
    %v3960 = vpack.c.b16 %v3844, %v3843
    %v3961 = vpack.c.b16 %v3846, %v3845
    %v3962 = vpack.c.b16 %v3848, %v3847
    %v3963 = vpack.c.b16 %v3850, %v3849
    %v3964 = vpack.c.b16 %v3852, %v3851
    %v3965 = vpack.c.b16 %v3854, %v3853
    %v3966 = vpack.c.b16 %v3856, %v3855
    %v3967 = vpack.c.b16 %v3858, %v3857
    %v3968 = vpack.c.b16 %v3860, %v3859
    %v3969 = vpack.c.b16 %v3862, %v3861
    %v3970 = vpack.c.b16 %v3864, %v3863
    %v3971 = vpack.c.b16 %v3866, %v3865
    %v3972 = vpack.c.b16 %v3868, %v3867
    %v3973 = vpack.c.b16 %v3870, %v3869
    %v3974 = vpack.c.b16 %v3872, %v3871
    %v3975 = vpack.c.b16 %v3874, %v3873
    %v3976 = vpack.c.b16 %v3876, %v3875
    %v3977 = vpack.c.b16 %v3878, %v3877
    %v3978 = vpack.c.b16 %v3880, %v3879
    %v3979 = vpack.c.b16 %v3882, %v3881
    %v3980 = vpack.c.b16 %v3884, %v3883
    %v3981 = vpack.c.b16 %v3886, %v3885
    %v3982 = vpack.c.b16 %v3888, %v3887
    %v3983 = vpack.c.b16 %v3890, %v3889
    %v3984 = vpack.c.b16 %v3892, %v3891
    %v3985 = vpack.c.b16 %v3894, %v3893
    %v3986 = vpack.c.b16 %v3896, %v3895
    %v3987 = vpack.c.b16 %v3898, %v3897
    %v3988 = vpack.c.b16 %v3900, %v3899
    %v3989 = vpack.c.b16 %v3902, %v3901
    %v3990 = vpack.c.b16 %v3904, %v3903
    %v3991 = vpack.c.b16 %v3906, %v3905
    %v3992 = vpack.c.b16 %v3908, %v3907
    %v3993 = vpack.c.b16 %v3910, %v3909
    %v3994 = vpack.c.b16 %v3912, %v3911
    %v3995 = vpack.c.b16 %v3914, %v3913
    %v3996 = vpack.c.b16 %v3916, %v3915
    %v3997 = vpack.c.b16 %v3918, %v3917
    %v3998 = vpack.c.b16 %v3920, %v3919
    %v3999 = vpack.c.b16 %v3922, %v3921
    %v4000 = vpack.c.b16 %v3924, %v3923
    %v4001 = vpack.c.b16 %v3926, %v3925
    %v4002 = vpack.c.b16 %v3928, %v3927
    %v4003 = vpack.c.b16 %v3930, %v3929
    %v4004 = vpack.c.b16 %v3932, %v3931
    %v4005 = vpack.c.b16 %v3934, %v3933
    %v4006 = vpack.c.b16 %v3936, %v3935
    %v4007 = vpack.c.b16 %v3938, %v3937
    %v4008 = vpack.c.b16 %v3940, %v3939
    %v4009 = vpack.c.b16 %v3942, %v3941
    %v4010 = vpack.c.b16 %v3944, %v3943
    %v4011 = vpack.c.b16 %v3946, %v3945
    %v4012 = vpack.c.b16 %v3948, %v3947
    %4077 = vmatprep.subr.bf16.mxu0 0
    %4078 = vmatpush1.bf16.msra.mxu0 %v3956
    %4079 = vmatprep.subr.bf16.mxu0 0
    %4080 = vmatpush1.bf16.msra.mxu0 %v3955
    %4081 = vmatprep.subr.bf16.mxu0 0
    %4082 = vmatpush1.bf16.msra.mxu0 %v3954
    %4083 = vmatprep.subr.bf16.mxu0 0
    %4084 = vmatpush1.bf16.msra.mxu0 %v3953
    %4085 = vmatprep.subr.bf16.mxu0 0
    %4086 = vmatpush1.bf16.msra.mxu0 %v3952
    %4087 = vmatprep.subr.bf16.mxu0 0
    %4088 = vmatpush1.bf16.msra.mxu0 %v3951
    %4089 = vmatprep.subr.bf16.mxu0 0
    %4090 = vmatpush1.bf16.msra.mxu0 %v3950
    %4091 = vmatprep.subr.bf16.mxu0 0
    %4092 = vmatpush1.bf16.msra.mxu0 %v3949
    %4093 = vmatprep.subr.bf16.mxu0 0
    %4094 = vmatpush2.bf16.msra.mxu0 %v3964
    %4095 = vmatprep.subr.bf16.mxu0 0
    %4096 = vmatpush2.bf16.msra.mxu0 %v3963
    %4097 = vmatprep.subr.bf16.mxu0 0
    %4098 = vmatpush2.bf16.msra.mxu0 %v3962
    %4099 = vmatprep.subr.bf16.mxu0 0
    %4100 = vmatpush2.bf16.msra.mxu0 %v3961
    %4101 = vmatprep.subr.bf16.mxu0 0
    %4102 = vmatpush2.bf16.msra.mxu0 %v3960
    %4103 = vmatprep.subr.bf16.mxu0 0
    %4104 = vmatpush2.bf16.msra.mxu0 %v3959
    %4105 = vmatprep.subr.bf16.mxu0 0
    %4106 = vmatpush2.bf16.msra.mxu0 %v3958
    %4107 = vmatprep.subr.bf16.mxu0 0
    %4108 = vmatpush2.bf16.msra.mxu0 %v3957
    %4109 = vmatprep.mubr.bf16.mxu0 %v3551
    %4110 = vmatmul.mubr.bf16.gmra.mxu0 %v3550
    %v4111 = vpop.f32.mrf.mxu0
    %v4112 = vadd.f32 %v3691, %v4111
    %v4113 = vpop.f32.mrf.mxu0
    %v4114 = vpop.f32.mrf.mxu0
    %v4115 = vadd.f32 %v3691, %v4114
    %v4116 = vpop.f32.mrf.mxu0
    %4117 = vdwg.mxu0
    %4118 = vmatprep.subr.bf16.mxu0 0
    %4119 = vmatpush1.bf16.msra.mxu0 %v3972
    %4120 = vmatprep.subr.bf16.mxu0 0
    %4121 = vmatpush1.bf16.msra.mxu0 %v3971
    %4122 = vmatprep.subr.bf16.mxu0 0
    %4123 = vmatpush1.bf16.msra.mxu0 %v3970
    %4124 = vmatprep.subr.bf16.mxu0 0
    %4125 = vmatpush1.bf16.msra.mxu0 %v3969
    %4126 = vmatprep.subr.bf16.mxu0 0
    %4127 = vmatpush1.bf16.msra.mxu0 %v3968
    %4128 = vmatprep.subr.bf16.mxu0 0
    %4129 = vmatpush1.bf16.msra.mxu0 %v3967
    %4130 = vmatprep.subr.bf16.mxu0 0
    %4131 = vmatpush1.bf16.msra.mxu0 %v3966
    %4132 = vmatprep.subr.bf16.mxu0 0
    %4133 = vmatpush1.bf16.msra.mxu0 %v3965
    %4134 = vmatprep.subr.bf16.mxu0 0
    %4135 = vmatpush2.bf16.msra.mxu0 %v3980
    %4136 = vmatprep.subr.bf16.mxu0 0
    %4137 = vmatpush2.bf16.msra.mxu0 %v3979
    %4138 = vmatprep.subr.bf16.mxu0 0
    %4139 = vmatpush2.bf16.msra.mxu0 %v3978
    %4140 = vmatprep.subr.bf16.mxu0 0
    %4141 = vmatpush2.bf16.msra.mxu0 %v3977
    %4142 = vmatprep.subr.bf16.mxu0 0
    %4143 = vmatpush2.bf16.msra.mxu0 %v3976
    %4144 = vmatprep.subr.bf16.mxu0 0
    %4145 = vmatpush2.bf16.msra.mxu0 %v3975
    %4146 = vmatprep.subr.bf16.mxu0 0
    %4147 = vmatpush2.bf16.msra.mxu0 %v3974
    %4148 = vmatprep.subr.bf16.mxu0 0
    %4149 = vmatpush2.bf16.msra.mxu0 %v3973
    %4150 = vmatprep.mubr.bf16.mxu0 %v3553
    %4151 = vmatmul.mubr.bf16.gmra.mxu0 %v3552
    %v4152 = vpop.f32.mrf.mxu0
    %v4153 = vadd.f32 %v4112, %v4152
    %v4154 = vpop.f32.mrf.mxu0
    %v4155 = vpop.f32.mrf.mxu0
    %v4156 = vadd.f32 %v4115, %v4155
    %v4157 = vpop.f32.mrf.mxu0
    %4158 = vdwg.mxu0
    %4159 = vmatprep.subr.bf16.mxu0 0
    %4160 = vmatpush1.bf16.msra.mxu0 %v3988
    %4161 = vmatprep.subr.bf16.mxu0 0
    %4162 = vmatpush1.bf16.msra.mxu0 %v3987
    %4163 = vmatprep.subr.bf16.mxu0 0
    %4164 = vmatpush1.bf16.msra.mxu0 %v3986
    %4165 = vmatprep.subr.bf16.mxu0 0
    %4166 = vmatpush1.bf16.msra.mxu0 %v3985
    %4167 = vmatprep.subr.bf16.mxu0 0
    %4168 = vmatpush1.bf16.msra.mxu0 %v3984
    %4169 = vmatprep.subr.bf16.mxu0 0
    %4170 = vmatpush1.bf16.msra.mxu0 %v3983
    %4171 = vmatprep.subr.bf16.mxu0 0
    %4172 = vmatpush1.bf16.msra.mxu0 %v3982
    %4173 = vmatprep.subr.bf16.mxu0 0
    %4174 = vmatpush1.bf16.msra.mxu0 %v3981
    %4175 = vmatprep.subr.bf16.mxu0 0
    %4176 = vmatpush2.bf16.msra.mxu0 %v3996
    %4177 = vmatprep.subr.bf16.mxu0 0
    %4178 = vmatpush2.bf16.msra.mxu0 %v3995
    %4179 = vmatprep.subr.bf16.mxu0 0
    %4180 = vmatpush2.bf16.msra.mxu0 %v3994
    %4181 = vmatprep.subr.bf16.mxu0 0
    %4182 = vmatpush2.bf16.msra.mxu0 %v3993
    %4183 = vmatprep.subr.bf16.mxu0 0
    %4184 = vmatpush2.bf16.msra.mxu0 %v3992
    %4185 = vmatprep.subr.bf16.mxu0 0
    %4186 = vmatpush2.bf16.msra.mxu0 %v3991
    %4187 = vmatprep.subr.bf16.mxu0 0
    %4188 = vmatpush2.bf16.msra.mxu0 %v3990
    %4189 = vmatprep.subr.bf16.mxu0 0
    %4190 = vmatpush2.bf16.msra.mxu0 %v3989
    %4191 = vmatprep.mubr.bf16.mxu0 %v3555
    %4192 = vmatmul.mubr.bf16.gmra.mxu0 %v3554
    %v4193 = vpop.f32.mrf.mxu0
    %v4194 = vadd.f32 %v4153, %v4193
    %v4195 = vpop.f32.mrf.mxu0
    %v4196 = vpop.f32.mrf.mxu0
    %v4197 = vadd.f32 %v4156, %v4196
    %v4198 = vpop.f32.mrf.mxu0
    %4199 = vdwg.mxu0
    %4200 = vmatprep.subr.bf16.mxu0 0
    %4201 = vmatpush1.bf16.msra.mxu0 %v4004
    %4202 = vmatprep.subr.bf16.mxu0 0
    %4203 = vmatpush1.bf16.msra.mxu0 %v4003
    %4204 = vmatprep.subr.bf16.mxu0 0
    %4205 = vmatpush1.bf16.msra.mxu0 %v4002
    %4206 = vmatprep.subr.bf16.mxu0 0
    %4207 = vmatpush1.bf16.msra.mxu0 %v4001
    %4208 = vmatprep.subr.bf16.mxu0 0
    %4209 = vmatpush1.bf16.msra.mxu0 %v4000
    %4210 = vmatprep.subr.bf16.mxu0 0
    %4211 = vmatpush1.bf16.msra.mxu0 %v3999
    %4212 = vmatprep.subr.bf16.mxu0 0
    %4213 = vmatpush1.bf16.msra.mxu0 %v3998
    %4214 = vmatprep.subr.bf16.mxu0 0
    %4215 = vmatpush1.bf16.msra.mxu0 %v3997
    %4216 = vmatprep.subr.bf16.mxu0 0
    %4217 = vmatpush2.bf16.msra.mxu0 %v4012
    %4218 = vmatprep.subr.bf16.mxu0 0
    %4219 = vmatpush2.bf16.msra.mxu0 %v4011
    %4220 = vmatprep.subr.bf16.mxu0 0
    %4221 = vmatpush2.bf16.msra.mxu0 %v4010
    %4222 = vmatprep.subr.bf16.mxu0 0
    %4223 = vmatpush2.bf16.msra.mxu0 %v4009
    %4224 = vmatprep.subr.bf16.mxu0 0
    %4225 = vmatpush2.bf16.msra.mxu0 %v4008
    %4226 = vmatprep.subr.bf16.mxu0 0
    %4227 = vmatpush2.bf16.msra.mxu0 %v4007
    %4228 = vmatprep.subr.bf16.mxu0 0
    %4229 = vmatpush2.bf16.msra.mxu0 %v4006
    %4230 = vmatprep.subr.bf16.mxu0 0
    %4231 = vmatpush2.bf16.msra.mxu0 %v4005
    %4232 = vmatprep.mubr.bf16.mxu0 %v3557
    %4233 = vmatmul.mubr.bf16.gmra.mxu0 %v3556
    %v4234 = vpop.f32.mrf.mxu0
    %v4235 = vadd.f32 %v4194, %v4234
    %v4236 = vpop.f32.mrf.mxu0
    %v4237 = vpop.f32.mrf.mxu0
    %v4238 = vadd.f32 %v4197, %v4237
    %v4239 = vpop.f32.mrf.mxu0
    %4240 = vdwg.mxu0
    %v4241 = vlaneseq
    %v4242 = vand.u32 %v4241, 127
    %vm4243 = vcmp.ge.s32.totalorder %v4242, 64
    %v4244 = vmax.f32 %v4235, 0.0
    %v4245 = vmax.f32 %v4238, 0.0
    %v4246 = vsel %vm4243, %v4244, %v4235
    %v4247 = vsel %vm4243, %v4245, %v4238
    %4248 = vst [vmem:[%s5] sm:$0xff] %v4246
    %4249 = vst [vmem:[%s5 + $0x8] sm:$0xff] %v4247
    // Predicated region
    $region38: #{encoder_forward.1} parent=1 // pred_check
      _
    $region39: #{encoder_forward.1} parent=1 // pred_check_branch
      %4251 = sbr.rel (0) target = $region41
    $region40: #{encoder_forward.1} parent=1 // pred_region
      _
    $region41: #{encoder_forward.1} parent=1 // pred_fallthru
      _
    // Predicated region
    $region42: #{encoder_forward.1} parent=1 // pred_check
      _
    $region43: #{encoder_forward.1} parent=1 // pred_check_branch
      %4253 = sbr.rel (0) target = $region45
    $region44: #{encoder_forward.1} parent=1 // pred_region
      _
    $region45: #{encoder_forward.1} parent=1 // pred_fallthru
      _
    %4254 = vsyncpa [#allocation3], 1
    %4255 = vsyncpa [#allocation5], 1
    %4256 = vsyncpa [#allocation8], 1

</llo_original>
